<compile_context>
chip_gen: v5e
topology: v5e:2x2
jax: 0.10.0
libtpu: 0.0.40
codegen_flags: <defaults>
</compile_context>

<pallas_src>
import math
import numpy as np
import jax
import jax.numpy as jnp
from jax.experimental import pallas as pl
from jax.experimental.pallas import tpu as pltpu

# ----------------------------- hyperparameters ------------------------------
B            = 2        # batch
TIME_STEPS   = 1024     # raw audio samples per example
SAMPLE_RATE  = 16000
N_FFT        = 64
HOP_LENGTH   = 32
N_MELS       = 32
F_MIN        = 0.0
F_MAX        = 8000.0
CONV_NDIM    = 8
ATTN_NDIM    = 64
ATTN_NLAYERS = 2
ATTN_NHEADS  = 4
N_EMBEDDING  = 16
HIDDEN_DIM   = 64
BN_EPS       = 1e-5
LN_EPS       = 1e-5
DIM_HEAD     = ATTN_NDIM // 2
INNER        = ATTN_NHEADS * DIM_HEAD           # 128

N_FREQ   = N_FFT // 2 + 1                        # 33
N_FRAMES = TIME_STEPS // HOP_LENGTH + 1          # 33 (center-padded STFT)
SLAB_W   = 256
NEG      = -1e30

# Per-res-block static geometry: (H=freq, W=time, Cin, Cout, has residual projection).
BLOCK_META = []
_h, _w, _c = N_MELS, N_FRAMES, 1
for _ in range(3):
    BLOCK_META.append((_h, _w, _c, CONV_NDIM, _c != CONV_NDIM))
    _h, _w, _c = _h // 2, _w // 2, CONV_NDIM
FREQ_LEN, SEQ_LEN = _h, _w                       # 4, 4
assert SEQ_LEN == N_EMBEDDING // 4
FC_IN = CONV_NDIM * FREQ_LEN                     # 32
N_TOK = B * SEQ_LEN                              # 8


# ====================== host-side constant / weight prep =====================

def _mel_constants():
    """Windowed [cos|sin] rDFT matrix (n_fft, 2F) and stacked mel filterbank (2F, n_mels)."""
    n = np.arange(N_FFT, dtype=np.float64)
    win = 0.5 - 0.5 * np.cos(2.0 * np.pi * n / N_FFT)            # periodic Hann
    k = np.arange(N_FREQ, dtype=np.float64)
    ang = 2.0 * np.pi * np.outer(n, k) / N_FFT                   # (n_fft, n_freq)
    dft = np.concatenate([np.cos(ang), np.sin(ang)], axis=1) * win[:, None]
    # torchaudio melscale_fbanks (HTK scale, norm=None)
    all_freqs = np.linspace(0.0, SAMPLE_RATE // 2, N_FREQ)
    hz2mel = lambda f: 2595.0 * np.log10(1.0 + f / 700.0)
    mel2hz = lambda m: 700.0 * (10.0 ** (m / 2595.0) - 1.0)
    f_pts = mel2hz(np.linspace(hz2mel(F_MIN), hz2mel(F_MAX), N_MELS + 2))
    f_diff = f_pts[1:] - f_pts[:-1]
    slopes = f_pts[None, :] - all_freqs[:, None]
    down = -slopes[:, :-2] / f_diff[:-1]
    up = slopes[:, 2:] / f_diff[1:]
    fb = np.maximum(0.0, np.minimum(down, up))                   # (n_freq, n_mels)
    fb2 = np.concatenate([fb, fb], axis=0)                       # (2F, n_mels): re^2+im^2
    return dft.astype(np.float32), fb2.astype(np.float32)


def _conv_wmat(w, h, scale, bias_vec):
    """3x3 'same' conv (+ folded BN) as ONE matmul acting on time-major maps.

    Feature maps are (time, Cin*H).  The kernel builds the lane-stacked input
    [x(t-1) | x(t) | x(t+1)] of shape (time, 3*Cin*H); this returns the matching
    (3*Cin*H, Cout*H) weight (freq taps / zero padding folded in, BN scale folded
    into columns) and the per-output-channel bias row (1, Cout*H)."""
    _, _, cin, cout = w.shape
    m = np.zeros((3 * cin * h, cout * h), np.float32)
    r_out = np.arange(h)
    for dw in range(3):
        for dh in range(3):
            src = r_out + dh - 1
            ok = (src >= 0) & (src < h)
            rv, sv = r_out[ok], src[ok]
            for ci in range(cin):
                for co in range(cout):
                    m[dw * cin * h + ci * h + sv, co * h + rv] += w[dh, dw, ci, co]
    scale_row = np.repeat(scale, h)[None, :].astype(np.float32)
    bias_row = np.repeat(bias_vec, h)[None, :].astype(np.float32)
    return (m * scale_row).astype(np.float32), bias_row


def _freq_pool_sel(cout, h):
    """Lane selector (Cout*H, Cout*H): left half picks even freq lanes, right half odd."""
    h2 = h // 2
    half = cout * h2
    m = np.zeros((cout * h, cout * h), np.float32)
    for co in range(cout):
        for i in range(h2):
            m[co * h + 2 * i, co * h2 + i] = 1.0
            m[co * h + 2 * i + 1, half + co * h2 + i] = 1.0
    return m


def _time_pool_sel(bsz, w):
    """Row selector (2*B*W2, B*W): top half picks even time rows (per example), bottom odd."""
    w2 = w // 2
    half = bsz * w2
    m = np.zeros((2 * bsz * w2, bsz * w), np.float32)
    for b in range(bsz):
        for j in range(w2):
            m[b * w2 + j, b * w + 2 * j] = 1.0
            m[half + b * w2 + j, b * w + 2 * j + 1] = 1.0
    return m


class _Packer:
    """Packs 2D f32 parameter blocks into one lane-dense slab (rows aligned to 8)."""

    def __init__(self, width):
        self.width = width
        self.chunks = []
        self.idx = {}
        self.off = 0

    def add(self, name, arr):
        arr = np.asarray(arr, np.float32)
        if arr.ndim == 1:
            arr = arr[None, :]
        r, c = arr.shape
        assert c <= self.width, (name, arr.shape)
        rpad = (-r) % 8
        blk = np.zeros((r + rpad, self.width), np.float32)
        blk[:r, :c] = arr
        self.idx[name] = (self.off, r, c)
        self.chunks.append(blk)
        self.off += r + rpad

    def pack(self):
        return np.concatenate(self.chunks, axis=0), self.idx


def init_params(key):
    kit = iter(jax.random.split(key, 64))

    def nrm(shape, s):
        return np.asarray(s * jax.random.normal(next(kit), shape, dtype=jnp.float32))

    def conv_bn(cin, cout):
        """Conv2d(3x3, pad=1, bias=True) + BatchNorm2d(eval) -> (w, per-channel scale/bias)."""
        w = nrm((3, 3, cin, cout), 1.0 / math.sqrt(9 * cin))
        b_conv = nrm((cout,), 0.02)
        gamma = 1.0 + nrm((cout,), 0.1)
        beta = nrm((cout,), 0.1)
        mean = np.zeros((cout,), np.float32)       # default-init running stats (eval)
        var = np.ones((cout,), np.float32)
        scale = (gamma / np.sqrt(var + BN_EPS)).astype(np.float32)
        bias = ((b_conv - mean) * scale + beta).astype(np.float32)
        return w, scale, bias

    pk = _Packer(SLAB_W)
    dft, fb2 = _mel_constants()
    pk.add("dft", dft)
    pk.add("fb", fb2)

    # input BatchNorm2d(1) in eval mode with default running stats -> 2 scalars
    g = 1.0 + nrm((1,), 0.1)
    be = nrm((1,), 0.1)
    inbn_s = float(g[0] / math.sqrt(1.0 + BN_EPS))
    inbn_b = float(be[0])

    # ---- ResFrontEnd blocks ----
    for bi, (h_, w_, cin_, cout_, proj) in enumerate(BLOCK_META):
        w1, s1, b1v = conv_bn(cin_, cout_)
        w2, s2, b2v = conv_bn(cout_, cout_)
        m1, bias1 = _conv_wmat(w1, h_, s1, b1v)
        m2, bias2 = _conv_wmat(w2, h_, s2, b2v)
        pk.add(f"b{bi}_w1", m1)
        pk.add(f"b{bi}_w2", m2)
        if proj:                                    # layer1 residual projection (3x3 conv + BN)
            w3, s3, b3v = conv_bn(cin_, cout_)
            m3, bias3 = _conv_wmat(w3, h_, s3, b3v)
            pk.add(f"b{bi}_w3", m3)
        else:
            bias3 = np.zeros((1, cout_ * h_), np.float32)
        pk.add(f"b{bi}_bias", np.concatenate([bias1, bias2, bias3], axis=0))
        pk.add(f"b{bi}_fsel", _freq_pool_sel(cout_, h_))
        pk.add(f"b{bi}_tsel", _time_pool_sel(B, w_))

    # ---- frontend fc + positional embedding ----
    fc_w = nrm((FC_IN, ATTN_NDIM), 1.0 / math.sqrt(FC_IN))
    fc_b = nrm((1, ATTN_NDIM), 0.02)
    pos = nrm((SEQ_LEN, ATTN_NDIM), 1.0)            # torch.randn
    pk.add("fc_w", fc_w)

    # ---- Transformer layers (attention scale folded into Wq) ----
    scale = float(ATTN_NDIM) ** -0.5                # reference uses dim ** -0.5
    for li in range(ATTN_NLAYERS):
        wqkv = nrm((ATTN_NDIM, 3 * INNER), 1.0 / math.sqrt(ATTN_NDIM))
        pk.add(f"t{li}_wq", wqkv[:, :INNER] * scale)
        pk.add(f"t{li}_wk", wqkv[:, INNER:2 * INNER])
        pk.add(f"t{li}_wv", wqkv[:, 2 * INNER:])
        wo = nrm((INNER, ATTN_NDIM), 1.0 / math.sqrt(INNER))
        bo = nrm((1, ATTN_NDIM), 0.02)
        pk.add(f"t{li}_wo", wo)
        w1l = nrm((ATTN_NDIM, ATTN_NDIM), 1.0 / math.sqrt(ATTN_NDIM))
        b1l = nrm((1, ATTN_NDIM), 0.02)
        w2l = nrm((ATTN_NDIM, ATTN_NDIM), 1.0 / math.sqrt(ATTN_NDIM))
        b2l = nrm((1, ATTN_NDIM), 0.02)
        pk.add(f"t{li}_w1", w1l)
        pk.add(f"t{li}_w2", w2l)
        ln = np.concatenate([np.ones((1, ATTN_NDIM), np.float32),
                             np.zeros((1, ATTN_NDIM), np.float32),
                             np.ones((1, ATTN_NDIM), np.float32),
                             np.zeros((1, ATTN_NDIM), np.float32),
                             bo, b1l, b2l], axis=0)  # ln1g, ln1b, ln2g, ln2b, bo, b1, b2
        pk.add(f"t{li}_ln", ln)

    head_w = nrm((ATTN_NDIM, HIDDEN_DIM), 1.0 / math.sqrt(ATTN_NDIM))
    head_b = nrm((1, HIDDEN_DIM), 0.02)
    pk.add("head_w", head_w)

    misc = np.zeros((6, ATTN_NDIM), np.float32)
    misc[0:SEQ_LEN, :] = pos + fc_b                 # fc bias folded into pos embedding
    misc[4, :HIDDEN_DIM] = head_b[0]
    misc[5, 0] = inbn_s
    misc[5, 1] = inbn_b
    pk.add("misc", misc)

    amask = np.zeros((N_TOK, N_TOK), np.float32)    # block mask: no attention across examples
    for i in range(N_TOK):
        for j in range(N_TOK):
            if i // SEQ_LEN != j // SEQ_LEN:
                amask[i, j] = NEG
    pk.add("amask", amask)

    slab, idx = pk.pack()
    return jnp.asarray(slab), idx


# ================================ Pallas kernel ===============================

def _make_kernel(idx):
    log10_fac = 10.0 / math.log(10.0)

    def kernel(frames_ref, slab_ref, out_ref):
        f32 = jnp.float32

        def rd(name):
            off, r, c = idx[name]
            return slab_ref[pl.ds(off, r), pl.ds(0, c)]

        def dotf(a, b):
            return jnp.dot(a, b, preferred_element_type=f32)

        # ---- MelSpectrogram (windowed rDFT power) + mel fb + AmplitudeToDB + input BN ----
        frames = frames_ref[...]                                   # (B*T, n_fft), time-major
        ri = dotf(frames, rd("dft"))                               # (B*T, 2F)
        mel = dotf(ri * ri, rd("fb"))                              # (B*T, n_mels)
        db = log10_fac * jnp.log(jnp.maximum(mel, 1e-10))
        misc = rd("misc")                                          # (6, 64)
        x = db * misc[5:6, 0:1] + misc[5:6, 1:2]                   # (B*W, Cin*H), Cin=1

        def taps(v, w_ex):
            # Build [x(t-1) | x(t) | x(t+1)] along lanes; time shifts are sublane pad+slice,
            # boundary columns of each batch example zeroed with an iota mask (conv padding).
            bw, c = v.shape
            z = jnp.zeros((1, c), f32)
            vp = jnp.concatenate([z, v, z], axis=0)                # (bw+2, c)
            left = vp[0:bw, :]                                     # row j holds v[j-1]
            right = vp[2:bw + 2, :]                                # row j holds v[j+1]
            ridx = jax.lax.broadcasted_iota(jnp.int32, (bw, 1), 0)
            first = ridx == 0
            last = ridx == (w_ex - 1)
            for b in range(1, B):
                first = jnp.logical_or(first, ridx == b * w_ex)
                last = jnp.logical_or(last, ridx == (b + 1) * w_ex - 1)
            left = left * jnp.where(first, 0.0, 1.0)
            right = right * jnp.where(last, 0.0, 1.0)
            return jnp.concatenate([left, v, right], axis=1)       # (bw, 3c)

        # ---- ResFrontEnd: 3 x (conv-bn-relu, conv-bn, residual add, relu, maxpool2) ----
        for bi, (h_, w_, cin_, cout_, proj) in enumerate(BLOCK_META):
            bias = rd(f"b{bi}_bias")                               # (3, Cout*H)
            st = taps(x, w_)                                       # shared by conv1 / conv3
            y1 = dotf(st, rd(f"b{bi}_w1")) + bias[0:1, :]
            h1 = jnp.maximum(y1, 0.0)
            res = (dotf(st, rd(f"b{bi}_w3")) + bias[2:3, :]) if proj else x
            y2 = dotf(taps(h1, w_), rd(f"b{bi}_w2")) + bias[1:2, :]
            z = jnp.maximum(y2 + res, 0.0)
            # MaxPool2d(2): freq pairs via lane-selector matmul, time pairs via row-selector.
            zf = dotf(z, rd(f"b{bi}_fsel"))
            half = cout_ * (h_ // 2)
            zf = jnp.maximum(zf[:, 0:half], zf[:, half:2 * half])  # (B*W, Cout*H/2)
            zt = dotf(rd(f"b{bi}_tsel"), zf)
            bw2 = B * (w_ // 2)
            x = jnp.maximum(zt[0:bw2, :], zt[bw2:2 * bw2, :])      # (B*W/2, Cout*H/2)

        # ---- flatten (channel, freq) -> fc -> + positional embedding (fc bias folded) ----
        xt = dotf(x, rd("fc_w"))                                   # (B*SEQ, D)
        pos = misc[0:SEQ_LEN, 0:ATTN_NDIM]
        xt = xt + jnp.concatenate([pos] * B, axis=0)

        am = rd("amask")                                           # (B*SEQ, B*SEQ)

        def layernorm(v, g, b):
            mu = jnp.mean(v, axis=-1, keepdims=True)
            d = v - mu
            var = jnp.mean(d * d, axis=-1, keepdims=True)
            return d * jax.lax.rsqrt(var + LN_EPS) * g + b

        # ---- Transformer (pre-norm attention + pre-norm FF, both residual) ----
        for li in range(ATTN_NLAYERS):
            ln = rd(f"t{li}_ln")
            hpre = layernorm(xt, ln[0:1, :], ln[1:2, :])
            q = dotf(hpre, rd(f"t{li}_wq"))                        # (N, INNER), scale folded
            k = dotf(hpre, rd(f"t{li}_wk"))
            v = dotf(hpre, rd(f"t{li}_wv"))
            ctxs = []
            for hh in range(ATTN_NHEADS):
                s0 = hh * DIM_HEAD
                qh = q[:, s0:s0 + DIM_HEAD]
                kh = k[:, s0:s0 + DIM_HEAD]
                vh = v[:, s0:s0 + DIM_HEAD]
                dots = jax.lax.dot_general(qh, kh, (((1,), (1,)), ((), ())),
                                           preferred_element_type=f32) + am
                dots = dots - jnp.max(dots, axis=-1, keepdims=True)
                e = jnp.exp(dots)
                attn = e / jnp.sum(e, axis=-1, keepdims=True)
                ctxs.append(dotf(attn, vh))
            ctx = jnp.concatenate(ctxs, axis=1)                    # (N, INNER)
            xt = xt + dotf(ctx, rd(f"t{li}_wo")) + ln[4:5, :]
            hf = layernorm(xt, ln[2:3, :], ln[3:4, :])
            hf = dotf(hf, rd(f"t{li}_w1")) + ln[5:6, :]
            # TODO(synk): PyTorch nn.GELU defaults to exact erf; tanh-approx GELU used here.
            hf = jax.nn.gelu(hf, approximate=True)
            hf = dotf(hf, rd(f"t{li}_w2")) + ln[6:7, :]
            xt = xt + hf

        # ---- per-example mean over sequence + mlp_head ----
        pooled = [jnp.mean(xt[b * SEQ_LEN:(b + 1) * SEQ_LEN, :], axis=0, keepdims=True)
                  for b in range(B)]
        xm = jnp.concatenate(pooled, axis=0)                       # (B, D)
        out_ref[...] = dotf(xm, rd("head_w")) + misc[4:5, 0:HIDDEN_DIM]

    return kernel


# ================================ forward pass ===============================

def frame_encoder_forward(audio, slab, idx):
    assert audio.shape == (B, TIME_STEPS)
    # STFT framing (center / reflect pad): host-side JAX glue with static indices.
    # Frames are passed time-major with the batch stacked along the time axis.
    pad = N_FFT // 2
    xp = jnp.pad(audio, ((0, 0), (pad, pad)), mode="reflect")
    fidx = np.arange(N_FRAMES)[:, None] * HOP_LENGTH + np.arange(N_FFT)[None, :]
    frames = xp[:, fidx].reshape(B * N_FRAMES, N_FFT)              # (B*T, n_fft)

    out = pl.pallas_call(
        _make_kernel(idx),
        out_shape=jax.ShapeDtypeStruct((B, HIDDEN_DIM), jnp.float32),
        compiler_params=pltpu.CompilerParams(vmem_limit_bytes=32 * 1024 * 1024),
    )(frames, slab)
    return out


if __name__ == "__main__":
    key = jax.random.PRNGKey(0)
    pkey, xkey = jax.random.split(key)
    slab, idx = init_params(pkey)
    audio = jax.random.normal(xkey, (B, TIME_STEPS), dtype=jnp.float32)
    fwd = jax.jit(lambda a, s: frame_encoder_forward(a, s, idx))
    out = fwd(audio, slab)
    jax.block_until_ready(out)
    assert out.shape == (B, HIDDEN_DIM), out.shape
    assert bool(jnp.all(jnp.isfinite(out)))
    print("KERNEL_OK")
</pallas_src>

<mosaic_0001>
module attributes {stable_mosaic.version = 11 : i64} {
  func.func @kernel(%arg0: memref<66x64xf32, #tpu.memory_space<vmem>>, %arg1: memref<3856x256xf32, #tpu.memory_space<vmem>>, %arg2: memref<2x64xf32, #tpu.memory_space<vmem>>) attributes {dimension_semantics = [], scalar_prefetch = 0 : i64, scratch_operands = 0 : i64, tpu.core_type = #tpu.core_type<tc>} {
    %c0 = arith.constant 0 : index
    %c0_0 = arith.constant 0 : index
    %0 = vector.load %arg0[%c0, %c0_0] : memref<66x64xf32, #tpu.memory_space<vmem>>, vector<66x64xf32>
    %c0_1 = arith.constant 0 : index
    %c0_2 = arith.constant 0 : index
    %1 = vector.load %arg1[%c0_1, %c0_2] : memref<3856x256xf32, #tpu.memory_space<vmem>>, vector<64x66xf32>
    %cst = arith.constant dense<0.000000e+00> : vector<66x66xf32>
    %2 = tpu.matmul %0, %1, %cst {dimension_numbers = #tpu.dot_dimension_numbers<[1], [0], [0], [1], [0, 0, 1, 1], [], []>} : vector<66x64xf32>, vector<64x66xf32>, vector<66x66xf32> -> vector<66x66xf32>
    %3 = arith.mulf %2, %2 : vector<66x66xf32>
    %c64 = arith.constant 64 : index
    %c0_3 = arith.constant 0 : index
    %4 = vector.load %arg1[%c64, %c0_3] : memref<3856x256xf32, #tpu.memory_space<vmem>>, vector<66x32xf32>
    %cst_4 = arith.constant dense<0.000000e+00> : vector<66x32xf32>
    %5 = tpu.matmul %3, %4, %cst_4 {dimension_numbers = #tpu.dot_dimension_numbers<[1], [0], [0], [1], [0, 0, 1, 1], [], []>} : vector<66x66xf32>, vector<66x32xf32>, vector<66x32xf32> -> vector<66x32xf32>
    %cst_5 = arith.constant 1.000000e-10 : f32
    %6 = vector.broadcast %cst_5 : f32 to vector<66x32xf32>
    %7 = arith.maximumf %5, %6 : vector<66x32xf32>
    %8 = math.log %7 : vector<66x32xf32>
    %cst_6 = arith.constant 4.34294462 : f32
    %9 = vector.broadcast %cst_6 : f32 to vector<66x32xf32>
    %10 = arith.mulf %9, %8 : vector<66x32xf32>
    %c3840 = arith.constant 3840 : index
    %c0_7 = arith.constant 0 : index
    %11 = vector.load %arg1[%c3840, %c0_7] : memref<3856x256xf32, #tpu.memory_space<vmem>>, vector<6x64xf32>
    %12 = vector.extract_strided_slice %11 {offsets = [5, 0], sizes = [1, 1], strides = [1, 1]} : vector<6x64xf32> to vector<1x1xf32>
    %13 = vector.broadcast %12 : vector<1x1xf32> to vector<66x32xf32>
    %14 = arith.mulf %10, %13 : vector<66x32xf32>
    %15 = vector.extract_strided_slice %11 {offsets = [5, 1], sizes = [1, 1], strides = [1, 1]} : vector<6x64xf32> to vector<1x1xf32>
    %16 = vector.broadcast %15 : vector<1x1xf32> to vector<66x32xf32>
    %17 = arith.addf %14, %16 : vector<66x32xf32>
    %c1096 = arith.constant 1096 : index
    %c0_8 = arith.constant 0 : index
    %18 = vector.load %arg1[%c1096, %c0_8] : memref<3856x256xf32, #tpu.memory_space<vmem>>, vector<3x256xf32>
    %cst_9 = arith.constant 0.000000e+00 : f32
    %19 = vector.broadcast %cst_9 : f32 to vector<1x32xf32>
    %20 = tpu.concatenate %19, %17, %19 in 0 : vector<1x32xf32>, vector<66x32xf32>, vector<1x32xf32> -> vector<68x32xf32>
    %21 = vector.extract_strided_slice %20 {offsets = [0, 0], sizes = [66, 32], strides = [1, 1]} : vector<68x32xf32> to vector<66x32xf32>
    %22 = vector.extract_strided_slice %20 {offsets = [2, 0], sizes = [66, 32], strides = [1, 1]} : vector<68x32xf32> to vector<66x32xf32>
    %23 = tpu.iota {dimensions = array<i32: 0>} : vector<66x1xi32>
    %c0_i32 = arith.constant 0 : i32
    %24 = vector.broadcast %c0_i32 : i32 to vector<66x1xi32>
    %25 = arith.cmpi eq, %23, %24 : vector<66x1xi32>
    %c32_i32 = arith.constant 32 : i32
    %26 = vector.broadcast %c32_i32 : i32 to vector<66x1xi32>
    %27 = arith.cmpi eq, %23, %26 : vector<66x1xi32>
    %c33_i32 = arith.constant 33 : i32
    %28 = vector.broadcast %c33_i32 : i32 to vector<66x1xi32>
    %29 = arith.cmpi eq, %23, %28 : vector<66x1xi32>
    %30 = arith.ori %25, %29 : vector<66x1xi1>
    %c65_i32 = arith.constant 65 : i32
    %31 = vector.broadcast %c65_i32 : i32 to vector<66x1xi32>
    %32 = arith.cmpi eq, %23, %31 : vector<66x1xi32>
    %33 = arith.ori %27, %32 : vector<66x1xi1>
    %cst_10 = arith.constant 0.000000e+00 : f32
    %cst_11 = arith.constant 1.000000e+00 : f32
    %34 = vector.broadcast %cst_10 : f32 to vector<66x1xf32>
    %35 = vector.broadcast %cst_11 : f32 to vector<66x1xf32>
    %36 = arith.select %30, %34, %35 : vector<66x1xi1>, vector<66x1xf32>
    %37 = vector.broadcast %36 : vector<66x1xf32> to vector<66x32xf32>
    %38 = arith.mulf %21, %37 : vector<66x32xf32>
    %cst_12 = arith.constant 0.000000e+00 : f32
    %cst_13 = arith.constant 1.000000e+00 : f32
    %39 = vector.broadcast %cst_12 : f32 to vector<66x1xf32>
    %40 = vector.broadcast %cst_13 : f32 to vector<66x1xf32>
    %41 = arith.select %33, %39, %40 : vector<66x1xi1>, vector<66x1xf32>
    %42 = vector.broadcast %41 : vector<66x1xf32> to vector<66x32xf32>
    %43 = arith.mulf %22, %42 : vector<66x32xf32>
    %44 = tpu.concatenate %38, %17, %43 in 1 : vector<66x32xf32>, vector<66x32xf32>, vector<66x32xf32> -> vector<66x96xf32>
    %c136 = arith.constant 136 : index
    %c0_14 = arith.constant 0 : index
    %45 = vector.load %arg1[%c136, %c0_14] : memref<3856x256xf32, #tpu.memory_space<vmem>>, vector<96x256xf32>
    %cst_15 = arith.constant dense<0.000000e+00> : vector<66x256xf32>
    %46 = tpu.matmul %44, %45, %cst_15 {dimension_numbers = #tpu.dot_dimension_numbers<[1], [0], [0], [1], [0, 0, 1, 1], [], []>} : vector<66x96xf32>, vector<96x256xf32>, vector<66x256xf32> -> vector<66x256xf32>
    %47 = vector.extract_strided_slice %18 {offsets = [0, 0], sizes = [1, 256], strides = [1, 1]} : vector<3x256xf32> to vector<1x256xf32>
    %48 = vector.broadcast %47 : vector<1x256xf32> to vector<66x256xf32>
    %49 = arith.addf %46, %48 : vector<66x256xf32>
    %cst_16 = arith.constant 0.000000e+00 : f32
    %50 = vector.broadcast %cst_16 : f32 to vector<66x256xf32>
    %51 = arith.maximumf %49, %50 : vector<66x256xf32>
    %c1000 = arith.constant 1000 : index
    %c0_17 = arith.constant 0 : index
    %52 = vector.load %arg1[%c1000, %c0_17] : memref<3856x256xf32, #tpu.memory_space<vmem>>, vector<96x256xf32>
    %cst_18 = arith.constant dense<0.000000e+00> : vector<66x256xf32>
    %53 = tpu.matmul %44, %52, %cst_18 {dimension_numbers = #tpu.dot_dimension_numbers<[1], [0], [0], [1], [0, 0, 1, 1], [], []>} : vector<66x96xf32>, vector<96x256xf32>, vector<66x256xf32> -> vector<66x256xf32>
    %54 = vector.extract_strided_slice %18 {offsets = [2, 0], sizes = [1, 256], strides = [1, 1]} : vector<3x256xf32> to vector<1x256xf32>
    %55 = vector.broadcast %54 : vector<1x256xf32> to vector<66x256xf32>
    %56 = arith.addf %53, %55 : vector<66x256xf32>
    %cst_19 = arith.constant 0.000000e+00 : f32
    %57 = vector.broadcast %cst_19 : f32 to vector<1x256xf32>
    %58 = tpu.concatenate %57, %51, %57 in 0 : vector<1x256xf32>, vector<66x256xf32>, vector<1x256xf32> -> vector<68x256xf32>
    %59 = vector.extract_strided_slice %58 {offsets = [0, 0], sizes = [66, 256], strides = [1, 1]} : vector<68x256xf32> to vector<66x256xf32>
    %60 = vector.extract_strided_slice %58 {offsets = [2, 0], sizes = [66, 256], strides = [1, 1]} : vector<68x256xf32> to vector<66x256xf32>
    %61 = tpu.iota {dimensions = array<i32: 0>} : vector<66x1xi32>
    %c0_i32_20 = arith.constant 0 : i32
    %62 = vector.broadcast %c0_i32_20 : i32 to vector<66x1xi32>
    %63 = arith.cmpi eq, %61, %62 : vector<66x1xi32>
    %c32_i32_21 = arith.constant 32 : i32
    %64 = vector.broadcast %c32_i32_21 : i32 to vector<66x1xi32>
    %65 = arith.cmpi eq, %61, %64 : vector<66x1xi32>
    %c33_i32_22 = arith.constant 33 : i32
    %66 = vector.broadcast %c33_i32_22 : i32 to vector<66x1xi32>
    %67 = arith.cmpi eq, %61, %66 : vector<66x1xi32>
    %68 = arith.ori %63, %67 : vector<66x1xi1>
    %c65_i32_23 = arith.constant 65 : i32
    %69 = vector.broadcast %c65_i32_23 : i32 to vector<66x1xi32>
    %70 = arith.cmpi eq, %61, %69 : vector<66x1xi32>
    %71 = arith.ori %65, %70 : vector<66x1xi1>
    %cst_24 = arith.constant 0.000000e+00 : f32
    %cst_25 = arith.constant 1.000000e+00 : f32
    %72 = vector.broadcast %cst_24 : f32 to vector<66x1xf32>
    %73 = vector.broadcast %cst_25 : f32 to vector<66x1xf32>
    %74 = arith.select %68, %72, %73 : vector<66x1xi1>, vector<66x1xf32>
    %75 = vector.broadcast %74 : vector<66x1xf32> to vector<66x256xf32>
    %76 = arith.mulf %59, %75 : vector<66x256xf32>
    %cst_26 = arith.constant 0.000000e+00 : f32
    %cst_27 = arith.constant 1.000000e+00 : f32
    %77 = vector.broadcast %cst_26 : f32 to vector<66x1xf32>
    %78 = vector.broadcast %cst_27 : f32 to vector<66x1xf32>
    %79 = arith.select %71, %77, %78 : vector<66x1xi1>, vector<66x1xf32>
    %80 = vector.broadcast %79 : vector<66x1xf32> to vector<66x256xf32>
    %81 = arith.mulf %60, %80 : vector<66x256xf32>
    %82 = tpu.concatenate %76, %51, %81 in 1 : vector<66x256xf32>, vector<66x256xf32>, vector<66x256xf32> -> vector<66x768xf32>
    %c232 = arith.constant 232 : index
    %c0_28 = arith.constant 0 : index
    %83 = vector.load %arg1[%c232, %c0_28] : memref<3856x256xf32, #tpu.memory_space<vmem>>, vector<768x256xf32>
    %cst_29 = arith.constant dense<0.000000e+00> : vector<66x256xf32>
    %84 = tpu.matmul %82, %83, %cst_29 {dimension_numbers = #tpu.dot_dimension_numbers<[1], [0], [0], [1], [0, 0, 1, 1], [], []>} : vector<66x768xf32>, vector<768x256xf32>, vector<66x256xf32> -> vector<66x256xf32>
    %85 = vector.extract_strided_slice %18 {offsets = [1, 0], sizes = [1, 256], strides = [1, 1]} : vector<3x256xf32> to vector<1x256xf32>
    %86 = vector.broadcast %85 : vector<1x256xf32> to vector<66x256xf32>
    %87 = arith.addf %84, %86 : vector<66x256xf32>
    %88 = arith.addf %87, %56 : vector<66x256xf32>
    %cst_30 = arith.constant 0.000000e+00 : f32
    %89 = vector.broadcast %cst_30 : f32 to vector<66x256xf32>
    %90 = arith.maximumf %88, %89 : vector<66x256xf32>
    %c1104 = arith.constant 1104 : index
    %c0_31 = arith.constant 0 : index
    %91 = vector.load %arg1[%c1104, %c0_31] : memref<3856x256xf32, #tpu.memory_space<vmem>>, vector<256x256xf32>
    %cst_32 = arith.constant dense<0.000000e+00> : vector<66x256xf32>
    %92 = tpu.matmul %90, %91, %cst_32 {dimension_numbers = #tpu.dot_dimension_numbers<[1], [0], [0], [1], [0, 0, 1, 1], [], []>} : vector<66x256xf32>, vector<256x256xf32>, vector<66x256xf32> -> vector<66x256xf32>
    %93 = vector.extract_strided_slice %92 {offsets = [0, 0], sizes = [66, 128], strides = [1, 1]} : vector<66x256xf32> to vector<66x128xf32>
    %94 = vector.extract_strided_slice %92 {offsets = [0, 128], sizes = [66, 128], strides = [1, 1]} : vector<66x256xf32> to vector<66x128xf32>
    %95 = arith.maximumf %93, %94 : vector<66x128xf32>
    %c1360 = arith.constant 1360 : index
    %c0_33 = arith.constant 0 : index
    %96 = vector.load %arg1[%c1360, %c0_33] : memref<3856x256xf32, #tpu.memory_space<vmem>>, vector<64x66xf32>
    %cst_34 = arith.constant dense<0.000000e+00> : vector<64x128xf32>
    %97 = tpu.matmul %96, %95, %cst_34 {dimension_numbers = #tpu.dot_dimension_numbers<[1], [0], [0], [1], [0, 0, 1, 1], [], []>} : vector<64x66xf32>, vector<66x128xf32>, vector<64x128xf32> -> vector<64x128xf32>
    %98 = vector.extract_strided_slice %97 {offsets = [0, 0], sizes = [32, 128], strides = [1, 1]} : vector<64x128xf32> to vector<32x128xf32>
    %99 = vector.extract_strided_slice %97 {offsets = [32, 0], sizes = [32, 128], strides = [1, 1]} : vector<64x128xf32> to vector<32x128xf32>
    %100 = arith.maximumf %98, %99 : vector<32x128xf32>
    %c2192 = arith.constant 2192 : index
    %c0_35 = arith.constant 0 : index
    %101 = vector.load %arg1[%c2192, %c0_35] : memref<3856x256xf32, #tpu.memory_space<vmem>>, vector<3x128xf32>
    %cst_36 = arith.constant 0.000000e+00 : f32
    %102 = vector.broadcast %cst_36 : f32 to vector<1x128xf32>
    %103 = tpu.concatenate %102, %100, %102 in 0 : vector<1x128xf32>, vector<32x128xf32>, vector<1x128xf32> -> vector<34x128xf32>
    %104 = vector.extract_strided_slice %103 {offsets = [0, 0], sizes = [32, 128], strides = [1, 1]} : vector<34x128xf32> to vector<32x128xf32>
    %105 = vector.extract_strided_slice %103 {offsets = [2, 0], sizes = [32, 128], strides = [1, 1]} : vector<34x128xf32> to vector<32x128xf32>
    %106 = tpu.iota {dimensions = array<i32: 0>} : vector<32x1xi32>
    %c0_i32_37 = arith.constant 0 : i32
    %107 = vector.broadcast %c0_i32_37 : i32 to vector<32x1xi32>
    %108 = arith.cmpi eq, %106, %107 : vector<32x1xi32>
    %c15_i32 = arith.constant 15 : i32
    %109 = vector.broadcast %c15_i32 : i32 to vector<32x1xi32>
    %110 = arith.cmpi eq, %106, %109 : vector<32x1xi32>
    %c16_i32 = arith.constant 16 : i32
    %111 = vector.broadcast %c16_i32 : i32 to vector<32x1xi32>
    %112 = arith.cmpi eq, %106, %111 : vector<32x1xi32>
    %113 = arith.ori %108, %112 : vector<32x1xi1>
    %c31_i32 = arith.constant 31 : i32
    %114 = vector.broadcast %c31_i32 : i32 to vector<32x1xi32>
    %115 = arith.cmpi eq, %106, %114 : vector<32x1xi32>
    %116 = arith.ori %110, %115 : vector<32x1xi1>
    %cst_38 = arith.constant 0.000000e+00 : f32
    %cst_39 = arith.constant 1.000000e+00 : f32
    %117 = vector.broadcast %cst_38 : f32 to vector<32x1xf32>
    %118 = vector.broadcast %cst_39 : f32 to vector<32x1xf32>
    %119 = arith.select %113, %117, %118 : vector<32x1xi1>, vector<32x1xf32>
    %120 = vector.broadcast %119 : vector<32x1xf32> to vector<32x128xf32>
    %121 = arith.mulf %104, %120 : vector<32x128xf32>
    %cst_40 = arith.constant 0.000000e+00 : f32
    %cst_41 = arith.constant 1.000000e+00 : f32
    %122 = vector.broadcast %cst_40 : f32 to vector<32x1xf32>
    %123 = vector.broadcast %cst_41 : f32 to vector<32x1xf32>
    %124 = arith.select %116, %122, %123 : vector<32x1xi1>, vector<32x1xf32>
    %125 = vector.broadcast %124 : vector<32x1xf32> to vector<32x128xf32>
    %126 = arith.mulf %105, %125 : vector<32x128xf32>
    %127 = tpu.concatenate %121, %100, %126 in 1 : vector<32x128xf32>, vector<32x128xf32>, vector<32x128xf32> -> vector<32x384xf32>
    %c1424 = arith.constant 1424 : index
    %c0_42 = arith.constant 0 : index
    %128 = vector.load %arg1[%c1424, %c0_42] : memref<3856x256xf32, #tpu.memory_space<vmem>>, vector<384x128xf32>
    %cst_43 = arith.constant dense<0.000000e+00> : vector<32x128xf32>
    %129 = tpu.matmul %127, %128, %cst_43 {dimension_numbers = #tpu.dot_dimension_numbers<[1], [0], [0], [1], [0, 0, 1, 1], [], []>} : vector<32x384xf32>, vector<384x128xf32>, vector<32x128xf32> -> vector<32x128xf32>
    %130 = vector.extract_strided_slice %101 {offsets = [0, 0], sizes = [1, 128], strides = [1, 1]} : vector<3x128xf32> to vector<1x128xf32>
    %131 = vector.broadcast %130 : vector<1x128xf32> to vector<32x128xf32>
    %132 = arith.addf %129, %131 : vector<32x128xf32>
    %cst_44 = arith.constant 0.000000e+00 : f32
    %133 = vector.broadcast %cst_44 : f32 to vector<32x128xf32>
    %134 = arith.maximumf %132, %133 : vector<32x128xf32>
    %cst_45 = arith.constant 0.000000e+00 : f32
    %135 = vector.broadcast %cst_45 : f32 to vector<1x128xf32>
    %136 = tpu.concatenate %135, %134, %135 in 0 : vector<1x128xf32>, vector<32x128xf32>, vector<1x128xf32> -> vector<34x128xf32>
    %137 = vector.extract_strided_slice %136 {offsets = [0, 0], sizes = [32, 128], strides = [1, 1]} : vector<34x128xf32> to vector<32x128xf32>
    %138 = vector.extract_strided_slice %136 {offsets = [2, 0], sizes = [32, 128], strides = [1, 1]} : vector<34x128xf32> to vector<32x128xf32>
    %139 = tpu.iota {dimensions = array<i32: 0>} : vector<32x1xi32>
    %c0_i32_46 = arith.constant 0 : i32
    %140 = vector.broadcast %c0_i32_46 : i32 to vector<32x1xi32>
    %141 = arith.cmpi eq, %139, %140 : vector<32x1xi32>
    %c15_i32_47 = arith.constant 15 : i32
    %142 = vector.broadcast %c15_i32_47 : i32 to vector<32x1xi32>
    %143 = arith.cmpi eq, %139, %142 : vector<32x1xi32>
    %c16_i32_48 = arith.constant 16 : i32
    %144 = vector.broadcast %c16_i32_48 : i32 to vector<32x1xi32>
    %145 = arith.cmpi eq, %139, %144 : vector<32x1xi32>
    %146 = arith.ori %141, %145 : vector<32x1xi1>
    %c31_i32_49 = arith.constant 31 : i32
    %147 = vector.broadcast %c31_i32_49 : i32 to vector<32x1xi32>
    %148 = arith.cmpi eq, %139, %147 : vector<32x1xi32>
    %149 = arith.ori %143, %148 : vector<32x1xi1>
    %cst_50 = arith.constant 0.000000e+00 : f32
    %cst_51 = arith.constant 1.000000e+00 : f32
    %150 = vector.broadcast %cst_50 : f32 to vector<32x1xf32>
    %151 = vector.broadcast %cst_51 : f32 to vector<32x1xf32>
    %152 = arith.select %146, %150, %151 : vector<32x1xi1>, vector<32x1xf32>
    %153 = vector.broadcast %152 : vector<32x1xf32> to vector<32x128xf32>
    %154 = arith.mulf %137, %153 : vector<32x128xf32>
    %cst_52 = arith.constant 0.000000e+00 : f32
    %cst_53 = arith.constant 1.000000e+00 : f32
    %155 = vector.broadcast %cst_52 : f32 to vector<32x1xf32>
    %156 = vector.broadcast %cst_53 : f32 to vector<32x1xf32>
    %157 = arith.select %149, %155, %156 : vector<32x1xi1>, vector<32x1xf32>
    %158 = vector.broadcast %157 : vector<32x1xf32> to vector<32x128xf32>
    %159 = arith.mulf %138, %158 : vector<32x128xf32>
    %160 = tpu.concatenate %154, %134, %159 in 1 : vector<32x128xf32>, vector<32x128xf32>, vector<32x128xf32> -> vector<32x384xf32>
    %c1808 = arith.constant 1808 : index
    %c0_54 = arith.constant 0 : index
    %161 = vector.load %arg1[%c1808, %c0_54] : memref<3856x256xf32, #tpu.memory_space<vmem>>, vector<384x128xf32>
    %cst_55 = arith.constant dense<0.000000e+00> : vector<32x128xf32>
    %162 = tpu.matmul %160, %161, %cst_55 {dimension_numbers = #tpu.dot_dimension_numbers<[1], [0], [0], [1], [0, 0, 1, 1], [], []>} : vector<32x384xf32>, vector<384x128xf32>, vector<32x128xf32> -> vector<32x128xf32>
    %163 = vector.extract_strided_slice %101 {offsets = [1, 0], sizes = [1, 128], strides = [1, 1]} : vector<3x128xf32> to vector<1x128xf32>
    %164 = vector.broadcast %163 : vector<1x128xf32> to vector<32x128xf32>
    %165 = arith.addf %162, %164 : vector<32x128xf32>
    %166 = arith.addf %165, %100 : vector<32x128xf32>
    %cst_56 = arith.constant 0.000000e+00 : f32
    %167 = vector.broadcast %cst_56 : f32 to vector<32x128xf32>
    %168 = arith.maximumf %166, %167 : vector<32x128xf32>
    %c2200 = arith.constant 2200 : index
    %c0_57 = arith.constant 0 : index
    %169 = vector.load %arg1[%c2200, %c0_57] : memref<3856x256xf32, #tpu.memory_space<vmem>>, vector<128x128xf32>
    %cst_58 = arith.constant dense<0.000000e+00> : vector<32x128xf32>
    %170 = tpu.matmul %168, %169, %cst_58 {dimension_numbers = #tpu.dot_dimension_numbers<[1], [0], [0], [1], [0, 0, 1, 1], [], []>} : vector<32x128xf32>, vector<128x128xf32>, vector<32x128xf32> -> vector<32x128xf32>
    %171 = vector.extract_strided_slice %170 {offsets = [0, 0], sizes = [32, 64], strides = [1, 1]} : vector<32x128xf32> to vector<32x64xf32>
    %172 = vector.extract_strided_slice %170 {offsets = [0, 64], sizes = [32, 64], strides = [1, 1]} : vector<32x128xf32> to vector<32x64xf32>
    %173 = arith.maximumf %171, %172 : vector<32x64xf32>
    %c2328 = arith.constant 2328 : index
    %c0_59 = arith.constant 0 : index
    %174 = vector.load %arg1[%c2328, %c0_59] : memref<3856x256xf32, #tpu.memory_space<vmem>>, vector<32x32xf32>
    %cst_60 = arith.constant dense<0.000000e+00> : vector<32x64xf32>
    %175 = tpu.matmul %174, %173, %cst_60 {dimension_numbers = #tpu.dot_dimension_numbers<[1], [0], [0], [1], [0, 0, 1, 1], [], []>} : vector<32x32xf32>, vector<32x64xf32>, vector<32x64xf32> -> vector<32x64xf32>
    %176 = vector.extract_strided_slice %175 {offsets = [0, 0], sizes = [16, 64], strides = [1, 1]} : vector<32x64xf32> to vector<16x64xf32>
    %177 = vector.extract_strided_slice %175 {offsets = [16, 0], sizes = [16, 64], strides = [1, 1]} : vector<32x64xf32> to vector<16x64xf32>
    %178 = arith.maximumf %176, %177 : vector<16x64xf32>
    %c2744 = arith.constant 2744 : index
    %c0_61 = arith.constant 0 : index
    %179 = vector.load %arg1[%c2744, %c0_61] : memref<3856x256xf32, #tpu.memory_space<vmem>>, vector<3x64xf32>
    %cst_62 = arith.constant 0.000000e+00 : f32
    %180 = vector.broadcast %cst_62 : f32 to vector<1x64xf32>
    %181 = tpu.concatenate %180, %178, %180 in 0 : vector<1x64xf32>, vector<16x64xf32>, vector<1x64xf32> -> vector<18x64xf32>
    %182 = vector.extract_strided_slice %181 {offsets = [0, 0], sizes = [16, 64], strides = [1, 1]} : vector<18x64xf32> to vector<16x64xf32>
    %183 = vector.extract_strided_slice %181 {offsets = [2, 0], sizes = [16, 64], strides = [1, 1]} : vector<18x64xf32> to vector<16x64xf32>
    %184 = tpu.iota {dimensions = array<i32: 0>} : vector<16x1xi32>
    %c0_i32_63 = arith.constant 0 : i32
    %185 = vector.broadcast %c0_i32_63 : i32 to vector<16x1xi32>
    %186 = arith.cmpi eq, %184, %185 : vector<16x1xi32>
    %c7_i32 = arith.constant 7 : i32
    %187 = vector.broadcast %c7_i32 : i32 to vector<16x1xi32>
    %188 = arith.cmpi eq, %184, %187 : vector<16x1xi32>
    %c8_i32 = arith.constant 8 : i32
    %189 = vector.broadcast %c8_i32 : i32 to vector<16x1xi32>
    %190 = arith.cmpi eq, %184, %189 : vector<16x1xi32>
    %191 = arith.ori %186, %190 : vector<16x1xi1>
    %c15_i32_64 = arith.constant 15 : i32
    %192 = vector.broadcast %c15_i32_64 : i32 to vector<16x1xi32>
    %193 = arith.cmpi eq, %184, %192 : vector<16x1xi32>
    %194 = arith.ori %188, %193 : vector<16x1xi1>
    %cst_65 = arith.constant 0.000000e+00 : f32
    %cst_66 = arith.constant 1.000000e+00 : f32
    %195 = vector.broadcast %cst_65 : f32 to vector<16x1xf32>
    %196 = vector.broadcast %cst_66 : f32 to vector<16x1xf32>
    %197 = arith.select %191, %195, %196 : vector<16x1xi1>, vector<16x1xf32>
    %198 = vector.broadcast %197 : vector<16x1xf32> to vector<16x64xf32>
    %199 = arith.mulf %182, %198 : vector<16x64xf32>
    %cst_67 = arith.constant 0.000000e+00 : f32
    %cst_68 = arith.constant 1.000000e+00 : f32
    %200 = vector.broadcast %cst_67 : f32 to vector<16x1xf32>
    %201 = vector.broadcast %cst_68 : f32 to vector<16x1xf32>
    %202 = arith.select %194, %200, %201 : vector<16x1xi1>, vector<16x1xf32>
    %203 = vector.broadcast %202 : vector<16x1xf32> to vector<16x64xf32>
    %204 = arith.mulf %183, %203 : vector<16x64xf32>
    %205 = tpu.concatenate %199, %178, %204 in 1 : vector<16x64xf32>, vector<16x64xf32>, vector<16x64xf32> -> vector<16x192xf32>
    %c2360 = arith.constant 2360 : index
    %c0_69 = arith.constant 0 : index
    %206 = vector.load %arg1[%c2360, %c0_69] : memref<3856x256xf32, #tpu.memory_space<vmem>>, vector<192x64xf32>
    %cst_70 = arith.constant dense<0.000000e+00> : vector<16x64xf32>
    %207 = tpu.matmul %205, %206, %cst_70 {dimension_numbers = #tpu.dot_dimension_numbers<[1], [0], [0], [1], [0, 0, 1, 1], [], []>} : vector<16x192xf32>, vector<192x64xf32>, vector<16x64xf32> -> vector<16x64xf32>
    %208 = vector.extract_strided_slice %179 {offsets = [0, 0], sizes = [1, 64], strides = [1, 1]} : vector<3x64xf32> to vector<1x64xf32>
    %209 = vector.broadcast %208 : vector<1x64xf32> to vector<16x64xf32>
    %210 = arith.addf %207, %209 : vector<16x64xf32>
    %cst_71 = arith.constant 0.000000e+00 : f32
    %211 = vector.broadcast %cst_71 : f32 to vector<16x64xf32>
    %212 = arith.maximumf %210, %211 : vector<16x64xf32>
    %cst_72 = arith.constant 0.000000e+00 : f32
    %213 = vector.broadcast %cst_72 : f32 to vector<1x64xf32>
    %214 = tpu.concatenate %213, %212, %213 in 0 : vector<1x64xf32>, vector<16x64xf32>, vector<1x64xf32> -> vector<18x64xf32>
    %215 = vector.extract_strided_slice %214 {offsets = [0, 0], sizes = [16, 64], strides = [1, 1]} : vector<18x64xf32> to vector<16x64xf32>
    %216 = vector.extract_strided_slice %214 {offsets = [2, 0], sizes = [16, 64], strides = [1, 1]} : vector<18x64xf32> to vector<16x64xf32>
    %217 = tpu.iota {dimensions = array<i32: 0>} : vector<16x1xi32>
    %c0_i32_73 = arith.constant 0 : i32
    %218 = vector.broadcast %c0_i32_73 : i32 to vector<16x1xi32>
    %219 = arith.cmpi eq, %217, %218 : vector<16x1xi32>
    %c7_i32_74 = arith.constant 7 : i32
    %220 = vector.broadcast %c7_i32_74 : i32 to vector<16x1xi32>
    %221 = arith.cmpi eq, %217, %220 : vector<16x1xi32>
    %c8_i32_75 = arith.constant 8 : i32
    %222 = vector.broadcast %c8_i32_75 : i32 to vector<16x1xi32>
    %223 = arith.cmpi eq, %217, %222 : vector<16x1xi32>
    %224 = arith.ori %219, %223 : vector<16x1xi1>
    %c15_i32_76 = arith.constant 15 : i32
    %225 = vector.broadcast %c15_i32_76 : i32 to vector<16x1xi32>
    %226 = arith.cmpi eq, %217, %225 : vector<16x1xi32>
    %227 = arith.ori %221, %226 : vector<16x1xi1>
    %cst_77 = arith.constant 0.000000e+00 : f32
    %cst_78 = arith.constant 1.000000e+00 : f32
    %228 = vector.broadcast %cst_77 : f32 to vector<16x1xf32>
    %229 = vector.broadcast %cst_78 : f32 to vector<16x1xf32>
    %230 = arith.select %224, %228, %229 : vector<16x1xi1>, vector<16x1xf32>
    %231 = vector.broadcast %230 : vector<16x1xf32> to vector<16x64xf32>
    %232 = arith.mulf %215, %231 : vector<16x64xf32>
    %cst_79 = arith.constant 0.000000e+00 : f32
    %cst_80 = arith.constant 1.000000e+00 : f32
    %233 = vector.broadcast %cst_79 : f32 to vector<16x1xf32>
    %234 = vector.broadcast %cst_80 : f32 to vector<16x1xf32>
    %235 = arith.select %227, %233, %234 : vector<16x1xi1>, vector<16x1xf32>
    %236 = vector.broadcast %235 : vector<16x1xf32> to vector<16x64xf32>
    %237 = arith.mulf %216, %236 : vector<16x64xf32>
    %238 = tpu.concatenate %232, %212, %237 in 1 : vector<16x64xf32>, vector<16x64xf32>, vector<16x64xf32> -> vector<16x192xf32>
    %c2552 = arith.constant 2552 : index
    %c0_81 = arith.constant 0 : index
    %239 = vector.load %arg1[%c2552, %c0_81] : memref<3856x256xf32, #tpu.memory_space<vmem>>, vector<192x64xf32>
    %cst_82 = arith.constant dense<0.000000e+00> : vector<16x64xf32>
    %240 = tpu.matmul %238, %239, %cst_82 {dimension_numbers = #tpu.dot_dimension_numbers<[1], [0], [0], [1], [0, 0, 1, 1], [], []>} : vector<16x192xf32>, vector<192x64xf32>, vector<16x64xf32> -> vector<16x64xf32>
    %241 = vector.extract_strided_slice %179 {offsets = [1, 0], sizes = [1, 64], strides = [1, 1]} : vector<3x64xf32> to vector<1x64xf32>
    %242 = vector.broadcast %241 : vector<1x64xf32> to vector<16x64xf32>
    %243 = arith.addf %240, %242 : vector<16x64xf32>
    %244 = arith.addf %243, %178 : vector<16x64xf32>
    %cst_83 = arith.constant 0.000000e+00 : f32
    %245 = vector.broadcast %cst_83 : f32 to vector<16x64xf32>
    %246 = arith.maximumf %244, %245 : vector<16x64xf32>
    %c2752 = arith.constant 2752 : index
    %c0_84 = arith.constant 0 : index
    %247 = vector.load %arg1[%c2752, %c0_84] : memref<3856x256xf32, #tpu.memory_space<vmem>>, vector<64x64xf32>
    %cst_85 = arith.constant dense<0.000000e+00> : vector<16x64xf32>
    %248 = tpu.matmul %246, %247, %cst_85 {dimension_numbers = #tpu.dot_dimension_numbers<[1], [0], [0], [1], [0, 0, 1, 1], [], []>} : vector<16x64xf32>, vector<64x64xf32>, vector<16x64xf32> -> vector<16x64xf32>
    %249 = vector.extract_strided_slice %248 {offsets = [0, 0], sizes = [16, 32], strides = [1, 1]} : vector<16x64xf32> to vector<16x32xf32>
    %250 = vector.extract_strided_slice %248 {offsets = [0, 32], sizes = [16, 32], strides = [1, 1]} : vector<16x64xf32> to vector<16x32xf32>
    %251 = arith.maximumf %249, %250 : vector<16x32xf32>
    %c2816 = arith.constant 2816 : index
    %c0_86 = arith.constant 0 : index
    %252 = vector.load %arg1[%c2816, %c0_86] : memref<3856x256xf32, #tpu.memory_space<vmem>>, vector<16x16xf32>
    %cst_87 = arith.constant dense<0.000000e+00> : vector<16x32xf32>
    %253 = tpu.matmul %252, %251, %cst_87 {dimension_numbers = #tpu.dot_dimension_numbers<[1], [0], [0], [1], [0, 0, 1, 1], [], []>} : vector<16x16xf32>, vector<16x32xf32>, vector<16x32xf32> -> vector<16x32xf32>
    %254 = vector.extract_strided_slice %253 {offsets = [0, 0], sizes = [8, 32], strides = [1, 1]} : vector<16x32xf32> to vector<8x32xf32>
    %255 = vector.extract_strided_slice %253 {offsets = [8, 0], sizes = [8, 32], strides = [1, 1]} : vector<16x32xf32> to vector<8x32xf32>
    %256 = arith.maximumf %254, %255 : vector<8x32xf32>
    %c2832 = arith.constant 2832 : index
    %c0_88 = arith.constant 0 : index
    %257 = vector.load %arg1[%c2832, %c0_88] : memref<3856x256xf32, #tpu.memory_space<vmem>>, vector<32x64xf32>
    %cst_89 = arith.constant dense<0.000000e+00> : vector<8x64xf32>
    %258 = tpu.matmul %256, %257, %cst_89 {dimension_numbers = #tpu.dot_dimension_numbers<[1], [0], [0], [1], [0, 0, 1, 1], [], []>} : vector<8x32xf32>, vector<32x64xf32>, vector<8x64xf32> -> vector<8x64xf32>
    %259 = vector.extract_strided_slice %11 {offsets = [0, 0], sizes = [4, 64], strides = [1, 1]} : vector<6x64xf32> to vector<4x64xf32>
    %260 = tpu.concatenate %259, %259 in 0 : vector<4x64xf32>, vector<4x64xf32> -> vector<8x64xf32>
    %261 = arith.addf %258, %260 : vector<8x64xf32>
    %c3848 = arith.constant 3848 : index
    %c0_90 = arith.constant 0 : index
    %262 = vector.load %arg1[%c3848, %c0_90] : memref<3856x256xf32, #tpu.memory_space<vmem>>, vector<8x8xf32>
    %c3312 = arith.constant 3312 : index
    %c0_91 = arith.constant 0 : index
    %263 = vector.load %arg1[%c3312, %c0_91] : memref<3856x256xf32, #tpu.memory_space<vmem>>, vector<7x64xf32>
    %264 = vector.extract_strided_slice %263 {offsets = [0, 0], sizes = [1, 64], strides = [1, 1]} : vector<7x64xf32> to vector<1x64xf32>
    %265 = vector.extract_strided_slice %263 {offsets = [1, 0], sizes = [1, 64], strides = [1, 1]} : vector<7x64xf32> to vector<1x64xf32>
    %cst_92 = arith.constant dense<0.000000e+00> : vector<8xf32>
    %266 = vector.multi_reduction <add>, %261, %cst_92 [1] : vector<8x64xf32> to vector<8xf32>
    %267 = vector.shape_cast %266 : vector<8xf32> to vector<8x1xf32>
    %cst_93 = arith.constant 6.400000e+01 : f32
    %268 = vector.broadcast %cst_93 : f32 to vector<8x1xf32>
    %269 = arith.divf %267, %268 : vector<8x1xf32>
    %270 = vector.broadcast %269 : vector<8x1xf32> to vector<8x64xf32>
    %271 = arith.subf %261, %270 : vector<8x64xf32>
    %272 = arith.mulf %271, %271 : vector<8x64xf32>
    %cst_94 = arith.constant dense<0.000000e+00> : vector<8xf32>
    %273 = vector.multi_reduction <add>, %272, %cst_94 [1] : vector<8x64xf32> to vector<8xf32>
    %274 = vector.shape_cast %273 : vector<8xf32> to vector<8x1xf32>
    %cst_95 = arith.constant 6.400000e+01 : f32
    %275 = vector.broadcast %cst_95 : f32 to vector<8x1xf32>
    %276 = arith.divf %274, %275 : vector<8x1xf32>
    %cst_96 = arith.constant 9.99999974E-6 : f32
    %277 = vector.broadcast %cst_96 : f32 to vector<8x1xf32>
    %278 = arith.addf %276, %277 : vector<8x1xf32>
    %279 = math.rsqrt %278 : vector<8x1xf32>
    %280 = vector.broadcast %279 : vector<8x1xf32> to vector<8x64xf32>
    %281 = arith.mulf %271, %280 : vector<8x64xf32>
    %282 = vector.broadcast %264 : vector<1x64xf32> to vector<8x64xf32>
    %283 = arith.mulf %281, %282 : vector<8x64xf32>
    %284 = vector.broadcast %265 : vector<1x64xf32> to vector<8x64xf32>
    %285 = arith.addf %283, %284 : vector<8x64xf32>
    %c2864 = arith.constant 2864 : index
    %c0_97 = arith.constant 0 : index
    %286 = vector.load %arg1[%c2864, %c0_97] : memref<3856x256xf32, #tpu.memory_space<vmem>>, vector<64x128xf32>
    %cst_98 = arith.constant dense<0.000000e+00> : vector<8x128xf32>
    %287 = tpu.matmul %285, %286, %cst_98 {dimension_numbers = #tpu.dot_dimension_numbers<[1], [0], [0], [1], [0, 0, 1, 1], [], []>} : vector<8x64xf32>, vector<64x128xf32>, vector<8x128xf32> -> vector<8x128xf32>
    %c2928 = arith.constant 2928 : index
    %c0_99 = arith.constant 0 : index
    %288 = vector.load %arg1[%c2928, %c0_99] : memref<3856x256xf32, #tpu.memory_space<vmem>>, vector<64x128xf32>
    %cst_100 = arith.constant dense<0.000000e+00> : vector<8x128xf32>
    %289 = tpu.matmul %285, %288, %cst_100 {dimension_numbers = #tpu.dot_dimension_numbers<[1], [0], [0], [1], [0, 0, 1, 1], [], []>} : vector<8x64xf32>, vector<64x128xf32>, vector<8x128xf32> -> vector<8x128xf32>
    %c2992 = arith.constant 2992 : index
    %c0_101 = arith.constant 0 : index
    %290 = vector.load %arg1[%c2992, %c0_101] : memref<3856x256xf32, #tpu.memory_space<vmem>>, vector<64x128xf32>
    %cst_102 = arith.constant dense<0.000000e+00> : vector<8x128xf32>
    %291 = tpu.matmul %285, %290, %cst_102 {dimension_numbers = #tpu.dot_dimension_numbers<[1], [0], [0], [1], [0, 0, 1, 1], [], []>} : vector<8x64xf32>, vector<64x128xf32>, vector<8x128xf32> -> vector<8x128xf32>
    %292 = vector.extract_strided_slice %287 {offsets = [0, 0], sizes = [8, 32], strides = [1, 1]} : vector<8x128xf32> to vector<8x32xf32>
    %293 = vector.extract_strided_slice %289 {offsets = [0, 0], sizes = [8, 32], strides = [1, 1]} : vector<8x128xf32> to vector<8x32xf32>
    %294 = vector.extract_strided_slice %291 {offsets = [0, 0], sizes = [8, 32], strides = [1, 1]} : vector<8x128xf32> to vector<8x32xf32>
    %cst_103 = arith.constant dense<0.000000e+00> : vector<8x8xf32>
    %295 = tpu.matmul %292, %293, %cst_103 {dimension_numbers = #tpu.dot_dimension_numbers<[1], [1], [0], [0], [0, 0, 1, 0], [], []>} : vector<8x32xf32>, vector<8x32xf32>, vector<8x8xf32> -> vector<8x8xf32>
    %296 = arith.addf %295, %262 : vector<8x8xf32>
    %cst_104 = arith.constant dense<0xFF800000> : vector<8xf32>
    %297 = vector.multi_reduction <maximumf>, %296, %cst_104 [1] : vector<8x8xf32> to vector<8xf32>
    %298 = vector.shape_cast %297 : vector<8xf32> to vector<8x1xf32>
    %299 = vector.broadcast %298 : vector<8x1xf32> to vector<8x8xf32>
    %300 = arith.subf %296, %299 : vector<8x8xf32>
    %301 = math.exp %300 : vector<8x8xf32>
    %cst_105 = arith.constant dense<0.000000e+00> : vector<8xf32>
    %302 = vector.multi_reduction <add>, %301, %cst_105 [1] : vector<8x8xf32> to vector<8xf32>
    %303 = vector.shape_cast %302 : vector<8xf32> to vector<8x1xf32>
    %304 = vector.broadcast %303 : vector<8x1xf32> to vector<8x8xf32>
    %305 = arith.divf %301, %304 : vector<8x8xf32>
    %cst_106 = arith.constant dense<0.000000e+00> : vector<8x32xf32>
    %306 = tpu.matmul %305, %294, %cst_106 {dimension_numbers = #tpu.dot_dimension_numbers<[1], [0], [0], [1], [0, 0, 1, 1], [], []>} : vector<8x8xf32>, vector<8x32xf32>, vector<8x32xf32> -> vector<8x32xf32>
    %307 = vector.extract_strided_slice %287 {offsets = [0, 32], sizes = [8, 32], strides = [1, 1]} : vector<8x128xf32> to vector<8x32xf32>
    %308 = vector.extract_strided_slice %289 {offsets = [0, 32], sizes = [8, 32], strides = [1, 1]} : vector<8x128xf32> to vector<8x32xf32>
    %309 = vector.extract_strided_slice %291 {offsets = [0, 32], sizes = [8, 32], strides = [1, 1]} : vector<8x128xf32> to vector<8x32xf32>
    %cst_107 = arith.constant dense<0.000000e+00> : vector<8x8xf32>
    %310 = tpu.matmul %307, %308, %cst_107 {dimension_numbers = #tpu.dot_dimension_numbers<[1], [1], [0], [0], [0, 0, 1, 0], [], []>} : vector<8x32xf32>, vector<8x32xf32>, vector<8x8xf32> -> vector<8x8xf32>
    %311 = arith.addf %310, %262 : vector<8x8xf32>
    %cst_108 = arith.constant dense<0xFF800000> : vector<8xf32>
    %312 = vector.multi_reduction <maximumf>, %311, %cst_108 [1] : vector<8x8xf32> to vector<8xf32>
    %313 = vector.shape_cast %312 : vector<8xf32> to vector<8x1xf32>
    %314 = vector.broadcast %313 : vector<8x1xf32> to vector<8x8xf32>
    %315 = arith.subf %311, %314 : vector<8x8xf32>
    %316 = math.exp %315 : vector<8x8xf32>
    %cst_109 = arith.constant dense<0.000000e+00> : vector<8xf32>
    %317 = vector.multi_reduction <add>, %316, %cst_109 [1] : vector<8x8xf32> to vector<8xf32>
    %318 = vector.shape_cast %317 : vector<8xf32> to vector<8x1xf32>
    %319 = vector.broadcast %318 : vector<8x1xf32> to vector<8x8xf32>
    %320 = arith.divf %316, %319 : vector<8x8xf32>
    %cst_110 = arith.constant dense<0.000000e+00> : vector<8x32xf32>
    %321 = tpu.matmul %320, %309, %cst_110 {dimension_numbers = #tpu.dot_dimension_numbers<[1], [0], [0], [1], [0, 0, 1, 1], [], []>} : vector<8x8xf32>, vector<8x32xf32>, vector<8x32xf32> -> vector<8x32xf32>
    %322 = vector.extract_strided_slice %287 {offsets = [0, 64], sizes = [8, 32], strides = [1, 1]} : vector<8x128xf32> to vector<8x32xf32>
    %323 = vector.extract_strided_slice %289 {offsets = [0, 64], sizes = [8, 32], strides = [1, 1]} : vector<8x128xf32> to vector<8x32xf32>
    %324 = vector.extract_strided_slice %291 {offsets = [0, 64], sizes = [8, 32], strides = [1, 1]} : vector<8x128xf32> to vector<8x32xf32>
    %cst_111 = arith.constant dense<0.000000e+00> : vector<8x8xf32>
    %325 = tpu.matmul %322, %323, %cst_111 {dimension_numbers = #tpu.dot_dimension_numbers<[1], [1], [0], [0], [0, 0, 1, 0], [], []>} : vector<8x32xf32>, vector<8x32xf32>, vector<8x8xf32> -> vector<8x8xf32>
    %326 = arith.addf %325, %262 : vector<8x8xf32>
    %cst_112 = arith.constant dense<0xFF800000> : vector<8xf32>
    %327 = vector.multi_reduction <maximumf>, %326, %cst_112 [1] : vector<8x8xf32> to vector<8xf32>
    %328 = vector.shape_cast %327 : vector<8xf32> to vector<8x1xf32>
    %329 = vector.broadcast %328 : vector<8x1xf32> to vector<8x8xf32>
    %330 = arith.subf %326, %329 : vector<8x8xf32>
    %331 = math.exp %330 : vector<8x8xf32>
    %cst_113 = arith.constant dense<0.000000e+00> : vector<8xf32>
    %332 = vector.multi_reduction <add>, %331, %cst_113 [1] : vector<8x8xf32> to vector<8xf32>
    %333 = vector.shape_cast %332 : vector<8xf32> to vector<8x1xf32>
    %334 = vector.broadcast %333 : vector<8x1xf32> to vector<8x8xf32>
    %335 = arith.divf %331, %334 : vector<8x8xf32>
    %cst_114 = arith.constant dense<0.000000e+00> : vector<8x32xf32>
    %336 = tpu.matmul %335, %324, %cst_114 {dimension_numbers = #tpu.dot_dimension_numbers<[1], [0], [0], [1], [0, 0, 1, 1], [], []>} : vector<8x8xf32>, vector<8x32xf32>, vector<8x32xf32> -> vector<8x32xf32>
    %337 = vector.extract_strided_slice %287 {offsets = [0, 96], sizes = [8, 32], strides = [1, 1]} : vector<8x128xf32> to vector<8x32xf32>
    %338 = vector.extract_strided_slice %289 {offsets = [0, 96], sizes = [8, 32], strides = [1, 1]} : vector<8x128xf32> to vector<8x32xf32>
    %339 = vector.extract_strided_slice %291 {offsets = [0, 96], sizes = [8, 32], strides = [1, 1]} : vector<8x128xf32> to vector<8x32xf32>
    %cst_115 = arith.constant dense<0.000000e+00> : vector<8x8xf32>
    %340 = tpu.matmul %337, %338, %cst_115 {dimension_numbers = #tpu.dot_dimension_numbers<[1], [1], [0], [0], [0, 0, 1, 0], [], []>} : vector<8x32xf32>, vector<8x32xf32>, vector<8x8xf32> -> vector<8x8xf32>
    %341 = arith.addf %340, %262 : vector<8x8xf32>
    %cst_116 = arith.constant dense<0xFF800000> : vector<8xf32>
    %342 = vector.multi_reduction <maximumf>, %341, %cst_116 [1] : vector<8x8xf32> to vector<8xf32>
    %343 = vector.shape_cast %342 : vector<8xf32> to vector<8x1xf32>
    %344 = vector.broadcast %343 : vector<8x1xf32> to vector<8x8xf32>
    %345 = arith.subf %341, %344 : vector<8x8xf32>
    %346 = math.exp %345 : vector<8x8xf32>
    %cst_117 = arith.constant dense<0.000000e+00> : vector<8xf32>
    %347 = vector.multi_reduction <add>, %346, %cst_117 [1] : vector<8x8xf32> to vector<8xf32>
    %348 = vector.shape_cast %347 : vector<8xf32> to vector<8x1xf32>
    %349 = vector.broadcast %348 : vector<8x1xf32> to vector<8x8xf32>
    %350 = arith.divf %346, %349 : vector<8x8xf32>
    %cst_118 = arith.constant dense<0.000000e+00> : vector<8x32xf32>
    %351 = tpu.matmul %350, %339, %cst_118 {dimension_numbers = #tpu.dot_dimension_numbers<[1], [0], [0], [1], [0, 0, 1, 1], [], []>} : vector<8x8xf32>, vector<8x32xf32>, vector<8x32xf32> -> vector<8x32xf32>
    %352 = tpu.concatenate %306, %321, %336, %351 in 1 : vector<8x32xf32>, vector<8x32xf32>, vector<8x32xf32>, vector<8x32xf32> -> vector<8x128xf32>
    %c3056 = arith.constant 3056 : index
    %c0_119 = arith.constant 0 : index
    %353 = vector.load %arg1[%c3056, %c0_119] : memref<3856x256xf32, #tpu.memory_space<vmem>>, vector<128x64xf32>
    %cst_120 = arith.constant dense<0.000000e+00> : vector<8x64xf32>
    %354 = tpu.matmul %352, %353, %cst_120 {dimension_numbers = #tpu.dot_dimension_numbers<[1], [0], [0], [1], [0, 0, 1, 1], [], []>} : vector<8x128xf32>, vector<128x64xf32>, vector<8x64xf32> -> vector<8x64xf32>
    %355 = arith.addf %261, %354 : vector<8x64xf32>
    %356 = vector.extract_strided_slice %263 {offsets = [4, 0], sizes = [1, 64], strides = [1, 1]} : vector<7x64xf32> to vector<1x64xf32>
    %357 = vector.broadcast %356 : vector<1x64xf32> to vector<8x64xf32>
    %358 = arith.addf %355, %357 : vector<8x64xf32>
    %359 = vector.extract_strided_slice %263 {offsets = [2, 0], sizes = [1, 64], strides = [1, 1]} : vector<7x64xf32> to vector<1x64xf32>
    %360 = vector.extract_strided_slice %263 {offsets = [3, 0], sizes = [1, 64], strides = [1, 1]} : vector<7x64xf32> to vector<1x64xf32>
    %cst_121 = arith.constant dense<0.000000e+00> : vector<8xf32>
    %361 = vector.multi_reduction <add>, %358, %cst_121 [1] : vector<8x64xf32> to vector<8xf32>
    %362 = vector.shape_cast %361 : vector<8xf32> to vector<8x1xf32>
    %cst_122 = arith.constant 6.400000e+01 : f32
    %363 = vector.broadcast %cst_122 : f32 to vector<8x1xf32>
    %364 = arith.divf %362, %363 : vector<8x1xf32>
    %365 = vector.broadcast %364 : vector<8x1xf32> to vector<8x64xf32>
    %366 = arith.subf %358, %365 : vector<8x64xf32>
    %367 = arith.mulf %366, %366 : vector<8x64xf32>
    %cst_123 = arith.constant dense<0.000000e+00> : vector<8xf32>
    %368 = vector.multi_reduction <add>, %367, %cst_123 [1] : vector<8x64xf32> to vector<8xf32>
    %369 = vector.shape_cast %368 : vector<8xf32> to vector<8x1xf32>
    %cst_124 = arith.constant 6.400000e+01 : f32
    %370 = vector.broadcast %cst_124 : f32 to vector<8x1xf32>
    %371 = arith.divf %369, %370 : vector<8x1xf32>
    %cst_125 = arith.constant 9.99999974E-6 : f32
    %372 = vector.broadcast %cst_125 : f32 to vector<8x1xf32>
    %373 = arith.addf %371, %372 : vector<8x1xf32>
    %374 = math.rsqrt %373 : vector<8x1xf32>
    %375 = vector.broadcast %374 : vector<8x1xf32> to vector<8x64xf32>
    %376 = arith.mulf %366, %375 : vector<8x64xf32>
    %377 = vector.broadcast %359 : vector<1x64xf32> to vector<8x64xf32>
    %378 = arith.mulf %376, %377 : vector<8x64xf32>
    %379 = vector.broadcast %360 : vector<1x64xf32> to vector<8x64xf32>
    %380 = arith.addf %378, %379 : vector<8x64xf32>
    %c3184 = arith.constant 3184 : index
    %c0_126 = arith.constant 0 : index
    %381 = vector.load %arg1[%c3184, %c0_126] : memref<3856x256xf32, #tpu.memory_space<vmem>>, vector<64x64xf32>
    %cst_127 = arith.constant dense<0.000000e+00> : vector<8x64xf32>
    %382 = tpu.matmul %380, %381, %cst_127 {dimension_numbers = #tpu.dot_dimension_numbers<[1], [0], [0], [1], [0, 0, 1, 1], [], []>} : vector<8x64xf32>, vector<64x64xf32>, vector<8x64xf32> -> vector<8x64xf32>
    %383 = vector.extract_strided_slice %263 {offsets = [5, 0], sizes = [1, 64], strides = [1, 1]} : vector<7x64xf32> to vector<1x64xf32>
    %384 = vector.broadcast %383 : vector<1x64xf32> to vector<8x64xf32>
    %385 = arith.addf %382, %384 : vector<8x64xf32>
    %386 = arith.mulf %385, %385 : vector<8x64xf32>
    %387 = arith.mulf %385, %386 : vector<8x64xf32>
    %cst_128 = arith.constant 4.471500e-02 : f32
    %388 = vector.broadcast %cst_128 : f32 to vector<8x64xf32>
    %389 = arith.mulf %388, %387 : vector<8x64xf32>
    %390 = arith.addf %385, %389 : vector<8x64xf32>
    %cst_129 = arith.constant 0.797884583 : f32
    %391 = vector.broadcast %cst_129 : f32 to vector<8x64xf32>
    %392 = arith.mulf %391, %390 : vector<8x64xf32>
    %393 = math.tanh %392 : vector<8x64xf32>
    %cst_130 = arith.constant 1.000000e+00 : f32
    %394 = vector.broadcast %cst_130 : f32 to vector<8x64xf32>
    %395 = arith.addf %394, %393 : vector<8x64xf32>
    %cst_131 = arith.constant 5.000000e-01 : f32
    %396 = vector.broadcast %cst_131 : f32 to vector<8x64xf32>
    %397 = arith.mulf %396, %395 : vector<8x64xf32>
    %398 = arith.mulf %385, %397 : vector<8x64xf32>
    %c3248 = arith.constant 3248 : index
    %c0_132 = arith.constant 0 : index
    %399 = vector.load %arg1[%c3248, %c0_132] : memref<3856x256xf32, #tpu.memory_space<vmem>>, vector<64x64xf32>
    %cst_133 = arith.constant dense<0.000000e+00> : vector<8x64xf32>
    %400 = tpu.matmul %398, %399, %cst_133 {dimension_numbers = #tpu.dot_dimension_numbers<[1], [0], [0], [1], [0, 0, 1, 1], [], []>} : vector<8x64xf32>, vector<64x64xf32>, vector<8x64xf32> -> vector<8x64xf32>
    %401 = vector.extract_strided_slice %263 {offsets = [6, 0], sizes = [1, 64], strides = [1, 1]} : vector<7x64xf32> to vector<1x64xf32>
    %402 = vector.broadcast %401 : vector<1x64xf32> to vector<8x64xf32>
    %403 = arith.addf %400, %402 : vector<8x64xf32>
    %404 = arith.addf %358, %403 : vector<8x64xf32>
    %c3768 = arith.constant 3768 : index
    %c0_134 = arith.constant 0 : index
    %405 = vector.load %arg1[%c3768, %c0_134] : memref<3856x256xf32, #tpu.memory_space<vmem>>, vector<7x64xf32>
    %406 = vector.extract_strided_slice %405 {offsets = [0, 0], sizes = [1, 64], strides = [1, 1]} : vector<7x64xf32> to vector<1x64xf32>
    %407 = vector.extract_strided_slice %405 {offsets = [1, 0], sizes = [1, 64], strides = [1, 1]} : vector<7x64xf32> to vector<1x64xf32>
    %cst_135 = arith.constant dense<0.000000e+00> : vector<8xf32>
    %408 = vector.multi_reduction <add>, %404, %cst_135 [1] : vector<8x64xf32> to vector<8xf32>
    %409 = vector.shape_cast %408 : vector<8xf32> to vector<8x1xf32>
    %cst_136 = arith.constant 6.400000e+01 : f32
    %410 = vector.broadcast %cst_136 : f32 to vector<8x1xf32>
    %411 = arith.divf %409, %410 : vector<8x1xf32>
    %412 = vector.broadcast %411 : vector<8x1xf32> to vector<8x64xf32>
    %413 = arith.subf %404, %412 : vector<8x64xf32>
    %414 = arith.mulf %413, %413 : vector<8x64xf32>
    %cst_137 = arith.constant dense<0.000000e+00> : vector<8xf32>
    %415 = vector.multi_reduction <add>, %414, %cst_137 [1] : vector<8x64xf32> to vector<8xf32>
    %416 = vector.shape_cast %415 : vector<8xf32> to vector<8x1xf32>
    %cst_138 = arith.constant 6.400000e+01 : f32
    %417 = vector.broadcast %cst_138 : f32 to vector<8x1xf32>
    %418 = arith.divf %416, %417 : vector<8x1xf32>
    %cst_139 = arith.constant 9.99999974E-6 : f32
    %419 = vector.broadcast %cst_139 : f32 to vector<8x1xf32>
    %420 = arith.addf %418, %419 : vector<8x1xf32>
    %421 = math.rsqrt %420 : vector<8x1xf32>
    %422 = vector.broadcast %421 : vector<8x1xf32> to vector<8x64xf32>
    %423 = arith.mulf %413, %422 : vector<8x64xf32>
    %424 = vector.broadcast %406 : vector<1x64xf32> to vector<8x64xf32>
    %425 = arith.mulf %423, %424 : vector<8x64xf32>
    %426 = vector.broadcast %407 : vector<1x64xf32> to vector<8x64xf32>
    %427 = arith.addf %425, %426 : vector<8x64xf32>
    %c3320 = arith.constant 3320 : index
    %c0_140 = arith.constant 0 : index
    %428 = vector.load %arg1[%c3320, %c0_140] : memref<3856x256xf32, #tpu.memory_space<vmem>>, vector<64x128xf32>
    %cst_141 = arith.constant dense<0.000000e+00> : vector<8x128xf32>
    %429 = tpu.matmul %427, %428, %cst_141 {dimension_numbers = #tpu.dot_dimension_numbers<[1], [0], [0], [1], [0, 0, 1, 1], [], []>} : vector<8x64xf32>, vector<64x128xf32>, vector<8x128xf32> -> vector<8x128xf32>
    %c3384 = arith.constant 3384 : index
    %c0_142 = arith.constant 0 : index
    %430 = vector.load %arg1[%c3384, %c0_142] : memref<3856x256xf32, #tpu.memory_space<vmem>>, vector<64x128xf32>
    %cst_143 = arith.constant dense<0.000000e+00> : vector<8x128xf32>
    %431 = tpu.matmul %427, %430, %cst_143 {dimension_numbers = #tpu.dot_dimension_numbers<[1], [0], [0], [1], [0, 0, 1, 1], [], []>} : vector<8x64xf32>, vector<64x128xf32>, vector<8x128xf32> -> vector<8x128xf32>
    %c3448 = arith.constant 3448 : index
    %c0_144 = arith.constant 0 : index
    %432 = vector.load %arg1[%c3448, %c0_144] : memref<3856x256xf32, #tpu.memory_space<vmem>>, vector<64x128xf32>
    %cst_145 = arith.constant dense<0.000000e+00> : vector<8x128xf32>
    %433 = tpu.matmul %427, %432, %cst_145 {dimension_numbers = #tpu.dot_dimension_numbers<[1], [0], [0], [1], [0, 0, 1, 1], [], []>} : vector<8x64xf32>, vector<64x128xf32>, vector<8x128xf32> -> vector<8x128xf32>
    %434 = vector.extract_strided_slice %429 {offsets = [0, 0], sizes = [8, 32], strides = [1, 1]} : vector<8x128xf32> to vector<8x32xf32>
    %435 = vector.extract_strided_slice %431 {offsets = [0, 0], sizes = [8, 32], strides = [1, 1]} : vector<8x128xf32> to vector<8x32xf32>
    %436 = vector.extract_strided_slice %433 {offsets = [0, 0], sizes = [8, 32], strides = [1, 1]} : vector<8x128xf32> to vector<8x32xf32>
    %cst_146 = arith.constant dense<0.000000e+00> : vector<8x8xf32>
    %437 = tpu.matmul %434, %435, %cst_146 {dimension_numbers = #tpu.dot_dimension_numbers<[1], [1], [0], [0], [0, 0, 1, 0], [], []>} : vector<8x32xf32>, vector<8x32xf32>, vector<8x8xf32> -> vector<8x8xf32>
    %438 = arith.addf %437, %262 : vector<8x8xf32>
    %cst_147 = arith.constant dense<0xFF800000> : vector<8xf32>
    %439 = vector.multi_reduction <maximumf>, %438, %cst_147 [1] : vector<8x8xf32> to vector<8xf32>
    %440 = vector.shape_cast %439 : vector<8xf32> to vector<8x1xf32>
    %441 = vector.broadcast %440 : vector<8x1xf32> to vector<8x8xf32>
    %442 = arith.subf %438, %441 : vector<8x8xf32>
    %443 = math.exp %442 : vector<8x8xf32>
    %cst_148 = arith.constant dense<0.000000e+00> : vector<8xf32>
    %444 = vector.multi_reduction <add>, %443, %cst_148 [1] : vector<8x8xf32> to vector<8xf32>
    %445 = vector.shape_cast %444 : vector<8xf32> to vector<8x1xf32>
    %446 = vector.broadcast %445 : vector<8x1xf32> to vector<8x8xf32>
    %447 = arith.divf %443, %446 : vector<8x8xf32>
    %cst_149 = arith.constant dense<0.000000e+00> : vector<8x32xf32>
    %448 = tpu.matmul %447, %436, %cst_149 {dimension_numbers = #tpu.dot_dimension_numbers<[1], [0], [0], [1], [0, 0, 1, 1], [], []>} : vector<8x8xf32>, vector<8x32xf32>, vector<8x32xf32> -> vector<8x32xf32>
    %449 = vector.extract_strided_slice %429 {offsets = [0, 32], sizes = [8, 32], strides = [1, 1]} : vector<8x128xf32> to vector<8x32xf32>
    %450 = vector.extract_strided_slice %431 {offsets = [0, 32], sizes = [8, 32], strides = [1, 1]} : vector<8x128xf32> to vector<8x32xf32>
    %451 = vector.extract_strided_slice %433 {offsets = [0, 32], sizes = [8, 32], strides = [1, 1]} : vector<8x128xf32> to vector<8x32xf32>
    %cst_150 = arith.constant dense<0.000000e+00> : vector<8x8xf32>
    %452 = tpu.matmul %449, %450, %cst_150 {dimension_numbers = #tpu.dot_dimension_numbers<[1], [1], [0], [0], [0, 0, 1, 0], [], []>} : vector<8x32xf32>, vector<8x32xf32>, vector<8x8xf32> -> vector<8x8xf32>
    %453 = arith.addf %452, %262 : vector<8x8xf32>
    %cst_151 = arith.constant dense<0xFF800000> : vector<8xf32>
    %454 = vector.multi_reduction <maximumf>, %453, %cst_151 [1] : vector<8x8xf32> to vector<8xf32>
    %455 = vector.shape_cast %454 : vector<8xf32> to vector<8x1xf32>
    %456 = vector.broadcast %455 : vector<8x1xf32> to vector<8x8xf32>
    %457 = arith.subf %453, %456 : vector<8x8xf32>
    %458 = math.exp %457 : vector<8x8xf32>
    %cst_152 = arith.constant dense<0.000000e+00> : vector<8xf32>
    %459 = vector.multi_reduction <add>, %458, %cst_152 [1] : vector<8x8xf32> to vector<8xf32>
    %460 = vector.shape_cast %459 : vector<8xf32> to vector<8x1xf32>
    %461 = vector.broadcast %460 : vector<8x1xf32> to vector<8x8xf32>
    %462 = arith.divf %458, %461 : vector<8x8xf32>
    %cst_153 = arith.constant dense<0.000000e+00> : vector<8x32xf32>
    %463 = tpu.matmul %462, %451, %cst_153 {dimension_numbers = #tpu.dot_dimension_numbers<[1], [0], [0], [1], [0, 0, 1, 1], [], []>} : vector<8x8xf32>, vector<8x32xf32>, vector<8x32xf32> -> vector<8x32xf32>
    %464 = vector.extract_strided_slice %429 {offsets = [0, 64], sizes = [8, 32], strides = [1, 1]} : vector<8x128xf32> to vector<8x32xf32>
    %465 = vector.extract_strided_slice %431 {offsets = [0, 64], sizes = [8, 32], strides = [1, 1]} : vector<8x128xf32> to vector<8x32xf32>
    %466 = vector.extract_strided_slice %433 {offsets = [0, 64], sizes = [8, 32], strides = [1, 1]} : vector<8x128xf32> to vector<8x32xf32>
    %cst_154 = arith.constant dense<0.000000e+00> : vector<8x8xf32>
    %467 = tpu.matmul %464, %465, %cst_154 {dimension_numbers = #tpu.dot_dimension_numbers<[1], [1], [0], [0], [0, 0, 1, 0], [], []>} : vector<8x32xf32>, vector<8x32xf32>, vector<8x8xf32> -> vector<8x8xf32>
    %468 = arith.addf %467, %262 : vector<8x8xf32>
    %cst_155 = arith.constant dense<0xFF800000> : vector<8xf32>
    %469 = vector.multi_reduction <maximumf>, %468, %cst_155 [1] : vector<8x8xf32> to vector<8xf32>
    %470 = vector.shape_cast %469 : vector<8xf32> to vector<8x1xf32>
    %471 = vector.broadcast %470 : vector<8x1xf32> to vector<8x8xf32>
    %472 = arith.subf %468, %471 : vector<8x8xf32>
    %473 = math.exp %472 : vector<8x8xf32>
    %cst_156 = arith.constant dense<0.000000e+00> : vector<8xf32>
    %474 = vector.multi_reduction <add>, %473, %cst_156 [1] : vector<8x8xf32> to vector<8xf32>
    %475 = vector.shape_cast %474 : vector<8xf32> to vector<8x1xf32>
    %476 = vector.broadcast %475 : vector<8x1xf32> to vector<8x8xf32>
    %477 = arith.divf %473, %476 : vector<8x8xf32>
    %cst_157 = arith.constant dense<0.000000e+00> : vector<8x32xf32>
    %478 = tpu.matmul %477, %466, %cst_157 {dimension_numbers = #tpu.dot_dimension_numbers<[1], [0], [0], [1], [0, 0, 1, 1], [], []>} : vector<8x8xf32>, vector<8x32xf32>, vector<8x32xf32> -> vector<8x32xf32>
    %479 = vector.extract_strided_slice %429 {offsets = [0, 96], sizes = [8, 32], strides = [1, 1]} : vector<8x128xf32> to vector<8x32xf32>
    %480 = vector.extract_strided_slice %431 {offsets = [0, 96], sizes = [8, 32], strides = [1, 1]} : vector<8x128xf32> to vector<8x32xf32>
    %481 = vector.extract_strided_slice %433 {offsets = [0, 96], sizes = [8, 32], strides = [1, 1]} : vector<8x128xf32> to vector<8x32xf32>
    %cst_158 = arith.constant dense<0.000000e+00> : vector<8x8xf32>
    %482 = tpu.matmul %479, %480, %cst_158 {dimension_numbers = #tpu.dot_dimension_numbers<[1], [1], [0], [0], [0, 0, 1, 0], [], []>} : vector<8x32xf32>, vector<8x32xf32>, vector<8x8xf32> -> vector<8x8xf32>
    %483 = arith.addf %482, %262 : vector<8x8xf32>
    %cst_159 = arith.constant dense<0xFF800000> : vector<8xf32>
    %484 = vector.multi_reduction <maximumf>, %483, %cst_159 [1] : vector<8x8xf32> to vector<8xf32>
    %485 = vector.shape_cast %484 : vector<8xf32> to vector<8x1xf32>
    %486 = vector.broadcast %485 : vector<8x1xf32> to vector<8x8xf32>
    %487 = arith.subf %483, %486 : vector<8x8xf32>
    %488 = math.exp %487 : vector<8x8xf32>
    %cst_160 = arith.constant dense<0.000000e+00> : vector<8xf32>
    %489 = vector.multi_reduction <add>, %488, %cst_160 [1] : vector<8x8xf32> to vector<8xf32>
    %490 = vector.shape_cast %489 : vector<8xf32> to vector<8x1xf32>
    %491 = vector.broadcast %490 : vector<8x1xf32> to vector<8x8xf32>
    %492 = arith.divf %488, %491 : vector<8x8xf32>
    %cst_161 = arith.constant dense<0.000000e+00> : vector<8x32xf32>
    %493 = tpu.matmul %492, %481, %cst_161 {dimension_numbers = #tpu.dot_dimension_numbers<[1], [0], [0], [1], [0, 0, 1, 1], [], []>} : vector<8x8xf32>, vector<8x32xf32>, vector<8x32xf32> -> vector<8x32xf32>
    %494 = tpu.concatenate %448, %463, %478, %493 in 1 : vector<8x32xf32>, vector<8x32xf32>, vector<8x32xf32>, vector<8x32xf32> -> vector<8x128xf32>
    %c3512 = arith.constant 3512 : index
    %c0_162 = arith.constant 0 : index
    %495 = vector.load %arg1[%c3512, %c0_162] : memref<3856x256xf32, #tpu.memory_space<vmem>>, vector<128x64xf32>
    %cst_163 = arith.constant dense<0.000000e+00> : vector<8x64xf32>
    %496 = tpu.matmul %494, %495, %cst_163 {dimension_numbers = #tpu.dot_dimension_numbers<[1], [0], [0], [1], [0, 0, 1, 1], [], []>} : vector<8x128xf32>, vector<128x64xf32>, vector<8x64xf32> -> vector<8x64xf32>
    %497 = arith.addf %404, %496 : vector<8x64xf32>
    %498 = vector.extract_strided_slice %405 {offsets = [4, 0], sizes = [1, 64], strides = [1, 1]} : vector<7x64xf32> to vector<1x64xf32>
    %499 = vector.broadcast %498 : vector<1x64xf32> to vector<8x64xf32>
    %500 = arith.addf %497, %499 : vector<8x64xf32>
    %501 = vector.extract_strided_slice %405 {offsets = [2, 0], sizes = [1, 64], strides = [1, 1]} : vector<7x64xf32> to vector<1x64xf32>
    %502 = vector.extract_strided_slice %405 {offsets = [3, 0], sizes = [1, 64], strides = [1, 1]} : vector<7x64xf32> to vector<1x64xf32>
    %cst_164 = arith.constant dense<0.000000e+00> : vector<8xf32>
    %503 = vector.multi_reduction <add>, %500, %cst_164 [1] : vector<8x64xf32> to vector<8xf32>
    %504 = vector.shape_cast %503 : vector<8xf32> to vector<8x1xf32>
    %cst_165 = arith.constant 6.400000e+01 : f32
    %505 = vector.broadcast %cst_165 : f32 to vector<8x1xf32>
    %506 = arith.divf %504, %505 : vector<8x1xf32>
    %507 = vector.broadcast %506 : vector<8x1xf32> to vector<8x64xf32>
    %508 = arith.subf %500, %507 : vector<8x64xf32>
    %509 = arith.mulf %508, %508 : vector<8x64xf32>
    %cst_166 = arith.constant dense<0.000000e+00> : vector<8xf32>
    %510 = vector.multi_reduction <add>, %509, %cst_166 [1] : vector<8x64xf32> to vector<8xf32>
    %511 = vector.shape_cast %510 : vector<8xf32> to vector<8x1xf32>
    %cst_167 = arith.constant 6.400000e+01 : f32
    %512 = vector.broadcast %cst_167 : f32 to vector<8x1xf32>
    %513 = arith.divf %511, %512 : vector<8x1xf32>
    %cst_168 = arith.constant 9.99999974E-6 : f32
    %514 = vector.broadcast %cst_168 : f32 to vector<8x1xf32>
    %515 = arith.addf %513, %514 : vector<8x1xf32>
    %516 = math.rsqrt %515 : vector<8x1xf32>
    %517 = vector.broadcast %516 : vector<8x1xf32> to vector<8x64xf32>
    %518 = arith.mulf %508, %517 : vector<8x64xf32>
    %519 = vector.broadcast %501 : vector<1x64xf32> to vector<8x64xf32>
    %520 = arith.mulf %518, %519 : vector<8x64xf32>
    %521 = vector.broadcast %502 : vector<1x64xf32> to vector<8x64xf32>
    %522 = arith.addf %520, %521 : vector<8x64xf32>
    %c3640 = arith.constant 3640 : index
    %c0_169 = arith.constant 0 : index
    %523 = vector.load %arg1[%c3640, %c0_169] : memref<3856x256xf32, #tpu.memory_space<vmem>>, vector<64x64xf32>
    %cst_170 = arith.constant dense<0.000000e+00> : vector<8x64xf32>
    %524 = tpu.matmul %522, %523, %cst_170 {dimension_numbers = #tpu.dot_dimension_numbers<[1], [0], [0], [1], [0, 0, 1, 1], [], []>} : vector<8x64xf32>, vector<64x64xf32>, vector<8x64xf32> -> vector<8x64xf32>
    %525 = vector.extract_strided_slice %405 {offsets = [5, 0], sizes = [1, 64], strides = [1, 1]} : vector<7x64xf32> to vector<1x64xf32>
    %526 = vector.broadcast %525 : vector<1x64xf32> to vector<8x64xf32>
    %527 = arith.addf %524, %526 : vector<8x64xf32>
    %528 = arith.mulf %527, %527 : vector<8x64xf32>
    %529 = arith.mulf %527, %528 : vector<8x64xf32>
    %cst_171 = arith.constant 4.471500e-02 : f32
    %530 = vector.broadcast %cst_171 : f32 to vector<8x64xf32>
    %531 = arith.mulf %530, %529 : vector<8x64xf32>
    %532 = arith.addf %527, %531 : vector<8x64xf32>
    %cst_172 = arith.constant 0.797884583 : f32
    %533 = vector.broadcast %cst_172 : f32 to vector<8x64xf32>
    %534 = arith.mulf %533, %532 : vector<8x64xf32>
    %535 = math.tanh %534 : vector<8x64xf32>
    %cst_173 = arith.constant 1.000000e+00 : f32
    %536 = vector.broadcast %cst_173 : f32 to vector<8x64xf32>
    %537 = arith.addf %536, %535 : vector<8x64xf32>
    %cst_174 = arith.constant 5.000000e-01 : f32
    %538 = vector.broadcast %cst_174 : f32 to vector<8x64xf32>
    %539 = arith.mulf %538, %537 : vector<8x64xf32>
    %540 = arith.mulf %527, %539 : vector<8x64xf32>
    %c3704 = arith.constant 3704 : index
    %c0_175 = arith.constant 0 : index
    %541 = vector.load %arg1[%c3704, %c0_175] : memref<3856x256xf32, #tpu.memory_space<vmem>>, vector<64x64xf32>
    %cst_176 = arith.constant dense<0.000000e+00> : vector<8x64xf32>
    %542 = tpu.matmul %540, %541, %cst_176 {dimension_numbers = #tpu.dot_dimension_numbers<[1], [0], [0], [1], [0, 0, 1, 1], [], []>} : vector<8x64xf32>, vector<64x64xf32>, vector<8x64xf32> -> vector<8x64xf32>
    %543 = vector.extract_strided_slice %405 {offsets = [6, 0], sizes = [1, 64], strides = [1, 1]} : vector<7x64xf32> to vector<1x64xf32>
    %544 = vector.broadcast %543 : vector<1x64xf32> to vector<8x64xf32>
    %545 = arith.addf %542, %544 : vector<8x64xf32>
    %546 = arith.addf %500, %545 : vector<8x64xf32>
    %547 = vector.extract_strided_slice %546 {offsets = [0, 0], sizes = [4, 64], strides = [1, 1]} : vector<8x64xf32> to vector<4x64xf32>
    %cst_177 = arith.constant dense<0.000000e+00> : vector<64xf32>
    %548 = vector.multi_reduction <add>, %547, %cst_177 [0] : vector<4x64xf32> to vector<64xf32>
    %549 = vector.shape_cast %548 : vector<64xf32> to vector<1x64xf32>
    %cst_178 = arith.constant 4.000000e+00 : f32
    %550 = vector.broadcast %cst_178 : f32 to vector<1x64xf32>
    %551 = arith.divf %549, %550 : vector<1x64xf32>
    %552 = vector.extract_strided_slice %546 {offsets = [4, 0], sizes = [4, 64], strides = [1, 1]} : vector<8x64xf32> to vector<4x64xf32>
    %cst_179 = arith.constant dense<0.000000e+00> : vector<64xf32>
    %553 = vector.multi_reduction <add>, %552, %cst_179 [0] : vector<4x64xf32> to vector<64xf32>
    %554 = vector.shape_cast %553 : vector<64xf32> to vector<1x64xf32>
    %cst_180 = arith.constant 4.000000e+00 : f32
    %555 = vector.broadcast %cst_180 : f32 to vector<1x64xf32>
    %556 = arith.divf %554, %555 : vector<1x64xf32>
    %557 = tpu.concatenate %551, %556 in 0 : vector<1x64xf32>, vector<1x64xf32> -> vector<2x64xf32>
    %c3776 = arith.constant 3776 : index
    %c0_181 = arith.constant 0 : index
    %558 = vector.load %arg1[%c3776, %c0_181] : memref<3856x256xf32, #tpu.memory_space<vmem>>, vector<64x64xf32>
    %cst_182 = arith.constant dense<0.000000e+00> : vector<2x64xf32>
    %559 = tpu.matmul %557, %558, %cst_182 {dimension_numbers = #tpu.dot_dimension_numbers<[1], [0], [0], [1], [0, 0, 1, 1], [], []>} : vector<2x64xf32>, vector<64x64xf32>, vector<2x64xf32> -> vector<2x64xf32>
    %560 = vector.extract_strided_slice %11 {offsets = [4, 0], sizes = [1, 64], strides = [1, 1]} : vector<6x64xf32> to vector<1x64xf32>
    %561 = vector.broadcast %560 : vector<1x64xf32> to vector<2x64xf32>
    %562 = arith.addf %559, %561 : vector<2x64xf32>
    %c0_183 = arith.constant 0 : index
    %c0_184 = arith.constant 0 : index
    %563 = vector.load %arg2[%c0_183, %c0_184] : memref<2x64xf32, #tpu.memory_space<vmem>>, vector<2x64xf32>
    tpu.vector_store %arg2[%c0_183, %c0_184], %562 {strides = array<i32>} : memref<2x64xf32, #tpu.memory_space<vmem>>, vector<2x64xf32>,
    return
  }
}

</mosaic_0001>

<llo_original>
// kernel: _lambda_.1
$region0: #{_lambda_.1}
  #allocation0 [shape = 'u32[]', space=smem, size = 0x4, offset = 0x4, fixed_abs, tag = 'smem constant byte address 0x4 - core index']
  #allocation1 [shape = 'u32[72,128]{1,0:T(1,128)}', space=vmem, size = 0x9000, scoped, tag = 'internal scratch']
  %s0 = inlined_call_operand.vmem [shape: f32[66,64], index: 0, kind: input, shape index: {}]
  %s1 = inlined_call_operand.hbm [shape: f32[3856,256], index: 1, kind: input, shape index: {}]
  %s2 = inlined_call_operand.hbm [shape: f32[2,64], index: 2, kind: output, shape index: {}]
  %s3 = sld [smem:[#allocation0]]
  $region22: #{_lambda_.1} parent=0
    _
  %s5 = ssub.s32 1, %s3
  %s6 = scalar_select 0, %s5, %s3
  $region1: #{_lambda_.1} parent=0
    #allocation2 [shape = 'u8[3948544]{0}', space=vmem, size = 0x3c4000, scoped, tag = 'input window, operand 1, single buffered']
    #allocation3 [shape = 's32[1]{0}', space=sflag, size = 0x4, scoped, tag = 'scoped memory for _lambda_.1']
    #allocation4 [shape = 's32[1]{0}', space=sflag, size = 0x4, scoped, tag = 'scoped memory for _lambda_.1']
    #allocation5 [shape = 'u8[1024]{0}', space=vmem, size = 0x400, scoped, tag = 'output window, operand 0, single buffered']
    %7 = vsyncpa [#allocation3], 0
    %8 = vsyncpa [#allocation4], 0
    // Predicated region
    $region2: #{_lambda_.1} parent=1 // pred_check
      _
    $region3: #{_lambda_.1} parent=1 // pred_check_branch
      %10 = sbr.rel (0) target = $region5
    $region4: #{_lambda_.1} parent=1 // pred_region
      _
    $region5: #{_lambda_.1} parent=1 // pred_fallthru
      _
    // Predicated region
    $region6: #{_lambda_.1} parent=1 // pred_check
      _
    $region7: #{_lambda_.1} parent=1 // pred_check_branch
      %12 = sbr.rel (0) target = $region9
    $region8: #{_lambda_.1} parent=1 // pred_region
      %14 = vsyncadd [#allocation3], 0
      %s15 = sshll.u32 %s1, 4
      %s16 = int_to_ptr.hbm [resolvable:$true] %s15
      %s17 = sshll.u32 [#allocation2], 4
      %s18 = int_to_ptr.vmem [resolvable:$true] %s17
      %23 = dma.hbm_to_vmem [thread:$0]  %s16, 123392, %s18, [#allocation3], 256, 256, 16
    $region9: #{_lambda_.1} parent=1 // pred_fallthru
      _
    // Predicated region
    $region10: #{_lambda_.1} parent=1 // pred_check
      _
    $region11: #{_lambda_.1} parent=1 // pred_check_branch
      %25 = sbr.rel (0) target = $region13
    $region12: #{_lambda_.1} parent=1 // pred_region
      %27 = dma.done [#allocation3], 123392
    $region13: #{_lambda_.1} parent=1 // pred_fallthru
      _
    %v28 = vld [vmem:[%s0] sm:$0xff]
    %v29 = vld [vmem:[%s0 + $0x8] sm:$0xff]
    %v30 = vld [vmem:[%s0 + $0x10] sm:$0xff]
    %v31 = vld [vmem:[%s0 + $0x18] sm:$0xff]
    %v32 = vld [vmem:[%s0 + $0x20] sm:$0xff]
    %v33 = vld [vmem:[%s0 + $0x28] sm:$0xff]
    %v34 = vld [vmem:[%s0 + $0x30] sm:$0xff]
    %v35 = vld [vmem:[%s0 + $0x38] sm:$0xff]
    %v36 = vld [vmem:[%s0 + $0x40] sm:$0x3]
    %v37 = vld [vmem:[#allocation2] sm:$0xff]
    %v38 = vld [vmem:[#allocation2 + $0x10] sm:$0xff]
    %v39 = vld [vmem:[#allocation2 + $0x20] sm:$0xff]
    %v40 = vld [vmem:[#allocation2 + $0x30] sm:$0xff]
    %v41 = vld [vmem:[#allocation2 + $0x40] sm:$0xff]
    %v42 = vld [vmem:[#allocation2 + $0x50] sm:$0xff]
    %v43 = vld [vmem:[#allocation2 + $0x60] sm:$0xff]
    %v44 = vld [vmem:[#allocation2 + $0x70] sm:$0xff]
    %vm45 = vcmask 523264
    %v47 = vsel %vm45, %v28, 0
    %v50 = vsel %vm45, %v29, 0
    %v53 = vsel %vm45, %v30, 0
    %v56 = vsel %vm45, %v31, 0
    %v59 = vsel %vm45, %v32, 0
    %v62 = vsel %vm45, %v33, 0
    %v65 = vsel %vm45, %v34, 0
    %v68 = vsel %vm45, %v35, 0
    %v71 = vsel %vm45, %v36, 0
    %73 = vmatpush.msra.mxu0 0.0
    %74 = vmatpush.msra.mxu0 0.0
    %75 = vmatpush.msra.mxu0 0.0
    %76 = vmatpush.msra.mxu0 0.0
    %77 = vmatpush.msra.mxu0 0.0
    %78 = vmatpush.msra.mxu0 0.0
    %79 = vmatpush.msra.mxu0 0.0
    %80 = vmatpush.msra.mxu0 0.0
    %81 = vmatpush.msra.mxu0 %v44
    %82 = vmatpush.msra.mxu0 %v43
    %83 = vmatpush.msra.mxu0 %v42
    %84 = vmatpush.msra.mxu0 %v41
    %85 = vmatpush.msra.mxu0 %v40
    %86 = vmatpush.msra.mxu0 %v39
    %87 = vmatpush.msra.mxu0 %v38
    %88 = vmatpush.msra.mxu0 %v37
    %89 = vmatmul.f32.gmra.mxu0 %v47
    %v90 = vpop.f32.mrf.mxu0
    %v91 = vadd.f32 0.0, %v90
    %92 = vmatmul.f32.gmra.mxu0 %v50
    %v93 = vpop.f32.mrf.mxu0
    %v94 = vadd.f32 0.0, %v93
    %95 = vmatmul.f32.gmra.mxu0 %v53
    %v96 = vpop.f32.mrf.mxu0
    %v97 = vadd.f32 0.0, %v96
    %98 = vmatmul.f32.gmra.mxu0 %v56
    %v99 = vpop.f32.mrf.mxu0
    %v100 = vadd.f32 0.0, %v99
    %101 = vmatmul.f32.gmra.mxu0 %v59
    %v102 = vpop.f32.mrf.mxu0
    %v103 = vadd.f32 0.0, %v102
    %104 = vmatmul.f32.gmra.mxu0 %v62
    %v105 = vpop.f32.mrf.mxu0
    %v106 = vadd.f32 0.0, %v105
    %107 = vmatmul.f32.gmra.mxu0 %v65
    %v108 = vpop.f32.mrf.mxu0
    %v109 = vadd.f32 0.0, %v108
    %110 = vmatmul.f32.gmra.mxu0 %v68
    %v111 = vpop.f32.mrf.mxu0
    %v112 = vadd.f32 0.0, %v111
    %113 = vmatmul.f32.gmra.mxu0 %v71
    %v114 = vpop.f32.mrf.mxu0
    %v115 = vadd.f32 0.0, %v114
    %116 = vdwg.mxu0
    %v117 = vmul.f32 %v91, %v91
    %v118 = vmul.f32 %v94, %v94
    %v119 = vmul.f32 %v97, %v97
    %v120 = vmul.f32 %v100, %v100
    %v121 = vmul.f32 %v103, %v103
    %v122 = vmul.f32 %v106, %v106
    %v123 = vmul.f32 %v109, %v109
    %v124 = vmul.f32 %v112, %v112
    %v125 = vmul.f32 %v115, %v115
    %v126 = vld [vmem:[#allocation2 + $0x80] sm:$0xff]
    %v127 = vld [vmem:[#allocation2 + $0x90] sm:$0xff]
    %v128 = vld [vmem:[#allocation2 + $0xa0] sm:$0xff]
    %v129 = vld [vmem:[#allocation2 + $0xb0] sm:$0xff]
    %v130 = vld [vmem:[#allocation2 + $0xc0] sm:$0xff]
    %v131 = vld [vmem:[#allocation2 + $0xd0] sm:$0xff]
    %v132 = vld [vmem:[#allocation2 + $0xe0] sm:$0xff]
    %v133 = vld [vmem:[#allocation2 + $0xf0] sm:$0xff]
    %v134 = vld [vmem:[#allocation2 + $0x100] sm:$0x3]
    %vm135 = vcmask 539648
    %v137 = vsel %vm135, %v117, 0
    %v140 = vsel %vm135, %v118, 0
    %v143 = vsel %vm135, %v119, 0
    %v146 = vsel %vm135, %v120, 0
    %v149 = vsel %vm135, %v121, 0
    %v152 = vsel %vm135, %v122, 0
    %v155 = vsel %vm135, %v123, 0
    %v158 = vsel %vm135, %v124, 0
    %v161 = vsel %vm135, %v125, 0
    %vm163 = vcmask 1041408
    %v165 = vsel %vm163, %v134, 0
    %167 = vmatpush.msra.mxu0 0.0
    %168 = vmatpush.msra.mxu0 0.0
    %169 = vmatpush.msra.mxu0 0.0
    %170 = vmatpush.msra.mxu0 0.0
    %171 = vmatpush.msra.mxu0 0.0
    %172 = vmatpush.msra.mxu0 0.0
    %173 = vmatpush.msra.mxu0 0.0
    %174 = vmatpush.msra.mxu0 %v165
    %175 = vmatpush.msra.mxu0 %v133
    %176 = vmatpush.msra.mxu0 %v132
    %177 = vmatpush.msra.mxu0 %v131
    %178 = vmatpush.msra.mxu0 %v130
    %179 = vmatpush.msra.mxu0 %v129
    %180 = vmatpush.msra.mxu0 %v128
    %181 = vmatpush.msra.mxu0 %v127
    %182 = vmatpush.msra.mxu0 %v126
    %183 = vmatmul.f32.gmra.mxu0 %v137
    %v184 = vpop.f32.mrf.mxu0
    %v185 = vadd.f32 0.0, %v184
    %186 = vmatmul.f32.gmra.mxu0 %v140
    %v187 = vpop.f32.mrf.mxu0
    %v188 = vadd.f32 0.0, %v187
    %189 = vmatmul.f32.gmra.mxu0 %v143
    %v190 = vpop.f32.mrf.mxu0
    %v191 = vadd.f32 0.0, %v190
    %192 = vmatmul.f32.gmra.mxu0 %v146
    %v193 = vpop.f32.mrf.mxu0
    %v194 = vadd.f32 0.0, %v193
    %195 = vmatmul.f32.gmra.mxu0 %v149
    %v196 = vpop.f32.mrf.mxu0
    %v197 = vadd.f32 0.0, %v196
    %198 = vmatmul.f32.gmra.mxu0 %v152
    %v199 = vpop.f32.mrf.mxu0
    %v200 = vadd.f32 0.0, %v199
    %201 = vmatmul.f32.gmra.mxu0 %v155
    %v202 = vpop.f32.mrf.mxu0
    %v203 = vadd.f32 0.0, %v202
    %204 = vmatmul.f32.gmra.mxu0 %v158
    %v205 = vpop.f32.mrf.mxu0
    %v206 = vadd.f32 0.0, %v205
    %207 = vmatmul.f32.gmra.mxu0 %v161
    %v208 = vpop.f32.mrf.mxu0
    %v209 = vadd.f32 0.0, %v208
    %210 = vdwg.mxu0
    %v211 = vmax.f32 %v185, 1e-10
    %v212 = vmax.f32 %v188, 1e-10
    %v213 = vmax.f32 %v191, 1e-10
    %v214 = vmax.f32 %v194, 1e-10
    %v215 = vmax.f32 %v197, 1e-10
    %v216 = vmax.f32 %v200, 1e-10
    %v217 = vmax.f32 %v203, 1e-10
    %v218 = vmax.f32 %v206, 1e-10
    %v219 = vmax.f32 %v209, 1e-10
    %v220 = vlog2.pop %v211
    %v221 = vmul.f32 %v220, 0.6931472
    %v222 = vlog2.pop %v212
    %v223 = vmul.f32 %v222, 0.6931472
    %v224 = vlog2.pop %v213
    %v225 = vmul.f32 %v224, 0.6931472
    %v226 = vlog2.pop %v214
    %v227 = vmul.f32 %v226, 0.6931472
    %v228 = vlog2.pop %v215
    %v229 = vmul.f32 %v228, 0.6931472
    %v230 = vlog2.pop %v216
    %v231 = vmul.f32 %v230, 0.6931472
    %v232 = vlog2.pop %v217
    %v233 = vmul.f32 %v232, 0.6931472
    %v234 = vlog2.pop %v218
    %v235 = vmul.f32 %v234, 0.6931472
    %v236 = vlog2.pop %v219
    %v237 = vmul.f32 %v236, 0.6931472
    %v238 = vmul.f32 %v221, 4.3429446
    %v239 = vmul.f32 %v223, 4.3429446
    %v240 = vmul.f32 %v225, 4.3429446
    %v241 = vmul.f32 %v227, 4.3429446
    %v242 = vmul.f32 %v229, 4.3429446
    %v243 = vmul.f32 %v231, 4.3429446
    %v244 = vmul.f32 %v233, 4.3429446
    %v245 = vmul.f32 %v235, 4.3429446
    %v246 = vmul.f32 %v237, 4.3429446
    %v247 = vld [vmem:[#allocation2 + $0x1e00] sm:$0x3f]
    %v249 = vrot.slane %v247, 5
    %s250 = vtos %v249
    %v251 = vstv %s250
    %v253 = vmul.f32 %v238, %v251
    %v254 = vmul.f32 %v239, %v251
    %v255 = vmul.f32 %v240, %v251
    %v256 = vmul.f32 %v241, %v251
    %v257 = vmul.f32 %v242, %v251
    %v258 = vmul.f32 %v243, %v251
    %v259 = vmul.f32 %v244, %v251
    %v260 = vmul.f32 %v245, %v251
    %v261 = vmul.f32 %v246, %v251
    %262 = vrot.lane.b32.xlu0 %v249, 127
    %v263 = vpop.permute.xlu0 %262
    %s264 = vtos %v263
    %v265 = vstv %s264
    %v267 = vadd.f32 %v253, %v265
    %v268 = vadd.f32 %v254, %v265
    %v269 = vadd.f32 %v255, %v265
    %v270 = vadd.f32 %v256, %v265
    %v271 = vadd.f32 %v257, %v265
    %v272 = vadd.f32 %v258, %v265
    %v273 = vadd.f32 %v259, %v265
    %v274 = vadd.f32 %v260, %v265
    %v275 = vadd.f32 %v261, %v265
    %v276 = vld [vmem:[#allocation2 + $0x890] sm:$0x7]
    %v277 = vld [vmem:[#allocation2 + $0x898] sm:$0x7]
    %vm287 = vcmask 1040384
    %v288 = vrot.slane %v267, 7
    %v289 = vrot.slane %v268, 7
    %v290 = vsel %vm287, %v288, %v289
    %v291 = vrot.slane %v269, 7
    %v292 = vsel %vm287, %v289, %v291
    %v293 = vrot.slane %v270, 7
    %v294 = vsel %vm287, %v291, %v293
    %v295 = vrot.slane %v271, 7
    %v296 = vsel %vm287, %v293, %v295
    %v297 = vrot.slane %v272, 7
    %v298 = vsel %vm287, %v295, %v297
    %v299 = vrot.slane %v273, 7
    %v300 = vsel %vm287, %v297, %v299
    %v301 = vrot.slane %v274, 7
    %v302 = vsel %vm287, %v299, %v301
    %v303 = vrot.slane %v275, 7
    %v304 = vsel %vm287, %v301, %v303
    %v314 = vsel %vm287, 0.0, %v288
    %vm315 = vcmask 1042432
    %v316 = vsel %vm315, %v304, 0.0
    %v317 = vlaneseq
    %v318 = vshrl.u32 %v317, 7
    %v319 = vadd.s32 %v318, 8
    %v320 = vadd.s32 %v318, 16
    %v321 = vadd.s32 %v318, 24
    %v322 = vadd.s32 %v318, 32
    %v323 = vadd.s32 %v318, 40
    %v324 = vadd.s32 %v318, 48
    %v325 = vadd.s32 %v318, 56
    %v326 = vadd.s32 %v318, 64
    %vm327 = vcmp.eq.s32.totalorder %v318, 0
    %vm328 = vcmp.eq.s32.totalorder %v319, 0
    %vm329 = vcmp.eq.s32.totalorder %v320, 0
    %vm330 = vcmp.eq.s32.totalorder %v321, 0
    %vm331 = vcmp.eq.s32.totalorder %v322, 0
    %vm332 = vcmp.eq.s32.totalorder %v323, 0
    %vm333 = vcmp.eq.s32.totalorder %v324, 0
    %vm334 = vcmp.eq.s32.totalorder %v325, 0
    %vm335 = vcmp.eq.s32.totalorder %v326, 0
    %vm336 = vcmp.eq.s32.totalorder %v318, 32
    %vm337 = vcmp.eq.s32.totalorder %v319, 32
    %vm338 = vcmp.eq.s32.totalorder %v320, 32
    %vm339 = vcmp.eq.s32.totalorder %v321, 32
    %vm340 = vcmp.eq.s32.totalorder %v322, 32
    %vm341 = vcmp.eq.s32.totalorder %v323, 32
    %vm342 = vcmp.eq.s32.totalorder %v324, 32
    %vm343 = vcmp.eq.s32.totalorder %v325, 32
    %vm344 = vcmp.eq.s32.totalorder %v326, 32
    %vm345 = vcmp.eq.s32.totalorder %v318, 33
    %vm346 = vcmp.eq.s32.totalorder %v319, 33
    %vm347 = vcmp.eq.s32.totalorder %v320, 33
    %vm348 = vcmp.eq.s32.totalorder %v321, 33
    %vm349 = vcmp.eq.s32.totalorder %v322, 33
    %vm350 = vcmp.eq.s32.totalorder %v323, 33
    %vm351 = vcmp.eq.s32.totalorder %v324, 33
    %vm352 = vcmp.eq.s32.totalorder %v325, 33
    %vm353 = vcmp.eq.s32.totalorder %v326, 33
    %vm354 = vmor %vm327, %vm345
    %vm355 = vmor %vm328, %vm346
    %vm356 = vmor %vm329, %vm347
    %vm357 = vmor %vm330, %vm348
    %vm358 = vmor %vm331, %vm349
    %vm359 = vmor %vm332, %vm350
    %vm360 = vmor %vm333, %vm351
    %vm361 = vmor %vm334, %vm352
    %vm362 = vmor %vm335, %vm353
    %vm363 = vcmp.eq.s32.totalorder %v318, 65
    %vm364 = vcmp.eq.s32.totalorder %v319, 65
    %vm365 = vcmp.eq.s32.totalorder %v320, 65
    %vm366 = vcmp.eq.s32.totalorder %v321, 65
    %vm367 = vcmp.eq.s32.totalorder %v322, 65
    %vm368 = vcmp.eq.s32.totalorder %v323, 65
    %vm369 = vcmp.eq.s32.totalorder %v324, 65
    %vm370 = vcmp.eq.s32.totalorder %v325, 65
    %vm371 = vcmp.eq.s32.totalorder %v326, 65
    %vm372 = vmor %vm336, %vm363
    %vm373 = vmor %vm337, %vm364
    %vm374 = vmor %vm338, %vm365
    %vm375 = vmor %vm339, %vm366
    %vm376 = vmor %vm340, %vm367
    %vm377 = vmor %vm341, %vm368
    %vm378 = vmor %vm342, %vm369
    %vm379 = vmor %vm343, %vm370
    %vm380 = vmor %vm344, %vm371
    %v381 = vsel %vm354, 0.0, 1.0
    %v382 = vsel %vm355, 0.0, 1.0
    %v383 = vsel %vm356, 0.0, 1.0
    %v384 = vsel %vm357, 0.0, 1.0
    %v385 = vsel %vm358, 0.0, 1.0
    %v386 = vsel %vm359, 0.0, 1.0
    %v387 = vsel %vm360, 0.0, 1.0
    %v388 = vsel %vm361, 0.0, 1.0
    %v389 = vsel %vm362, 0.0, 1.0
    %v390 = vmul.f32 %v314, %v381
    %v391 = vmul.f32 %v290, %v382
    %v392 = vmul.f32 %v292, %v383
    %v393 = vmul.f32 %v294, %v384
    %v394 = vmul.f32 %v296, %v385
    %v395 = vmul.f32 %v298, %v386
    %v396 = vmul.f32 %v300, %v387
    %v397 = vmul.f32 %v302, %v388
    %v398 = vmul.f32 %v316, %v389
    %v399 = vsel %vm372, 0.0, 1.0
    %v400 = vsel %vm373, 0.0, 1.0
    %v401 = vsel %vm374, 0.0, 1.0
    %v402 = vsel %vm375, 0.0, 1.0
    %v403 = vsel %vm376, 0.0, 1.0
    %v404 = vsel %vm377, 0.0, 1.0
    %v405 = vsel %vm378, 0.0, 1.0
    %v406 = vsel %vm379, 0.0, 1.0
    %v407 = vsel %vm380, 0.0, 1.0
    %v417 = vrot.slane %v399, 6
    %v418 = vrot.slane %v400, 6
    %v419 = vsel %vm163, %v417, %v418
    %v420 = vrot.slane %v401, 6
    %v421 = vsel %vm163, %v418, %v420
    %v422 = vrot.slane %v402, 6
    %v423 = vsel %vm163, %v420, %v422
    %v424 = vrot.slane %v403, 6
    %v425 = vsel %vm163, %v422, %v424
    %v426 = vrot.slane %v404, 6
    %v427 = vsel %vm163, %v424, %v426
    %v428 = vrot.slane %v405, 6
    %v429 = vsel %vm163, %v426, %v428
    %v430 = vrot.slane %v406, 6
    %v431 = vsel %vm163, %v428, %v430
    %v432 = vrot.slane %v407, 6
    %v433 = vsel %vm163, %v430, %v432
    %v443 = vmul.f32 %v314, %v417
    %v444 = vmul.f32 %v290, %v419
    %v445 = vmul.f32 %v292, %v421
    %v446 = vmul.f32 %v294, %v423
    %v447 = vmul.f32 %v296, %v425
    %v448 = vmul.f32 %v298, %v427
    %v449 = vmul.f32 %v300, %v429
    %v450 = vmul.f32 %v302, %v431
    %v451 = vmul.f32 %v316, %v433
    %452 = vrot.lane.b32.xlu0 %v267, 32
    %v453 = vpop.permute.xlu0 %452
    %454 = vrot.lane.b32.xlu0 %v268, 32
    %v455 = vpop.permute.xlu0 %454
    %456 = vrot.lane.b32.xlu0 %v269, 32
    %v457 = vpop.permute.xlu0 %456
    %458 = vrot.lane.b32.xlu0 %v270, 32
    %v459 = vpop.permute.xlu0 %458
    %460 = vrot.lane.b32.xlu0 %v271, 32
    %v461 = vpop.permute.xlu0 %460
    %462 = vrot.lane.b32.xlu0 %v272, 32
    %v463 = vpop.permute.xlu0 %462
    %464 = vrot.lane.b32.xlu0 %v273, 32
    %v465 = vpop.permute.xlu0 %464
    %466 = vrot.lane.b32.xlu0 %v274, 32
    %v467 = vpop.permute.xlu0 %466
    %468 = vrot.lane.b32.xlu0 %v275, 32
    %v469 = vpop.permute.xlu0 %468
    %vm488 = vcmask 1045504
    %v489 = vrot.slane %v443, 2
    %v490 = vrot.slane %v444, 2
    %v491 = vsel %vm488, %v489, %v490
    %v492 = vrot.slane %v445, 2
    %v493 = vsel %vm488, %v490, %v492
    %v494 = vrot.slane %v446, 2
    %v495 = vsel %vm488, %v492, %v494
    %v496 = vrot.slane %v447, 2
    %v497 = vsel %vm488, %v494, %v496
    %v498 = vrot.slane %v448, 2
    %v499 = vsel %vm488, %v496, %v498
    %v500 = vrot.slane %v449, 2
    %v501 = vsel %vm488, %v498, %v500
    %v502 = vrot.slane %v450, 2
    %v503 = vsel %vm488, %v500, %v502
    %v504 = vrot.slane %v451, 2
    %v505 = vsel %vm488, %v502, %v504
    %506 = vrot.lane.b32.xlu0 %v491, 64
    %v507 = vpop.permute.xlu0 %506
    %508 = vrot.lane.b32.xlu0 %v493, 64
    %v509 = vpop.permute.xlu0 %508
    %510 = vrot.lane.b32.xlu0 %v495, 64
    %v511 = vpop.permute.xlu0 %510
    %512 = vrot.lane.b32.xlu0 %v497, 64
    %v513 = vpop.permute.xlu0 %512
    %514 = vrot.lane.b32.xlu0 %v499, 64
    %v515 = vpop.permute.xlu0 %514
    %516 = vrot.lane.b32.xlu0 %v501, 64
    %v517 = vpop.permute.xlu0 %516
    %518 = vrot.lane.b32.xlu0 %v503, 64
    %v519 = vpop.permute.xlu0 %518
    %520 = vrot.lane.b32.xlu0 %v505, 64
    %v521 = vpop.permute.xlu0 %520
    %522 = vrot.lane.b32.xlu0 %v504, 64
    %v523 = vpop.permute.xlu0 %522
    %vm533 = vcmask 261120
    %v534 = vsel %vm533, %v390, %v453
    %v535 = vsel %vm533, %v391, %v455
    %v536 = vsel %vm533, %v392, %v457
    %v537 = vsel %vm533, %v393, %v459
    %v538 = vsel %vm533, %v394, %v461
    %v539 = vsel %vm533, %v395, %v463
    %v540 = vsel %vm533, %v396, %v465
    %v541 = vsel %vm533, %v397, %v467
    %v542 = vsel %vm533, %v398, %v469
    %v543 = vsel %vm45, %v534, %v507
    %v544 = vsel %vm45, %v535, %v509
    %v545 = vsel %vm45, %v536, %v511
    %v546 = vsel %vm45, %v537, %v513
    %v547 = vsel %vm45, %v538, %v515
    %v548 = vsel %vm45, %v539, %v517
    %v549 = vsel %vm45, %v540, %v519
    %v550 = vsel %vm45, %v541, %v521
    %v551 = vsel %vm45, %v542, %v523
    %v552 = vld [vmem:[#allocation2 + $0x110] sm:$0xff]
    %v553 = vld [vmem:[#allocation2 + $0x118] sm:$0xff]
    %v554 = vld [vmem:[#allocation2 + $0x120] sm:$0xff]
    %v555 = vld [vmem:[#allocation2 + $0x128] sm:$0xff]
    %v556 = vld [vmem:[#allocation2 + $0x130] sm:$0xff]
    %v557 = vld [vmem:[#allocation2 + $0x138] sm:$0xff]
    %v558 = vld [vmem:[#allocation2 + $0x140] sm:$0xff]
    %v559 = vld [vmem:[#allocation2 + $0x148] sm:$0xff]
    %v560 = vld [vmem:[#allocation2 + $0x150] sm:$0xff]
    %v561 = vld [vmem:[#allocation2 + $0x158] sm:$0xff]
    %v562 = vld [vmem:[#allocation2 + $0x160] sm:$0xff]
    %v563 = vld [vmem:[#allocation2 + $0x168] sm:$0xff]
    %v564 = vld [vmem:[#allocation2 + $0x170] sm:$0xff]
    %v565 = vld [vmem:[#allocation2 + $0x178] sm:$0xff]
    %v566 = vld [vmem:[#allocation2 + $0x180] sm:$0xff]
    %v567 = vld [vmem:[#allocation2 + $0x188] sm:$0xff]
    %v568 = vld [vmem:[#allocation2 + $0x190] sm:$0xff]
    %v569 = vld [vmem:[#allocation2 + $0x198] sm:$0xff]
    %v570 = vld [vmem:[#allocation2 + $0x1a0] sm:$0xff]
    %v571 = vld [vmem:[#allocation2 + $0x1a8] sm:$0xff]
    %v572 = vld [vmem:[#allocation2 + $0x1b0] sm:$0xff]
    %v573 = vld [vmem:[#allocation2 + $0x1b8] sm:$0xff]
    %v574 = vld [vmem:[#allocation2 + $0x1c0] sm:$0xff]
    %v575 = vld [vmem:[#allocation2 + $0x1c8] sm:$0xff]
    %v576 = vperm.slane %v276, 0
    %v577 = vperm.slane %v277, 0
    %vm578 = vcmask 785408
    %v580 = vsel %vm578, %v543, 0
    %v583 = vsel %vm578, %v544, 0
    %v586 = vsel %vm578, %v545, 0
    %v589 = vsel %vm578, %v546, 0
    %v592 = vsel %vm578, %v547, 0
    %v595 = vsel %vm578, %v548, 0
    %v598 = vsel %vm578, %v549, 0
    %v601 = vsel %vm578, %v550, 0
    %v604 = vsel %vm578, %v551, 0
    %606 = vmatpush.msra.mxu0 0.0
    %607 = vmatpush.msra.mxu0 0.0
    %608 = vmatpush.msra.mxu0 0.0
    %609 = vmatpush.msra.mxu0 0.0
    %610 = vmatpush.msra.mxu0 %v574
    %611 = vmatpush.msra.mxu0 %v572
    %612 = vmatpush.msra.mxu0 %v570
    %613 = vmatpush.msra.mxu0 %v568
    %614 = vmatpush.msra.mxu0 %v566
    %615 = vmatpush.msra.mxu0 %v564
    %616 = vmatpush.msra.mxu0 %v562
    %617 = vmatpush.msra.mxu0 %v560
    %618 = vmatpush.msra.mxu0 %v558
    %619 = vmatpush.msra.mxu0 %v556
    %620 = vmatpush.msra.mxu0 %v554
    %621 = vmatpush.msra.mxu0 %v552
    %622 = vmatmul.f32.gmra.mxu0 %v580
    %v623 = vpop.f32.mrf.mxu0
    %v624 = vadd.f32 %v576, %v623
    %625 = vmatmul.f32.gmra.mxu0 %v583
    %v626 = vpop.f32.mrf.mxu0
    %v627 = vadd.f32 %v576, %v626
    %628 = vmatmul.f32.gmra.mxu0 %v586
    %v629 = vpop.f32.mrf.mxu0
    %v630 = vadd.f32 %v576, %v629
    %631 = vmatmul.f32.gmra.mxu0 %v589
    %v632 = vpop.f32.mrf.mxu0
    %v633 = vadd.f32 %v576, %v632
    %634 = vmatmul.f32.gmra.mxu0 %v592
    %v635 = vpop.f32.mrf.mxu0
    %v636 = vadd.f32 %v576, %v635
    %637 = vmatmul.f32.gmra.mxu0 %v595
    %v638 = vpop.f32.mrf.mxu0
    %v639 = vadd.f32 %v576, %v638
    %640 = vmatmul.f32.gmra.mxu0 %v598
    %v641 = vpop.f32.mrf.mxu0
    %v642 = vadd.f32 %v576, %v641
    %643 = vmatmul.f32.gmra.mxu0 %v601
    %v644 = vpop.f32.mrf.mxu0
    %v645 = vadd.f32 %v576, %v644
    %646 = vmatmul.f32.gmra.mxu0 %v604
    %v647 = vpop.f32.mrf.mxu0
    %v648 = vadd.f32 %v576, %v647
    %649 = vdwg.mxu0
    %650 = vmatpush.msra.mxu0 0.0
    %651 = vmatpush.msra.mxu0 0.0
    %652 = vmatpush.msra.mxu0 0.0
    %653 = vmatpush.msra.mxu0 0.0
    %654 = vmatpush.msra.mxu0 %v575
    %655 = vmatpush.msra.mxu0 %v573
    %656 = vmatpush.msra.mxu0 %v571
    %657 = vmatpush.msra.mxu0 %v569
    %658 = vmatpush.msra.mxu0 %v567
    %659 = vmatpush.msra.mxu0 %v565
    %660 = vmatpush.msra.mxu0 %v563
    %661 = vmatpush.msra.mxu0 %v561
    %662 = vmatpush.msra.mxu0 %v559
    %663 = vmatpush.msra.mxu0 %v557
    %664 = vmatpush.msra.mxu0 %v555
    %665 = vmatpush.msra.mxu0 %v553
    %666 = vmatmul.f32.gmra.mxu0 %v580
    %v667 = vpop.f32.mrf.mxu0
    %v668 = vadd.f32 %v577, %v667
    %669 = vmatmul.f32.gmra.mxu0 %v583
    %v670 = vpop.f32.mrf.mxu0
    %v671 = vadd.f32 %v577, %v670
    %672 = vmatmul.f32.gmra.mxu0 %v586
    %v673 = vpop.f32.mrf.mxu0
    %v674 = vadd.f32 %v577, %v673
    %675 = vmatmul.f32.gmra.mxu0 %v589
    %v676 = vpop.f32.mrf.mxu0
    %v677 = vadd.f32 %v577, %v676
    %678 = vmatmul.f32.gmra.mxu0 %v592
    %v679 = vpop.f32.mrf.mxu0
    %v680 = vadd.f32 %v577, %v679
    %681 = vmatmul.f32.gmra.mxu0 %v595
    %v682 = vpop.f32.mrf.mxu0
    %v683 = vadd.f32 %v577, %v682
    %684 = vmatmul.f32.gmra.mxu0 %v598
    %v685 = vpop.f32.mrf.mxu0
    %v686 = vadd.f32 %v577, %v685
    %687 = vmatmul.f32.gmra.mxu0 %v601
    %v688 = vpop.f32.mrf.mxu0
    %v689 = vadd.f32 %v577, %v688
    %690 = vmatmul.f32.gmra.mxu0 %v604
    %v691 = vpop.f32.mrf.mxu0
    %v692 = vadd.f32 %v577, %v691
    %693 = vdwg.mxu0
    %v694 = vmax.f32 %v624, 0.0
    %v695 = vmax.f32 %v668, 0.0
    %v696 = vmax.f32 %v627, 0.0
    %v697 = vmax.f32 %v671, 0.0
    %v698 = vmax.f32 %v630, 0.0
    %v699 = vmax.f32 %v674, 0.0
    %v700 = vmax.f32 %v633, 0.0
    %v701 = vmax.f32 %v677, 0.0
    %v702 = vmax.f32 %v636, 0.0
    %v703 = vmax.f32 %v680, 0.0
    %v704 = vmax.f32 %v639, 0.0
    %v705 = vmax.f32 %v683, 0.0
    %v706 = vmax.f32 %v642, 0.0
    %v707 = vmax.f32 %v686, 0.0
    %v708 = vmax.f32 %v645, 0.0
    %v709 = vmax.f32 %v689, 0.0
    %v710 = vmax.f32 %v648, 0.0
    %v711 = vmax.f32 %v692, 0.0
    %v712 = vld [vmem:[#allocation2 + $0x7d0] sm:$0xff]
    %v713 = vld [vmem:[#allocation2 + $0x7d8] sm:$0xff]
    %v714 = vld [vmem:[#allocation2 + $0x7e0] sm:$0xff]
    %v715 = vld [vmem:[#allocation2 + $0x7e8] sm:$0xff]
    %v716 = vld [vmem:[#allocation2 + $0x7f0] sm:$0xff]
    %v717 = vld [vmem:[#allocation2 + $0x7f8] sm:$0xff]
    %v718 = vld [vmem:[#allocation2 + $0x800] sm:$0xff]
    %v719 = vld [vmem:[#allocation2 + $0x808] sm:$0xff]
    %v720 = vld [vmem:[#allocation2 + $0x810] sm:$0xff]
    %v721 = vld [vmem:[#allocation2 + $0x818] sm:$0xff]
    %v722 = vld [vmem:[#allocation2 + $0x820] sm:$0xff]
    %v723 = vld [vmem:[#allocation2 + $0x828] sm:$0xff]
    %v724 = vld [vmem:[#allocation2 + $0x830] sm:$0xff]
    %v725 = vld [vmem:[#allocation2 + $0x838] sm:$0xff]
    %v726 = vld [vmem:[#allocation2 + $0x840] sm:$0xff]
    %v727 = vld [vmem:[#allocation2 + $0x848] sm:$0xff]
    %v728 = vld [vmem:[#allocation2 + $0x850] sm:$0xff]
    %v729 = vld [vmem:[#allocation2 + $0x858] sm:$0xff]
    %v730 = vld [vmem:[#allocation2 + $0x860] sm:$0xff]
    %v731 = vld [vmem:[#allocation2 + $0x868] sm:$0xff]
    %v732 = vld [vmem:[#allocation2 + $0x870] sm:$0xff]
    %v733 = vld [vmem:[#allocation2 + $0x878] sm:$0xff]
    %v734 = vld [vmem:[#allocation2 + $0x880] sm:$0xff]
    %v735 = vld [vmem:[#allocation2 + $0x888] sm:$0xff]
    %v736 = vperm.slane %v276, 2
    %v737 = vperm.slane %v277, 2
    %738 = vmatpush.msra.mxu0 0.0
    %739 = vmatpush.msra.mxu0 0.0
    %740 = vmatpush.msra.mxu0 0.0
    %741 = vmatpush.msra.mxu0 0.0
    %742 = vmatpush.msra.mxu0 %v734
    %743 = vmatpush.msra.mxu0 %v732
    %744 = vmatpush.msra.mxu0 %v730
    %745 = vmatpush.msra.mxu0 %v728
    %746 = vmatpush.msra.mxu0 %v726
    %747 = vmatpush.msra.mxu0 %v724
    %748 = vmatpush.msra.mxu0 %v722
    %749 = vmatpush.msra.mxu0 %v720
    %750 = vmatpush.msra.mxu0 %v718
    %751 = vmatpush.msra.mxu0 %v716
    %752 = vmatpush.msra.mxu0 %v714
    %753 = vmatpush.msra.mxu0 %v712
    %754 = vmatmul.f32.gmra.mxu0 %v580
    %v755 = vpop.f32.mrf.mxu0
    %v756 = vadd.f32 %v736, %v755
    %757 = vmatmul.f32.gmra.mxu0 %v583
    %v758 = vpop.f32.mrf.mxu0
    %v759 = vadd.f32 %v736, %v758
    %760 = vmatmul.f32.gmra.mxu0 %v586
    %v761 = vpop.f32.mrf.mxu0
    %v762 = vadd.f32 %v736, %v761
    %763 = vmatmul.f32.gmra.mxu0 %v589
    %v764 = vpop.f32.mrf.mxu0
    %v765 = vadd.f32 %v736, %v764
    %766 = vmatmul.f32.gmra.mxu0 %v592
    %v767 = vpop.f32.mrf.mxu0
    %v768 = vadd.f32 %v736, %v767
    %769 = vmatmul.f32.gmra.mxu0 %v595
    %v770 = vpop.f32.mrf.mxu0
    %v771 = vadd.f32 %v736, %v770
    %772 = vmatmul.f32.gmra.mxu0 %v598
    %v773 = vpop.f32.mrf.mxu0
    %v774 = vadd.f32 %v736, %v773
    %775 = vmatmul.f32.gmra.mxu0 %v601
    %v776 = vpop.f32.mrf.mxu0
    %v777 = vadd.f32 %v736, %v776
    %778 = vmatmul.f32.gmra.mxu0 %v604
    %v779 = vpop.f32.mrf.mxu0
    %v780 = vadd.f32 %v736, %v779
    %781 = vdwg.mxu0
    %782 = vmatpush.msra.mxu0 0.0
    %783 = vmatpush.msra.mxu0 0.0
    %784 = vmatpush.msra.mxu0 0.0
    %785 = vmatpush.msra.mxu0 0.0
    %786 = vmatpush.msra.mxu0 %v735
    %787 = vmatpush.msra.mxu0 %v733
    %788 = vmatpush.msra.mxu0 %v731
    %789 = vmatpush.msra.mxu0 %v729
    %790 = vmatpush.msra.mxu0 %v727
    %791 = vmatpush.msra.mxu0 %v725
    %792 = vmatpush.msra.mxu0 %v723
    %793 = vmatpush.msra.mxu0 %v721
    %794 = vmatpush.msra.mxu0 %v719
    %795 = vmatpush.msra.mxu0 %v717
    %796 = vmatpush.msra.mxu0 %v715
    %797 = vmatpush.msra.mxu0 %v713
    %798 = vmatmul.f32.gmra.mxu0 %v580
    %v799 = vpop.f32.mrf.mxu0
    %v800 = vadd.f32 %v737, %v799
    %801 = vmatmul.f32.gmra.mxu0 %v583
    %v802 = vpop.f32.mrf.mxu0
    %v803 = vadd.f32 %v737, %v802
    %804 = vmatmul.f32.gmra.mxu0 %v586
    %v805 = vpop.f32.mrf.mxu0
    %v806 = vadd.f32 %v737, %v805
    %807 = vmatmul.f32.gmra.mxu0 %v589
    %v808 = vpop.f32.mrf.mxu0
    %v809 = vadd.f32 %v737, %v808
    %810 = vmatmul.f32.gmra.mxu0 %v592
    %v811 = vpop.f32.mrf.mxu0
    %v812 = vadd.f32 %v737, %v811
    %813 = vmatmul.f32.gmra.mxu0 %v595
    %v814 = vpop.f32.mrf.mxu0
    %v815 = vadd.f32 %v737, %v814
    %816 = vmatmul.f32.gmra.mxu0 %v598
    %v817 = vpop.f32.mrf.mxu0
    %v818 = vadd.f32 %v737, %v817
    %819 = vmatmul.f32.gmra.mxu0 %v601
    %v820 = vpop.f32.mrf.mxu0
    %v821 = vadd.f32 %v737, %v820
    %822 = vmatmul.f32.gmra.mxu0 %v604
    %v823 = vpop.f32.mrf.mxu0
    %v824 = vadd.f32 %v737, %v823
    %825 = vdwg.mxu0
    %v844 = vrot.slane %v694, 7
    %v845 = vrot.slane %v695, 7
    %v846 = vrot.slane %v696, 7
    %v847 = vsel %vm287, %v844, %v846
    %v848 = vrot.slane %v697, 7
    %v849 = vsel %vm287, %v845, %v848
    %v850 = vrot.slane %v698, 7
    %v851 = vsel %vm287, %v846, %v850
    %v852 = vrot.slane %v699, 7
    %v853 = vsel %vm287, %v848, %v852
    %v854 = vrot.slane %v700, 7
    %v855 = vsel %vm287, %v850, %v854
    %v856 = vrot.slane %v701, 7
    %v857 = vsel %vm287, %v852, %v856
    %v858 = vrot.slane %v702, 7
    %v859 = vsel %vm287, %v854, %v858
    %v860 = vrot.slane %v703, 7
    %v861 = vsel %vm287, %v856, %v860
    %v862 = vrot.slane %v704, 7
    %v863 = vsel %vm287, %v858, %v862
    %v864 = vrot.slane %v705, 7
    %v865 = vsel %vm287, %v860, %v864
    %v866 = vrot.slane %v706, 7
    %v867 = vsel %vm287, %v862, %v866
    %v868 = vrot.slane %v707, 7
    %v869 = vsel %vm287, %v864, %v868
    %v870 = vrot.slane %v708, 7
    %v871 = vsel %vm287, %v866, %v870
    %v872 = vrot.slane %v709, 7
    %v873 = vsel %vm287, %v868, %v872
    %v874 = vrot.slane %v710, 7
    %v875 = vsel %vm287, %v870, %v874
    %v876 = vrot.slane %v711, 7
    %v877 = vsel %vm287, %v872, %v876
    %v896 = vsel %vm287, 0.0, %v844
    %v897 = vsel %vm287, 0.0, %v845
    %v898 = vsel %vm315, %v875, 0.0
    %v899 = vsel %vm315, %v877, 0.0
    %v900 = vmul.f32 %v896, %v381
    %v901 = vmul.f32 %v897, %v381
    %v902 = vmul.f32 %v847, %v382
    %v903 = vmul.f32 %v849, %v382
    %v904 = vmul.f32 %v851, %v383
    %v905 = vmul.f32 %v853, %v383
    %v906 = vmul.f32 %v855, %v384
    %v907 = vmul.f32 %v857, %v384
    %v908 = vmul.f32 %v859, %v385
    %v909 = vmul.f32 %v861, %v385
    %v910 = vmul.f32 %v863, %v386
    %v911 = vmul.f32 %v865, %v386
    %v912 = vmul.f32 %v867, %v387
    %v913 = vmul.f32 %v869, %v387
    %v914 = vmul.f32 %v871, %v388
    %v915 = vmul.f32 %v873, %v388
    %v916 = vmul.f32 %v898, %v389
    %v917 = vmul.f32 %v899, %v389
    %v918 = vmul.f32 %v896, %v417
    %v919 = vmul.f32 %v897, %v417
    %v920 = vmul.f32 %v847, %v419
    %v921 = vmul.f32 %v849, %v419
    %v922 = vmul.f32 %v851, %v421
    %v923 = vmul.f32 %v853, %v421
    %v924 = vmul.f32 %v855, %v423
    %v925 = vmul.f32 %v857, %v423
    %v926 = vmul.f32 %v859, %v425
    %v927 = vmul.f32 %v861, %v425
    %v928 = vmul.f32 %v863, %v427
    %v929 = vmul.f32 %v865, %v427
    %v930 = vmul.f32 %v867, %v429
    %v931 = vmul.f32 %v869, %v429
    %v932 = vmul.f32 %v871, %v431
    %v933 = vmul.f32 %v873, %v431
    %v934 = vmul.f32 %v898, %v433
    %v935 = vmul.f32 %v899, %v433
    %v954 = vrot.slane %v918, 2
    %v955 = vrot.slane %v920, 2
    %v956 = vsel %vm488, %v954, %v955
    %v957 = vrot.slane %v919, 2
    %v958 = vrot.slane %v921, 2
    %v959 = vsel %vm488, %v957, %v958
    %v960 = vrot.slane %v922, 2
    %v961 = vsel %vm488, %v955, %v960
    %v962 = vrot.slane %v923, 2
    %v963 = vsel %vm488, %v958, %v962
    %v964 = vrot.slane %v924, 2
    %v965 = vsel %vm488, %v960, %v964
    %v966 = vrot.slane %v925, 2
    %v967 = vsel %vm488, %v962, %v966
    %v968 = vrot.slane %v926, 2
    %v969 = vsel %vm488, %v964, %v968
    %v970 = vrot.slane %v927, 2
    %v971 = vsel %vm488, %v966, %v970
    %v972 = vrot.slane %v928, 2
    %v973 = vsel %vm488, %v968, %v972
    %v974 = vrot.slane %v929, 2
    %v975 = vsel %vm488, %v970, %v974
    %v976 = vrot.slane %v930, 2
    %v977 = vsel %vm488, %v972, %v976
    %v978 = vrot.slane %v931, 2
    %v979 = vsel %vm488, %v974, %v978
    %v980 = vrot.slane %v932, 2
    %v981 = vsel %vm488, %v976, %v980
    %v982 = vrot.slane %v933, 2
    %v983 = vsel %vm488, %v978, %v982
    %v984 = vrot.slane %v934, 2
    %v985 = vsel %vm488, %v980, %v984
    %v986 = vrot.slane %v935, 2
    %v987 = vsel %vm488, %v982, %v986
    %v1006 = vld [vmem:[#allocation2 + $0x1d0] sm:$0xff]
    %v1007 = vld [vmem:[#allocation2 + $0x1d8] sm:$0xff]
    %v1008 = vld [vmem:[#allocation2 + $0x1e0] sm:$0xff]
    %v1009 = vld [vmem:[#allocation2 + $0x1e8] sm:$0xff]
    %v1010 = vld [vmem:[#allocation2 + $0x1f0] sm:$0xff]
    %v1011 = vld [vmem:[#allocation2 + $0x1f8] sm:$0xff]
    %v1012 = vld [vmem:[#allocation2 + $0x200] sm:$0xff]
    %v1013 = vld [vmem:[#allocation2 + $0x208] sm:$0xff]
    %v1014 = vld [vmem:[#allocation2 + $0x210] sm:$0xff]
    %v1015 = vld [vmem:[#allocation2 + $0x218] sm:$0xff]
    %v1016 = vld [vmem:[#allocation2 + $0x220] sm:$0xff]
    %v1017 = vld [vmem:[#allocation2 + $0x228] sm:$0xff]
    %v1018 = vld [vmem:[#allocation2 + $0x230] sm:$0xff]
    %v1019 = vld [vmem:[#allocation2 + $0x238] sm:$0xff]
    %v1020 = vld [vmem:[#allocation2 + $0x240] sm:$0xff]
    %v1021 = vld [vmem:[#allocation2 + $0x248] sm:$0xff]
    %v1022 = vld [vmem:[#allocation2 + $0x250] sm:$0xff]
    %v1023 = vld [vmem:[#allocation2 + $0x258] sm:$0xff]
    %v1024 = vld [vmem:[#allocation2 + $0x260] sm:$0xff]
    %v1025 = vld [vmem:[#allocation2 + $0x268] sm:$0xff]
    %v1026 = vld [vmem:[#allocation2 + $0x270] sm:$0xff]
    %v1027 = vld [vmem:[#allocation2 + $0x278] sm:$0xff]
    %v1028 = vld [vmem:[#allocation2 + $0x280] sm:$0xff]
    %v1029 = vld [vmem:[#allocation2 + $0x288] sm:$0xff]
    %v1030 = vld [vmem:[#allocation2 + $0x290] sm:$0xff]
    %v1031 = vld [vmem:[#allocation2 + $0x298] sm:$0xff]
    %v1032 = vld [vmem:[#allocation2 + $0x2a0] sm:$0xff]
    %v1033 = vld [vmem:[#allocation2 + $0x2a8] sm:$0xff]
    %v1034 = vld [vmem:[#allocation2 + $0x2b0] sm:$0xff]
    %v1035 = vld [vmem:[#allocation2 + $0x2b8] sm:$0xff]
    %v1036 = vld [vmem:[#allocation2 + $0x2c0] sm:$0xff]
    %v1037 = vld [vmem:[#allocation2 + $0x2c8] sm:$0xff]
    %v1038 = vld [vmem:[#allocation2 + $0x2d0] sm:$0xff]
    %v1039 = vld [vmem:[#allocation2 + $0x2d8] sm:$0xff]
    %v1040 = vld [vmem:[#allocation2 + $0x2e0] sm:$0xff]
    %v1041 = vld [vmem:[#allocation2 + $0x2e8] sm:$0xff]
    %v1042 = vld [vmem:[#allocation2 + $0x2f0] sm:$0xff]
    %v1043 = vld [vmem:[#allocation2 + $0x2f8] sm:$0xff]
    %v1044 = vld [vmem:[#allocation2 + $0x300] sm:$0xff]
    %v1045 = vld [vmem:[#allocation2 + $0x308] sm:$0xff]
    %v1046 = vld [vmem:[#allocation2 + $0x310] sm:$0xff]
    %v1047 = vld [vmem:[#allocation2 + $0x318] sm:$0xff]
    %v1048 = vld [vmem:[#allocation2 + $0x320] sm:$0xff]
    %v1049 = vld [vmem:[#allocation2 + $0x328] sm:$0xff]
    %v1050 = vld [vmem:[#allocation2 + $0x330] sm:$0xff]
    %v1051 = vld [vmem:[#allocation2 + $0x338] sm:$0xff]
    %v1052 = vld [vmem:[#allocation2 + $0x340] sm:$0xff]
    %v1053 = vld [vmem:[#allocation2 + $0x348] sm:$0xff]
    %v1054 = vld [vmem:[#allocation2 + $0x350] sm:$0xff]
    %v1055 = vld [vmem:[#allocation2 + $0x358] sm:$0xff]
    %v1056 = vld [vmem:[#allocation2 + $0x360] sm:$0xff]
    %v1057 = vld [vmem:[#allocation2 + $0x368] sm:$0xff]
    %v1058 = vld [vmem:[#allocation2 + $0x370] sm:$0xff]
    %v1059 = vld [vmem:[#allocation2 + $0x378] sm:$0xff]
    %v1060 = vld [vmem:[#allocation2 + $0x380] sm:$0xff]
    %v1061 = vld [vmem:[#allocation2 + $0x388] sm:$0xff]
    %v1062 = vld [vmem:[#allocation2 + $0x390] sm:$0xff]
    %v1063 = vld [vmem:[#allocation2 + $0x398] sm:$0xff]
    %v1064 = vld [vmem:[#allocation2 + $0x3a0] sm:$0xff]
    %v1065 = vld [vmem:[#allocation2 + $0x3a8] sm:$0xff]
    %v1066 = vld [vmem:[#allocation2 + $0x3b0] sm:$0xff]
    %v1067 = vld [vmem:[#allocation2 + $0x3b8] sm:$0xff]
    %v1068 = vld [vmem:[#allocation2 + $0x3c0] sm:$0xff]
    %v1069 = vld [vmem:[#allocation2 + $0x3c8] sm:$0xff]
    %v1070 = vld [vmem:[#allocation2 + $0x3d0] sm:$0xff]
    %v1071 = vld [vmem:[#allocation2 + $0x3d8] sm:$0xff]
    %v1072 = vld [vmem:[#allocation2 + $0x3e0] sm:$0xff]
    %v1073 = vld [vmem:[#allocation2 + $0x3e8] sm:$0xff]
    %v1074 = vld [vmem:[#allocation2 + $0x3f0] sm:$0xff]
    %v1075 = vld [vmem:[#allocation2 + $0x3f8] sm:$0xff]
    %v1076 = vld [vmem:[#allocation2 + $0x400] sm:$0xff]
    %v1077 = vld [vmem:[#allocation2 + $0x408] sm:$0xff]
    %v1078 = vld [vmem:[#allocation2 + $0x410] sm:$0xff]
    %v1079 = vld [vmem:[#allocation2 + $0x418] sm:$0xff]
    %v1080 = vld [vmem:[#allocation2 + $0x420] sm:$0xff]
    %v1081 = vld [vmem:[#allocation2 + $0x428] sm:$0xff]
    %v1082 = vld [vmem:[#allocation2 + $0x430] sm:$0xff]
    %v1083 = vld [vmem:[#allocation2 + $0x438] sm:$0xff]
    %v1084 = vld [vmem:[#allocation2 + $0x440] sm:$0xff]
    %v1085 = vld [vmem:[#allocation2 + $0x448] sm:$0xff]
    %v1086 = vld [vmem:[#allocation2 + $0x450] sm:$0xff]
    %v1087 = vld [vmem:[#allocation2 + $0x458] sm:$0xff]
    %v1088 = vld [vmem:[#allocation2 + $0x460] sm:$0xff]
    %v1089 = vld [vmem:[#allocation2 + $0x468] sm:$0xff]
    %v1090 = vld [vmem:[#allocation2 + $0x470] sm:$0xff]
    %v1091 = vld [vmem:[#allocation2 + $0x478] sm:$0xff]
    %v1092 = vld [vmem:[#allocation2 + $0x480] sm:$0xff]
    %v1093 = vld [vmem:[#allocation2 + $0x488] sm:$0xff]
    %v1094 = vld [vmem:[#allocation2 + $0x490] sm:$0xff]
    %v1095 = vld [vmem:[#allocation2 + $0x498] sm:$0xff]
    %v1096 = vld [vmem:[#allocation2 + $0x4a0] sm:$0xff]
    %v1097 = vld [vmem:[#allocation2 + $0x4a8] sm:$0xff]
    %v1098 = vld [vmem:[#allocation2 + $0x4b0] sm:$0xff]
    %v1099 = vld [vmem:[#allocation2 + $0x4b8] sm:$0xff]
    %v1100 = vld [vmem:[#allocation2 + $0x4c0] sm:$0xff]
    %v1101 = vld [vmem:[#allocation2 + $0x4c8] sm:$0xff]
    %v1102 = vld [vmem:[#allocation2 + $0x4d0] sm:$0xff]
    %v1103 = vld [vmem:[#allocation2 + $0x4d8] sm:$0xff]
    %v1104 = vld [vmem:[#allocation2 + $0x4e0] sm:$0xff]
    %v1105 = vld [vmem:[#allocation2 + $0x4e8] sm:$0xff]
    %v1106 = vld [vmem:[#allocation2 + $0x4f0] sm:$0xff]
    %v1107 = vld [vmem:[#allocation2 + $0x4f8] sm:$0xff]
    %v1108 = vld [vmem:[#allocation2 + $0x500] sm:$0xff]
    %v1109 = vld [vmem:[#allocation2 + $0x508] sm:$0xff]
    %v1110 = vld [vmem:[#allocation2 + $0x510] sm:$0xff]
    %v1111 = vld [vmem:[#allocation2 + $0x518] sm:$0xff]
    %v1112 = vld [vmem:[#allocation2 + $0x520] sm:$0xff]
    %v1113 = vld [vmem:[#allocation2 + $0x528] sm:$0xff]
    %v1114 = vld [vmem:[#allocation2 + $0x530] sm:$0xff]
    %v1115 = vld [vmem:[#allocation2 + $0x538] sm:$0xff]
    %v1116 = vld [vmem:[#allocation2 + $0x540] sm:$0xff]
    %v1117 = vld [vmem:[#allocation2 + $0x548] sm:$0xff]
    %v1118 = vld [vmem:[#allocation2 + $0x550] sm:$0xff]
    %v1119 = vld [vmem:[#allocation2 + $0x558] sm:$0xff]
    %v1120 = vld [vmem:[#allocation2 + $0x560] sm:$0xff]
    %v1121 = vld [vmem:[#allocation2 + $0x568] sm:$0xff]
    %v1122 = vld [vmem:[#allocation2 + $0x570] sm:$0xff]
    %v1123 = vld [vmem:[#allocation2 + $0x578] sm:$0xff]
    %v1124 = vld [vmem:[#allocation2 + $0x580] sm:$0xff]
    %v1125 = vld [vmem:[#allocation2 + $0x588] sm:$0xff]
    %v1126 = vld [vmem:[#allocation2 + $0x590] sm:$0xff]
    %v1127 = vld [vmem:[#allocation2 + $0x598] sm:$0xff]
    %v1128 = vld [vmem:[#allocation2 + $0x5a0] sm:$0xff]
    %v1129 = vld [vmem:[#allocation2 + $0x5a8] sm:$0xff]
    %v1130 = vld [vmem:[#allocation2 + $0x5b0] sm:$0xff]
    %v1131 = vld [vmem:[#allocation2 + $0x5b8] sm:$0xff]
    %v1132 = vld [vmem:[#allocation2 + $0x5c0] sm:$0xff]
    %v1133 = vld [vmem:[#allocation2 + $0x5c8] sm:$0xff]
    %v1134 = vld [vmem:[#allocation2 + $0x5d0] sm:$0xff]
    %v1135 = vld [vmem:[#allocation2 + $0x5d8] sm:$0xff]
    %v1136 = vld [vmem:[#allocation2 + $0x5e0] sm:$0xff]
    %v1137 = vld [vmem:[#allocation2 + $0x5e8] sm:$0xff]
    %v1138 = vld [vmem:[#allocation2 + $0x5f0] sm:$0xff]
    %v1139 = vld [vmem:[#allocation2 + $0x5f8] sm:$0xff]
    %v1140 = vld [vmem:[#allocation2 + $0x600] sm:$0xff]
    %v1141 = vld [vmem:[#allocation2 + $0x608] sm:$0xff]
    %v1142 = vld [vmem:[#allocation2 + $0x610] sm:$0xff]
    %v1143 = vld [vmem:[#allocation2 + $0x618] sm:$0xff]
    %v1144 = vld [vmem:[#allocation2 + $0x620] sm:$0xff]
    %v1145 = vld [vmem:[#allocation2 + $0x628] sm:$0xff]
    %v1146 = vld [vmem:[#allocation2 + $0x630] sm:$0xff]
    %v1147 = vld [vmem:[#allocation2 + $0x638] sm:$0xff]
    %v1148 = vld [vmem:[#allocation2 + $0x640] sm:$0xff]
    %v1149 = vld [vmem:[#allocation2 + $0x648] sm:$0xff]
    %v1150 = vld [vmem:[#allocation2 + $0x650] sm:$0xff]
    %v1151 = vld [vmem:[#allocation2 + $0x658] sm:$0xff]
    %v1152 = vld [vmem:[#allocation2 + $0x660] sm:$0xff]
    %v1153 = vld [vmem:[#allocation2 + $0x668] sm:$0xff]
    %v1154 = vld [vmem:[#allocation2 + $0x670] sm:$0xff]
    %v1155 = vld [vmem:[#allocation2 + $0x678] sm:$0xff]
    %v1156 = vld [vmem:[#allocation2 + $0x680] sm:$0xff]
    %v1157 = vld [vmem:[#allocation2 + $0x688] sm:$0xff]
    %v1158 = vld [vmem:[#allocation2 + $0x690] sm:$0xff]
    %v1159 = vld [vmem:[#allocation2 + $0x698] sm:$0xff]
    %v1160 = vld [vmem:[#allocation2 + $0x6a0] sm:$0xff]
    %v1161 = vld [vmem:[#allocation2 + $0x6a8] sm:$0xff]
    %v1162 = vld [vmem:[#allocation2 + $0x6b0] sm:$0xff]
    %v1163 = vld [vmem:[#allocation2 + $0x6b8] sm:$0xff]
    %v1164 = vld [vmem:[#allocation2 + $0x6c0] sm:$0xff]
    %v1165 = vld [vmem:[#allocation2 + $0x6c8] sm:$0xff]
    %v1166 = vld [vmem:[#allocation2 + $0x6d0] sm:$0xff]
    %v1167 = vld [vmem:[#allocation2 + $0x6d8] sm:$0xff]
    %v1168 = vld [vmem:[#allocation2 + $0x6e0] sm:$0xff]
    %v1169 = vld [vmem:[#allocation2 + $0x6e8] sm:$0xff]
    %v1170 = vld [vmem:[#allocation2 + $0x6f0] sm:$0xff]
    %v1171 = vld [vmem:[#allocation2 + $0x6f8] sm:$0xff]
    %v1172 = vld [vmem:[#allocation2 + $0x700] sm:$0xff]
    %v1173 = vld [vmem:[#allocation2 + $0x708] sm:$0xff]
    %v1174 = vld [vmem:[#allocation2 + $0x710] sm:$0xff]
    %v1175 = vld [vmem:[#allocation2 + $0x718] sm:$0xff]
    %v1176 = vld [vmem:[#allocation2 + $0x720] sm:$0xff]
    %v1177 = vld [vmem:[#allocation2 + $0x728] sm:$0xff]
    %v1178 = vld [vmem:[#allocation2 + $0x730] sm:$0xff]
    %v1179 = vld [vmem:[#allocation2 + $0x738] sm:$0xff]
    %v1180 = vld [vmem:[#allocation2 + $0x740] sm:$0xff]
    %v1181 = vld [vmem:[#allocation2 + $0x748] sm:$0xff]
    %v1182 = vld [vmem:[#allocation2 + $0x750] sm:$0xff]
    %v1183 = vld [vmem:[#allocation2 + $0x758] sm:$0xff]
    %v1184 = vld [vmem:[#allocation2 + $0x760] sm:$0xff]
    %v1185 = vld [vmem:[#allocation2 + $0x768] sm:$0xff]
    %v1186 = vld [vmem:[#allocation2 + $0x770] sm:$0xff]
    %v1187 = vld [vmem:[#allocation2 + $0x778] sm:$0xff]
    %v1188 = vld [vmem:[#allocation2 + $0x780] sm:$0xff]
    %v1189 = vld [vmem:[#allocation2 + $0x788] sm:$0xff]
    %v1190 = vld [vmem:[#allocation2 + $0x790] sm:$0xff]
    %v1191 = vld [vmem:[#allocation2 + $0x798] sm:$0xff]
    %v1192 = vld [vmem:[#allocation2 + $0x7a0] sm:$0xff]
    %v1193 = vld [vmem:[#allocation2 + $0x7a8] sm:$0xff]
    %v1194 = vld [vmem:[#allocation2 + $0x7b0] sm:$0xff]
    %v1195 = vld [vmem:[#allocation2 + $0x7b8] sm:$0xff]
    %v1196 = vld [vmem:[#allocation2 + $0x7c0] sm:$0xff]
    %v1197 = vld [vmem:[#allocation2 + $0x7c8] sm:$0xff]
    %v1198 = vperm.slane %v276, 1
    %v1199 = vperm.slane %v277, 1
    %1200 = vmatpush.msra.mxu0 %v1036
    %1201 = vmatpush.msra.mxu0 %v1034
    %1202 = vmatpush.msra.mxu0 %v1032
    %1203 = vmatpush.msra.mxu0 %v1030
    %1204 = vmatpush.msra.mxu0 %v1028
    %1205 = vmatpush.msra.mxu0 %v1026
    %1206 = vmatpush.msra.mxu0 %v1024
    %1207 = vmatpush.msra.mxu0 %v1022
    %1208 = vmatpush.msra.mxu0 %v1020
    %1209 = vmatpush.msra.mxu0 %v1018
    %1210 = vmatpush.msra.mxu0 %v1016
    %1211 = vmatpush.msra.mxu0 %v1014
    %1212 = vmatpush.msra.mxu0 %v1012
    %1213 = vmatpush.msra.mxu0 %v1010
    %1214 = vmatpush.msra.mxu0 %v1008
    %1215 = vmatpush.msra.mxu0 %v1006
    %1216 = vmatmul.f32.gmra.mxu0 %v900
    %v1217 = vpop.f32.mrf.mxu0
    %v1218 = vadd.f32 %v1198, %v1217
    %1219 = vmatmul.f32.gmra.mxu0 %v902
    %v1220 = vpop.f32.mrf.mxu0
    %v1221 = vadd.f32 %v1198, %v1220
    %1222 = vmatmul.f32.gmra.mxu0 %v904
    %v1223 = vpop.f32.mrf.mxu0
    %v1224 = vadd.f32 %v1198, %v1223
    %1225 = vmatmul.f32.gmra.mxu0 %v906
    %v1226 = vpop.f32.mrf.mxu0
    %v1227 = vadd.f32 %v1198, %v1226
    %1228 = vmatmul.f32.gmra.mxu0 %v908
    %v1229 = vpop.f32.mrf.mxu0
    %v1230 = vadd.f32 %v1198, %v1229
    %1231 = vmatmul.f32.gmra.mxu0 %v910
    %v1232 = vpop.f32.mrf.mxu0
    %v1233 = vadd.f32 %v1198, %v1232
    %1234 = vmatmul.f32.gmra.mxu0 %v912
    %v1235 = vpop.f32.mrf.mxu0
    %v1236 = vadd.f32 %v1198, %v1235
    %1237 = vmatmul.f32.gmra.mxu0 %v914
    %v1238 = vpop.f32.mrf.mxu0
    %v1239 = vadd.f32 %v1198, %v1238
    %1240 = vmatmul.f32.gmra.mxu0 %v916
    %v1241 = vpop.f32.mrf.mxu0
    %v1242 = vadd.f32 %v1198, %v1241
    %1243 = vdwg.mxu0
    %1244 = vmatpush.msra.mxu0 %v1068
    %1245 = vmatpush.msra.mxu0 %v1066
    %1246 = vmatpush.msra.mxu0 %v1064
    %1247 = vmatpush.msra.mxu0 %v1062
    %1248 = vmatpush.msra.mxu0 %v1060
    %1249 = vmatpush.msra.mxu0 %v1058
    %1250 = vmatpush.msra.mxu0 %v1056
    %1251 = vmatpush.msra.mxu0 %v1054
    %1252 = vmatpush.msra.mxu0 %v1052
    %1253 = vmatpush.msra.mxu0 %v1050
    %1254 = vmatpush.msra.mxu0 %v1048
    %1255 = vmatpush.msra.mxu0 %v1046
    %1256 = vmatpush.msra.mxu0 %v1044
    %1257 = vmatpush.msra.mxu0 %v1042
    %1258 = vmatpush.msra.mxu0 %v1040
    %1259 = vmatpush.msra.mxu0 %v1038
    %1260 = vmatmul.f32.gmra.mxu0 %v901
    %v1261 = vpop.f32.mrf.mxu0
    %v1262 = vadd.f32 %v1218, %v1261
    %1263 = vmatmul.f32.gmra.mxu0 %v903
    %v1264 = vpop.f32.mrf.mxu0
    %v1265 = vadd.f32 %v1221, %v1264
    %1266 = vmatmul.f32.gmra.mxu0 %v905
    %v1267 = vpop.f32.mrf.mxu0
    %v1268 = vadd.f32 %v1224, %v1267
    %1269 = vmatmul.f32.gmra.mxu0 %v907
    %v1270 = vpop.f32.mrf.mxu0
    %v1271 = vadd.f32 %v1227, %v1270
    %1272 = vmatmul.f32.gmra.mxu0 %v909
    %v1273 = vpop.f32.mrf.mxu0
    %v1274 = vadd.f32 %v1230, %v1273
    %1275 = vmatmul.f32.gmra.mxu0 %v911
    %v1276 = vpop.f32.mrf.mxu0
    %v1277 = vadd.f32 %v1233, %v1276
    %1278 = vmatmul.f32.gmra.mxu0 %v913
    %v1279 = vpop.f32.mrf.mxu0
    %v1280 = vadd.f32 %v1236, %v1279
    %1281 = vmatmul.f32.gmra.mxu0 %v915
    %v1282 = vpop.f32.mrf.mxu0
    %v1283 = vadd.f32 %v1239, %v1282
    %1284 = vmatmul.f32.gmra.mxu0 %v917
    %v1285 = vpop.f32.mrf.mxu0
    %v1286 = vadd.f32 %v1242, %v1285
    %1287 = vdwg.mxu0
    %1288 = vmatpush.msra.mxu0 %v1100
    %1289 = vmatpush.msra.mxu0 %v1098
    %1290 = vmatpush.msra.mxu0 %v1096
    %1291 = vmatpush.msra.mxu0 %v1094
    %1292 = vmatpush.msra.mxu0 %v1092
    %1293 = vmatpush.msra.mxu0 %v1090
    %1294 = vmatpush.msra.mxu0 %v1088
    %1295 = vmatpush.msra.mxu0 %v1086
    %1296 = vmatpush.msra.mxu0 %v1084
    %1297 = vmatpush.msra.mxu0 %v1082
    %1298 = vmatpush.msra.mxu0 %v1080
    %1299 = vmatpush.msra.mxu0 %v1078
    %1300 = vmatpush.msra.mxu0 %v1076
    %1301 = vmatpush.msra.mxu0 %v1074
    %1302 = vmatpush.msra.mxu0 %v1072
    %1303 = vmatpush.msra.mxu0 %v1070
    %1304 = vmatmul.f32.gmra.mxu0 %v694
    %v1305 = vpop.f32.mrf.mxu0
    %v1306 = vadd.f32 %v1262, %v1305
    %1307 = vmatmul.f32.gmra.mxu0 %v696
    %v1308 = vpop.f32.mrf.mxu0
    %v1309 = vadd.f32 %v1265, %v1308
    %1310 = vmatmul.f32.gmra.mxu0 %v698
    %v1311 = vpop.f32.mrf.mxu0
    %v1312 = vadd.f32 %v1268, %v1311
    %1313 = vmatmul.f32.gmra.mxu0 %v700
    %v1314 = vpop.f32.mrf.mxu0
    %v1315 = vadd.f32 %v1271, %v1314
    %1316 = vmatmul.f32.gmra.mxu0 %v702
    %v1317 = vpop.f32.mrf.mxu0
    %v1318 = vadd.f32 %v1274, %v1317
    %1319 = vmatmul.f32.gmra.mxu0 %v704
    %v1320 = vpop.f32.mrf.mxu0
    %v1321 = vadd.f32 %v1277, %v1320
    %1322 = vmatmul.f32.gmra.mxu0 %v706
    %v1323 = vpop.f32.mrf.mxu0
    %v1324 = vadd.f32 %v1280, %v1323
    %1325 = vmatmul.f32.gmra.mxu0 %v708
    %v1326 = vpop.f32.mrf.mxu0
    %v1327 = vadd.f32 %v1283, %v1326
    %1328 = vmatmul.f32.gmra.mxu0 %v710
    %v1329 = vpop.f32.mrf.mxu0
    %v1330 = vadd.f32 %v1286, %v1329
    %1331 = vdwg.mxu0
    %1332 = vmatpush.msra.mxu0 %v1132
    %1333 = vmatpush.msra.mxu0 %v1130
    %1334 = vmatpush.msra.mxu0 %v1128
    %1335 = vmatpush.msra.mxu0 %v1126
    %1336 = vmatpush.msra.mxu0 %v1124
    %1337 = vmatpush.msra.mxu0 %v1122
    %1338 = vmatpush.msra.mxu0 %v1120
    %1339 = vmatpush.msra.mxu0 %v1118
    %1340 = vmatpush.msra.mxu0 %v1116
    %1341 = vmatpush.msra.mxu0 %v1114
    %1342 = vmatpush.msra.mxu0 %v1112
    %1343 = vmatpush.msra.mxu0 %v1110
    %1344 = vmatpush.msra.mxu0 %v1108
    %1345 = vmatpush.msra.mxu0 %v1106
    %1346 = vmatpush.msra.mxu0 %v1104
    %1347 = vmatpush.msra.mxu0 %v1102
    %1348 = vmatmul.f32.gmra.mxu0 %v695
    %v1349 = vpop.f32.mrf.mxu0
    %v1350 = vadd.f32 %v1306, %v1349
    %1351 = vmatmul.f32.gmra.mxu0 %v697
    %v1352 = vpop.f32.mrf.mxu0
    %v1353 = vadd.f32 %v1309, %v1352
    %1354 = vmatmul.f32.gmra.mxu0 %v699
    %v1355 = vpop.f32.mrf.mxu0
    %v1356 = vadd.f32 %v1312, %v1355
    %1357 = vmatmul.f32.gmra.mxu0 %v701
    %v1358 = vpop.f32.mrf.mxu0
    %v1359 = vadd.f32 %v1315, %v1358
    %1360 = vmatmul.f32.gmra.mxu0 %v703
    %v1361 = vpop.f32.mrf.mxu0
    %v1362 = vadd.f32 %v1318, %v1361
    %1363 = vmatmul.f32.gmra.mxu0 %v705
    %v1364 = vpop.f32.mrf.mxu0
    %v1365 = vadd.f32 %v1321, %v1364
    %1366 = vmatmul.f32.gmra.mxu0 %v707
    %v1367 = vpop.f32.mrf.mxu0
    %v1368 = vadd.f32 %v1324, %v1367
    %1369 = vmatmul.f32.gmra.mxu0 %v709
    %v1370 = vpop.f32.mrf.mxu0
    %v1371 = vadd.f32 %v1327, %v1370
    %1372 = vmatmul.f32.gmra.mxu0 %v711
    %v1373 = vpop.f32.mrf.mxu0
    %v1374 = vadd.f32 %v1330, %v1373
    %1375 = vdwg.mxu0
    %1376 = vmatpush.msra.mxu0 %v1164
    %1377 = vmatpush.msra.mxu0 %v1162
    %1378 = vmatpush.msra.mxu0 %v1160
    %1379 = vmatpush.msra.mxu0 %v1158
    %1380 = vmatpush.msra.mxu0 %v1156
    %1381 = vmatpush.msra.mxu0 %v1154
    %1382 = vmatpush.msra.mxu0 %v1152
    %1383 = vmatpush.msra.mxu0 %v1150
    %1384 = vmatpush.msra.mxu0 %v1148
    %1385 = vmatpush.msra.mxu0 %v1146
    %1386 = vmatpush.msra.mxu0 %v1144
    %1387 = vmatpush.msra.mxu0 %v1142
    %1388 = vmatpush.msra.mxu0 %v1140
    %1389 = vmatpush.msra.mxu0 %v1138
    %1390 = vmatpush.msra.mxu0 %v1136
    %1391 = vmatpush.msra.mxu0 %v1134
    %1392 = vmatmul.f32.gmra.mxu0 %v956
    %v1393 = vpop.f32.mrf.mxu0
    %v1394 = vadd.f32 %v1350, %v1393
    %1395 = vmatmul.f32.gmra.mxu0 %v961
    %v1396 = vpop.f32.mrf.mxu0
    %v1397 = vadd.f32 %v1353, %v1396
    %1398 = vmatmul.f32.gmra.mxu0 %v965
    %v1399 = vpop.f32.mrf.mxu0
    %v1400 = vadd.f32 %v1356, %v1399
    %1401 = vmatmul.f32.gmra.mxu0 %v969
    %v1402 = vpop.f32.mrf.mxu0
    %v1403 = vadd.f32 %v1359, %v1402
    %1404 = vmatmul.f32.gmra.mxu0 %v973
    %v1405 = vpop.f32.mrf.mxu0
    %v1406 = vadd.f32 %v1362, %v1405
    %1407 = vmatmul.f32.gmra.mxu0 %v977
    %v1408 = vpop.f32.mrf.mxu0
    %v1409 = vadd.f32 %v1365, %v1408
    %1410 = vmatmul.f32.gmra.mxu0 %v981
    %v1411 = vpop.f32.mrf.mxu0
    %v1412 = vadd.f32 %v1368, %v1411
    %1413 = vmatmul.f32.gmra.mxu0 %v985
    %v1414 = vpop.f32.mrf.mxu0
    %v1415 = vadd.f32 %v1371, %v1414
    %1416 = vmatmul.f32.gmra.mxu0 %v984
    %v1417 = vpop.f32.mrf.mxu0
    %v1418 = vadd.f32 %v1374, %v1417
    %1419 = vdwg.mxu0
    %1420 = vmatpush.msra.mxu0 %v1196
    %1421 = vmatpush.msra.mxu0 %v1194
    %1422 = vmatpush.msra.mxu0 %v1192
    %1423 = vmatpush.msra.mxu0 %v1190
    %1424 = vmatpush.msra.mxu0 %v1188
    %1425 = vmatpush.msra.mxu0 %v1186
    %1426 = vmatpush.msra.mxu0 %v1184
    %1427 = vmatpush.msra.mxu0 %v1182
    %1428 = vmatpush.msra.mxu0 %v1180
    %1429 = vmatpush.msra.mxu0 %v1178
    %1430 = vmatpush.msra.mxu0 %v1176
    %1431 = vmatpush.msra.mxu0 %v1174
    %1432 = vmatpush.msra.mxu0 %v1172
    %1433 = vmatpush.msra.mxu0 %v1170
    %1434 = vmatpush.msra.mxu0 %v1168
    %1435 = vmatpush.msra.mxu0 %v1166
    %1436 = vmatmul.f32.gmra.mxu0 %v959
    %v1437 = vpop.f32.mrf.mxu0
    %v1438 = vadd.f32 %v1394, %v1437
    %1439 = vmatmul.f32.gmra.mxu0 %v963
    %v1440 = vpop.f32.mrf.mxu0
    %v1441 = vadd.f32 %v1397, %v1440
    %1442 = vmatmul.f32.gmra.mxu0 %v967
    %v1443 = vpop.f32.mrf.mxu0
    %v1444 = vadd.f32 %v1400, %v1443
    %1445 = vmatmul.f32.gmra.mxu0 %v971
    %v1446 = vpop.f32.mrf.mxu0
    %v1447 = vadd.f32 %v1403, %v1446
    %1448 = vmatmul.f32.gmra.mxu0 %v975
    %v1449 = vpop.f32.mrf.mxu0
    %v1450 = vadd.f32 %v1406, %v1449
    %1451 = vmatmul.f32.gmra.mxu0 %v979
    %v1452 = vpop.f32.mrf.mxu0
    %v1453 = vadd.f32 %v1409, %v1452
    %1454 = vmatmul.f32.gmra.mxu0 %v983
    %v1455 = vpop.f32.mrf.mxu0
    %v1456 = vadd.f32 %v1412, %v1455
    %1457 = vmatmul.f32.gmra.mxu0 %v987
    %v1458 = vpop.f32.mrf.mxu0
    %v1459 = vadd.f32 %v1415, %v1458
    %1460 = vmatmul.f32.gmra.mxu0 %v986
    %v1461 = vpop.f32.mrf.mxu0
    %v1462 = vadd.f32 %v1418, %v1461
    %1463 = vdwg.mxu0
    %1464 = vmatpush.msra.mxu0 %v1037
    %1465 = vmatpush.msra.mxu0 %v1035
    %1466 = vmatpush.msra.mxu0 %v1033
    %1467 = vmatpush.msra.mxu0 %v1031
    %1468 = vmatpush.msra.mxu0 %v1029
    %1469 = vmatpush.msra.mxu0 %v1027
    %1470 = vmatpush.msra.mxu0 %v1025
    %1471 = vmatpush.msra.mxu0 %v1023
    %1472 = vmatpush.msra.mxu0 %v1021
    %1473 = vmatpush.msra.mxu0 %v1019
    %1474 = vmatpush.msra.mxu0 %v1017
    %1475 = vmatpush.msra.mxu0 %v1015
    %1476 = vmatpush.msra.mxu0 %v1013
    %1477 = vmatpush.msra.mxu0 %v1011
    %1478 = vmatpush.msra.mxu0 %v1009
    %1479 = vmatpush.msra.mxu0 %v1007
    %1480 = vmatmul.f32.gmra.mxu0 %v900
    %v1481 = vpop.f32.mrf.mxu0
    %v1482 = vadd.f32 %v1199, %v1481
    %1483 = vmatmul.f32.gmra.mxu0 %v902
    %v1484 = vpop.f32.mrf.mxu0
    %v1485 = vadd.f32 %v1199, %v1484
    %1486 = vmatmul.f32.gmra.mxu0 %v904
    %v1487 = vpop.f32.mrf.mxu0
    %v1488 = vadd.f32 %v1199, %v1487
    %1489 = vmatmul.f32.gmra.mxu0 %v906
    %v1490 = vpop.f32.mrf.mxu0
    %v1491 = vadd.f32 %v1199, %v1490
    %1492 = vmatmul.f32.gmra.mxu0 %v908
    %v1493 = vpop.f32.mrf.mxu0
    %v1494 = vadd.f32 %v1199, %v1493
    %1495 = vmatmul.f32.gmra.mxu0 %v910
    %v1496 = vpop.f32.mrf.mxu0
    %v1497 = vadd.f32 %v1199, %v1496
    %1498 = vmatmul.f32.gmra.mxu0 %v912
    %v1499 = vpop.f32.mrf.mxu0
    %v1500 = vadd.f32 %v1199, %v1499
    %1501 = vmatmul.f32.gmra.mxu0 %v914
    %v1502 = vpop.f32.mrf.mxu0
    %v1503 = vadd.f32 %v1199, %v1502
    %1504 = vmatmul.f32.gmra.mxu0 %v916
    %v1505 = vpop.f32.mrf.mxu0
    %v1506 = vadd.f32 %v1199, %v1505
    %1507 = vdwg.mxu0
    %1508 = vmatpush.msra.mxu0 %v1069
    %1509 = vmatpush.msra.mxu0 %v1067
    %1510 = vmatpush.msra.mxu0 %v1065
    %1511 = vmatpush.msra.mxu0 %v1063
    %1512 = vmatpush.msra.mxu0 %v1061
    %1513 = vmatpush.msra.mxu0 %v1059
    %1514 = vmatpush.msra.mxu0 %v1057
    %1515 = vmatpush.msra.mxu0 %v1055
    %1516 = vmatpush.msra.mxu0 %v1053
    %1517 = vmatpush.msra.mxu0 %v1051
    %1518 = vmatpush.msra.mxu0 %v1049
    %1519 = vmatpush.msra.mxu0 %v1047
    %1520 = vmatpush.msra.mxu0 %v1045
    %1521 = vmatpush.msra.mxu0 %v1043
    %1522 = vmatpush.msra.mxu0 %v1041
    %1523 = vmatpush.msra.mxu0 %v1039
    %1524 = vmatmul.f32.gmra.mxu0 %v901
    %v1525 = vpop.f32.mrf.mxu0
    %v1526 = vadd.f32 %v1482, %v1525
    %1527 = vmatmul.f32.gmra.mxu0 %v903
    %v1528 = vpop.f32.mrf.mxu0
    %v1529 = vadd.f32 %v1485, %v1528
    %1530 = vmatmul.f32.gmra.mxu0 %v905
    %v1531 = vpop.f32.mrf.mxu0
    %v1532 = vadd.f32 %v1488, %v1531
    %1533 = vmatmul.f32.gmra.mxu0 %v907
    %v1534 = vpop.f32.mrf.mxu0
    %v1535 = vadd.f32 %v1491, %v1534
    %1536 = vmatmul.f32.gmra.mxu0 %v909
    %v1537 = vpop.f32.mrf.mxu0
    %v1538 = vadd.f32 %v1494, %v1537
    %1539 = vmatmul.f32.gmra.mxu0 %v911
    %v1540 = vpop.f32.mrf.mxu0
    %v1541 = vadd.f32 %v1497, %v1540
    %1542 = vmatmul.f32.gmra.mxu0 %v913
    %v1543 = vpop.f32.mrf.mxu0
    %v1544 = vadd.f32 %v1500, %v1543
    %1545 = vmatmul.f32.gmra.mxu0 %v915
    %v1546 = vpop.f32.mrf.mxu0
    %v1547 = vadd.f32 %v1503, %v1546
    %1548 = vmatmul.f32.gmra.mxu0 %v917
    %v1549 = vpop.f32.mrf.mxu0
    %v1550 = vadd.f32 %v1506, %v1549
    %1551 = vdwg.mxu0
    %1552 = vmatpush.msra.mxu0 %v1101
    %1553 = vmatpush.msra.mxu0 %v1099
    %1554 = vmatpush.msra.mxu0 %v1097
    %1555 = vmatpush.msra.mxu0 %v1095
    %1556 = vmatpush.msra.mxu0 %v1093
    %1557 = vmatpush.msra.mxu0 %v1091
    %1558 = vmatpush.msra.mxu0 %v1089
    %1559 = vmatpush.msra.mxu0 %v1087
    %1560 = vmatpush.msra.mxu0 %v1085
    %1561 = vmatpush.msra.mxu0 %v1083
    %1562 = vmatpush.msra.mxu0 %v1081
    %1563 = vmatpush.msra.mxu0 %v1079
    %1564 = vmatpush.msra.mxu0 %v1077
    %1565 = vmatpush.msra.mxu0 %v1075
    %1566 = vmatpush.msra.mxu0 %v1073
    %1567 = vmatpush.msra.mxu0 %v1071
    %1568 = vmatmul.f32.gmra.mxu0 %v694
    %v1569 = vpop.f32.mrf.mxu0
    %v1570 = vadd.f32 %v1526, %v1569
    %1571 = vmatmul.f32.gmra.mxu0 %v696
    %v1572 = vpop.f32.mrf.mxu0
    %v1573 = vadd.f32 %v1529, %v1572
    %1574 = vmatmul.f32.gmra.mxu0 %v698
    %v1575 = vpop.f32.mrf.mxu0
    %v1576 = vadd.f32 %v1532, %v1575
    %1577 = vmatmul.f32.gmra.mxu0 %v700
    %v1578 = vpop.f32.mrf.mxu0
    %v1579 = vadd.f32 %v1535, %v1578
    %1580 = vmatmul.f32.gmra.mxu0 %v702
    %v1581 = vpop.f32.mrf.mxu0
    %v1582 = vadd.f32 %v1538, %v1581
    %1583 = vmatmul.f32.gmra.mxu0 %v704
    %v1584 = vpop.f32.mrf.mxu0
    %v1585 = vadd.f32 %v1541, %v1584
    %1586 = vmatmul.f32.gmra.mxu0 %v706
    %v1587 = vpop.f32.mrf.mxu0
    %v1588 = vadd.f32 %v1544, %v1587
    %1589 = vmatmul.f32.gmra.mxu0 %v708
    %v1590 = vpop.f32.mrf.mxu0
    %v1591 = vadd.f32 %v1547, %v1590
    %1592 = vmatmul.f32.gmra.mxu0 %v710
    %v1593 = vpop.f32.mrf.mxu0
    %v1594 = vadd.f32 %v1550, %v1593
    %1595 = vdwg.mxu0
    %1596 = vmatpush.msra.mxu0 %v1133
    %1597 = vmatpush.msra.mxu0 %v1131
    %1598 = vmatpush.msra.mxu0 %v1129
    %1599 = vmatpush.msra.mxu0 %v1127
    %1600 = vmatpush.msra.mxu0 %v1125
    %1601 = vmatpush.msra.mxu0 %v1123
    %1602 = vmatpush.msra.mxu0 %v1121
    %1603 = vmatpush.msra.mxu0 %v1119
    %1604 = vmatpush.msra.mxu0 %v1117
    %1605 = vmatpush.msra.mxu0 %v1115
    %1606 = vmatpush.msra.mxu0 %v1113
    %1607 = vmatpush.msra.mxu0 %v1111
    %1608 = vmatpush.msra.mxu0 %v1109
    %1609 = vmatpush.msra.mxu0 %v1107
    %1610 = vmatpush.msra.mxu0 %v1105
    %1611 = vmatpush.msra.mxu0 %v1103
    %1612 = vmatmul.f32.gmra.mxu0 %v695
    %v1613 = vpop.f32.mrf.mxu0
    %v1614 = vadd.f32 %v1570, %v1613
    %1615 = vmatmul.f32.gmra.mxu0 %v697
    %v1616 = vpop.f32.mrf.mxu0
    %v1617 = vadd.f32 %v1573, %v1616
    %1618 = vmatmul.f32.gmra.mxu0 %v699
    %v1619 = vpop.f32.mrf.mxu0
    %v1620 = vadd.f32 %v1576, %v1619
    %1621 = vmatmul.f32.gmra.mxu0 %v701
    %v1622 = vpop.f32.mrf.mxu0
    %v1623 = vadd.f32 %v1579, %v1622
    %1624 = vmatmul.f32.gmra.mxu0 %v703
    %v1625 = vpop.f32.mrf.mxu0
    %v1626 = vadd.f32 %v1582, %v1625
    %1627 = vmatmul.f32.gmra.mxu0 %v705
    %v1628 = vpop.f32.mrf.mxu0
    %v1629 = vadd.f32 %v1585, %v1628
    %1630 = vmatmul.f32.gmra.mxu0 %v707
    %v1631 = vpop.f32.mrf.mxu0
    %v1632 = vadd.f32 %v1588, %v1631
    %1633 = vmatmul.f32.gmra.mxu0 %v709
    %v1634 = vpop.f32.mrf.mxu0
    %v1635 = vadd.f32 %v1591, %v1634
    %1636 = vmatmul.f32.gmra.mxu0 %v711
    %v1637 = vpop.f32.mrf.mxu0
    %v1638 = vadd.f32 %v1594, %v1637
    %1639 = vdwg.mxu0
    %1640 = vmatpush.msra.mxu0 %v1165
    %1641 = vmatpush.msra.mxu0 %v1163
    %1642 = vmatpush.msra.mxu0 %v1161
    %1643 = vmatpush.msra.mxu0 %v1159
    %1644 = vmatpush.msra.mxu0 %v1157
    %1645 = vmatpush.msra.mxu0 %v1155
    %1646 = vmatpush.msra.mxu0 %v1153
    %1647 = vmatpush.msra.mxu0 %v1151
    %1648 = vmatpush.msra.mxu0 %v1149
    %1649 = vmatpush.msra.mxu0 %v1147
    %1650 = vmatpush.msra.mxu0 %v1145
    %1651 = vmatpush.msra.mxu0 %v1143
    %1652 = vmatpush.msra.mxu0 %v1141
    %1653 = vmatpush.msra.mxu0 %v1139
    %1654 = vmatpush.msra.mxu0 %v1137
    %1655 = vmatpush.msra.mxu0 %v1135
    %1656 = vmatmul.f32.gmra.mxu0 %v956
    %v1657 = vpop.f32.mrf.mxu0
    %v1658 = vadd.f32 %v1614, %v1657
    %1659 = vmatmul.f32.gmra.mxu0 %v961
    %v1660 = vpop.f32.mrf.mxu0
    %v1661 = vadd.f32 %v1617, %v1660
    %1662 = vmatmul.f32.gmra.mxu0 %v965
    %v1663 = vpop.f32.mrf.mxu0
    %v1664 = vadd.f32 %v1620, %v1663
    %1665 = vmatmul.f32.gmra.mxu0 %v969
    %v1666 = vpop.f32.mrf.mxu0
    %v1667 = vadd.f32 %v1623, %v1666
    %1668 = vmatmul.f32.gmra.mxu0 %v973
    %v1669 = vpop.f32.mrf.mxu0
    %v1670 = vadd.f32 %v1626, %v1669
    %1671 = vmatmul.f32.gmra.mxu0 %v977
    %v1672 = vpop.f32.mrf.mxu0
    %v1673 = vadd.f32 %v1629, %v1672
    %1674 = vmatmul.f32.gmra.mxu0 %v981
    %v1675 = vpop.f32.mrf.mxu0
    %v1676 = vadd.f32 %v1632, %v1675
    %1677 = vmatmul.f32.gmra.mxu0 %v985
    %v1678 = vpop.f32.mrf.mxu0
    %v1679 = vadd.f32 %v1635, %v1678
    %1680 = vmatmul.f32.gmra.mxu0 %v984
    %v1681 = vpop.f32.mrf.mxu0
    %v1682 = vadd.f32 %v1638, %v1681
    %1683 = vdwg.mxu0
    %1684 = vmatpush.msra.mxu0 %v1197
    %1685 = vmatpush.msra.mxu0 %v1195
    %1686 = vmatpush.msra.mxu0 %v1193
    %1687 = vmatpush.msra.mxu0 %v1191
    %1688 = vmatpush.msra.mxu0 %v1189
    %1689 = vmatpush.msra.mxu0 %v1187
    %1690 = vmatpush.msra.mxu0 %v1185
    %1691 = vmatpush.msra.mxu0 %v1183
    %1692 = vmatpush.msra.mxu0 %v1181
    %1693 = vmatpush.msra.mxu0 %v1179
    %1694 = vmatpush.msra.mxu0 %v1177
    %1695 = vmatpush.msra.mxu0 %v1175
    %1696 = vmatpush.msra.mxu0 %v1173
    %1697 = vmatpush.msra.mxu0 %v1171
    %1698 = vmatpush.msra.mxu0 %v1169
    %1699 = vmatpush.msra.mxu0 %v1167
    %1700 = vmatmul.f32.gmra.mxu0 %v959
    %v1701 = vpop.f32.mrf.mxu0
    %v1702 = vadd.f32 %v1658, %v1701
    %1703 = vmatmul.f32.gmra.mxu0 %v963
    %v1704 = vpop.f32.mrf.mxu0
    %v1705 = vadd.f32 %v1661, %v1704
    %1706 = vmatmul.f32.gmra.mxu0 %v967
    %v1707 = vpop.f32.mrf.mxu0
    %v1708 = vadd.f32 %v1664, %v1707
    %1709 = vmatmul.f32.gmra.mxu0 %v971
    %v1710 = vpop.f32.mrf.mxu0
    %v1711 = vadd.f32 %v1667, %v1710
    %1712 = vmatmul.f32.gmra.mxu0 %v975
    %v1713 = vpop.f32.mrf.mxu0
    %v1714 = vadd.f32 %v1670, %v1713
    %1715 = vmatmul.f32.gmra.mxu0 %v979
    %v1716 = vpop.f32.mrf.mxu0
    %v1717 = vadd.f32 %v1673, %v1716
    %1718 = vmatmul.f32.gmra.mxu0 %v983
    %v1719 = vpop.f32.mrf.mxu0
    %v1720 = vadd.f32 %v1676, %v1719
    %1721 = vmatmul.f32.gmra.mxu0 %v987
    %v1722 = vpop.f32.mrf.mxu0
    %v1723 = vadd.f32 %v1679, %v1722
    %1724 = vmatmul.f32.gmra.mxu0 %v986
    %v1725 = vpop.f32.mrf.mxu0
    %v1726 = vadd.f32 %v1682, %v1725
    %1727 = vdwg.mxu0
    %v1728 = vadd.f32 %v1438, %v756
    %v1729 = vadd.f32 %v1702, %v800
    %v1730 = vadd.f32 %v1441, %v759
    %v1731 = vadd.f32 %v1705, %v803
    %v1732 = vadd.f32 %v1444, %v762
    %v1733 = vadd.f32 %v1708, %v806
    %v1734 = vadd.f32 %v1447, %v765
    %v1735 = vadd.f32 %v1711, %v809
    %v1736 = vadd.f32 %v1450, %v768
    %v1737 = vadd.f32 %v1714, %v812
    %v1738 = vadd.f32 %v1453, %v771
    %v1739 = vadd.f32 %v1717, %v815
    %v1740 = vadd.f32 %v1456, %v774
    %v1741 = vadd.f32 %v1720, %v818
    %v1742 = vadd.f32 %v1459, %v777
    %v1743 = vadd.f32 %v1723, %v821
    %v1744 = vadd.f32 %v1462, %v780
    %v1745 = vadd.f32 %v1726, %v824
    %v1746 = vmax.f32 %v1728, 0.0
    %v1747 = vmax.f32 %v1729, 0.0
    %v1748 = vmax.f32 %v1730, 0.0
    %v1749 = vmax.f32 %v1731, 0.0
    %v1750 = vmax.f32 %v1732, 0.0
    %v1751 = vmax.f32 %v1733, 0.0
    %v1752 = vmax.f32 %v1734, 0.0
    %v1753 = vmax.f32 %v1735, 0.0
    %v1754 = vmax.f32 %v1736, 0.0
    %v1755 = vmax.f32 %v1737, 0.0
    %v1756 = vmax.f32 %v1738, 0.0
    %v1757 = vmax.f32 %v1739, 0.0
    %v1758 = vmax.f32 %v1740, 0.0
    %v1759 = vmax.f32 %v1741, 0.0
    %v1760 = vmax.f32 %v1742, 0.0
    %v1761 = vmax.f32 %v1743, 0.0
    %v1762 = vmax.f32 %v1744, 0.0
    %v1763 = vmax.f32 %v1745, 0.0
    %v1764 = vld [vmem:[#allocation2 + $0x8a0] sm:$0xff]
    %v1765 = vld [vmem:[#allocation2 + $0x8a8] sm:$0xff]
    %v1766 = vld [vmem:[#allocation2 + $0x8b0] sm:$0xff]
    %v1767 = vld [vmem:[#allocation2 + $0x8b8] sm:$0xff]
    %v1768 = vld [vmem:[#allocation2 + $0x8c0] sm:$0xff]
    %v1769 = vld [vmem:[#allocation2 + $0x8c8] sm:$0xff]
    %v1770 = vld [vmem:[#allocation2 + $0x8d0] sm:$0xff]
    %v1771 = vld [vmem:[#allocation2 + $0x8d8] sm:$0xff]
    %v1772 = vld [vmem:[#allocation2 + $0x8e0] sm:$0xff]
    %v1773 = vld [vmem:[#allocation2 + $0x8e8] sm:$0xff]
    %v1774 = vld [vmem:[#allocation2 + $0x8f0] sm:$0xff]
    %v1775 = vld [vmem:[#allocation2 + $0x8f8] sm:$0xff]
    %v1776 = vld [vmem:[#allocation2 + $0x900] sm:$0xff]
    %v1777 = vld [vmem:[#allocation2 + $0x908] sm:$0xff]
    %v1778 = vld [vmem:[#allocation2 + $0x910] sm:$0xff]
    %v1779 = vld [vmem:[#allocation2 + $0x918] sm:$0xff]
    %v1780 = vld [vmem:[#allocation2 + $0x920] sm:$0xff]
    %v1781 = vld [vmem:[#allocation2 + $0x928] sm:$0xff]
    %v1782 = vld [vmem:[#allocation2 + $0x930] sm:$0xff]
    %v1783 = vld [vmem:[#allocation2 + $0x938] sm:$0xff]
    %v1784 = vld [vmem:[#allocation2 + $0x940] sm:$0xff]
    %v1785 = vld [vmem:[#allocation2 + $0x948] sm:$0xff]
    %v1786 = vld [vmem:[#allocation2 + $0x950] sm:$0xff]
    %v1787 = vld [vmem:[#allocation2 + $0x958] sm:$0xff]
    %v1788 = vld [vmem:[#allocation2 + $0x960] sm:$0xff]
    %v1789 = vld [vmem:[#allocation2 + $0x968] sm:$0xff]
    %v1790 = vld [vmem:[#allocation2 + $0x970] sm:$0xff]
    %v1791 = vld [vmem:[#allocation2 + $0x978] sm:$0xff]
    %v1792 = vld [vmem:[#allocation2 + $0x980] sm:$0xff]
    %v1793 = vld [vmem:[#allocation2 + $0x988] sm:$0xff]
    %v1794 = vld [vmem:[#allocation2 + $0x990] sm:$0xff]
    %v1795 = vld [vmem:[#allocation2 + $0x998] sm:$0xff]
    %v1796 = vld [vmem:[#allocation2 + $0x9a0] sm:$0xff]
    %v1797 = vld [vmem:[#allocation2 + $0x9a8] sm:$0xff]
    %v1798 = vld [vmem:[#allocation2 + $0x9b0] sm:$0xff]
    %v1799 = vld [vmem:[#allocation2 + $0x9b8] sm:$0xff]
    %v1800 = vld [vmem:[#allocation2 + $0x9c0] sm:$0xff]
    %v1801 = vld [vmem:[#allocation2 + $0x9c8] sm:$0xff]
    %v1802 = vld [vmem:[#allocation2 + $0x9d0] sm:$0xff]
    %v1803 = vld [vmem:[#allocation2 + $0x9d8] sm:$0xff]
    %v1804 = vld [vmem:[#allocation2 + $0x9e0] sm:$0xff]
    %v1805 = vld [vmem:[#allocation2 + $0x9e8] sm:$0xff]
    %v1806 = vld [vmem:[#allocation2 + $0x9f0] sm:$0xff]
    %v1807 = vld [vmem:[#allocation2 + $0x9f8] sm:$0xff]
    %v1808 = vld [vmem:[#allocation2 + $0xa00] sm:$0xff]
    %v1809 = vld [vmem:[#allocation2 + $0xa08] sm:$0xff]
    %v1810 = vld [vmem:[#allocation2 + $0xa10] sm:$0xff]
    %v1811 = vld [vmem:[#allocation2 + $0xa18] sm:$0xff]
    %v1812 = vld [vmem:[#allocation2 + $0xa20] sm:$0xff]
    %v1813 = vld [vmem:[#allocation2 + $0xa28] sm:$0xff]
    %v1814 = vld [vmem:[#allocation2 + $0xa30] sm:$0xff]
    %v1815 = vld [vmem:[#allocation2 + $0xa38] sm:$0xff]
    %v1816 = vld [vmem:[#allocation2 + $0xa40] sm:$0xff]
    %v1817 = vld [vmem:[#allocation2 + $0xa48] sm:$0xff]
    %v1818 = vld [vmem:[#allocation2 + $0xa50] sm:$0xff]
    %v1819 = vld [vmem:[#allocation2 + $0xa58] sm:$0xff]
    %v1820 = vld [vmem:[#allocation2 + $0xa60] sm:$0xff]
    %v1821 = vld [vmem:[#allocation2 + $0xa68] sm:$0xff]
    %v1822 = vld [vmem:[#allocation2 + $0xa70] sm:$0xff]
    %v1823 = vld [vmem:[#allocation2 + $0xa78] sm:$0xff]
    %v1824 = vld [vmem:[#allocation2 + $0xa80] sm:$0xff]
    %v1825 = vld [vmem:[#allocation2 + $0xa88] sm:$0xff]
    %v1826 = vld [vmem:[#allocation2 + $0xa90] sm:$0xff]
    %v1827 = vld [vmem:[#allocation2 + $0xa98] sm:$0xff]
    %1828 = vmatpush.msra.mxu0 %v1794
    %1829 = vmatpush.msra.mxu0 %v1792
    %1830 = vmatpush.msra.mxu0 %v1790
    %1831 = vmatpush.msra.mxu0 %v1788
    %1832 = vmatpush.msra.mxu0 %v1786
    %1833 = vmatpush.msra.mxu0 %v1784
    %1834 = vmatpush.msra.mxu0 %v1782
    %1835 = vmatpush.msra.mxu0 %v1780
    %1836 = vmatpush.msra.mxu0 %v1778
    %1837 = vmatpush.msra.mxu0 %v1776
    %1838 = vmatpush.msra.mxu0 %v1774
    %1839 = vmatpush.msra.mxu0 %v1772
    %1840 = vmatpush.msra.mxu0 %v1770
    %1841 = vmatpush.msra.mxu0 %v1768
    %1842 = vmatpush.msra.mxu0 %v1766
    %1843 = vmatpush.msra.mxu0 %v1764
    %1844 = vmatmul.f32.gmra.mxu0 %v1746
    %v1845 = vpop.f32.mrf.mxu0
    %v1846 = vadd.f32 0.0, %v1845
    %1847 = vmatmul.f32.gmra.mxu0 %v1748
    %v1848 = vpop.f32.mrf.mxu0
    %v1849 = vadd.f32 0.0, %v1848
    %1850 = vmatmul.f32.gmra.mxu0 %v1750
    %v1851 = vpop.f32.mrf.mxu0
    %v1852 = vadd.f32 0.0, %v1851
    %1853 = vmatmul.f32.gmra.mxu0 %v1752
    %v1854 = vpop.f32.mrf.mxu0
    %v1855 = vadd.f32 0.0, %v1854
    %1856 = vmatmul.f32.gmra.mxu0 %v1754
    %v1857 = vpop.f32.mrf.mxu0
    %v1858 = vadd.f32 0.0, %v1857
    %1859 = vmatmul.f32.gmra.mxu0 %v1756
    %v1860 = vpop.f32.mrf.mxu0
    %v1861 = vadd.f32 0.0, %v1860
    %1862 = vmatmul.f32.gmra.mxu0 %v1758
    %v1863 = vpop.f32.mrf.mxu0
    %v1864 = vadd.f32 0.0, %v1863
    %1865 = vmatmul.f32.gmra.mxu0 %v1760
    %v1866 = vpop.f32.mrf.mxu0
    %v1867 = vadd.f32 0.0, %v1866
    %1868 = vmatmul.f32.gmra.mxu0 %v1762
    %v1869 = vpop.f32.mrf.mxu0
    %v1870 = vadd.f32 0.0, %v1869
    %1871 = vdwg.mxu0
    %1872 = vmatpush.msra.mxu0 %v1826
    %1873 = vmatpush.msra.mxu0 %v1824
    %1874 = vmatpush.msra.mxu0 %v1822
    %1875 = vmatpush.msra.mxu0 %v1820
    %1876 = vmatpush.msra.mxu0 %v1818
    %1877 = vmatpush.msra.mxu0 %v1816
    %1878 = vmatpush.msra.mxu0 %v1814
    %1879 = vmatpush.msra.mxu0 %v1812
    %1880 = vmatpush.msra.mxu0 %v1810
    %1881 = vmatpush.msra.mxu0 %v1808
    %1882 = vmatpush.msra.mxu0 %v1806
    %1883 = vmatpush.msra.mxu0 %v1804
    %1884 = vmatpush.msra.mxu0 %v1802
    %1885 = vmatpush.msra.mxu0 %v1800
    %1886 = vmatpush.msra.mxu0 %v1798
    %1887 = vmatpush.msra.mxu0 %v1796
    %1888 = vmatmul.f32.gmra.mxu0 %v1747
    %v1889 = vpop.f32.mrf.mxu0
    %v1890 = vadd.f32 %v1846, %v1889
    %1891 = vmatmul.f32.gmra.mxu0 %v1749
    %v1892 = vpop.f32.mrf.mxu0
    %v1893 = vadd.f32 %v1849, %v1892
    %1894 = vmatmul.f32.gmra.mxu0 %v1751
    %v1895 = vpop.f32.mrf.mxu0
    %v1896 = vadd.f32 %v1852, %v1895
    %1897 = vmatmul.f32.gmra.mxu0 %v1753
    %v1898 = vpop.f32.mrf.mxu0
    %v1899 = vadd.f32 %v1855, %v1898
    %1900 = vmatmul.f32.gmra.mxu0 %v1755
    %v1901 = vpop.f32.mrf.mxu0
    %v1902 = vadd.f32 %v1858, %v1901
    %1903 = vmatmul.f32.gmra.mxu0 %v1757
    %v1904 = vpop.f32.mrf.mxu0
    %v1905 = vadd.f32 %v1861, %v1904
    %1906 = vmatmul.f32.gmra.mxu0 %v1759
    %v1907 = vpop.f32.mrf.mxu0
    %v1908 = vadd.f32 %v1864, %v1907
    %1909 = vmatmul.f32.gmra.mxu0 %v1761
    %v1910 = vpop.f32.mrf.mxu0
    %v1911 = vadd.f32 %v1867, %v1910
    %1912 = vmatmul.f32.gmra.mxu0 %v1763
    %v1913 = vpop.f32.mrf.mxu0
    %v1914 = vadd.f32 %v1870, %v1913
    %1915 = vdwg.mxu0
    %1916 = vmatpush.msra.mxu0 %v1795
    %1917 = vmatpush.msra.mxu0 %v1793
    %1918 = vmatpush.msra.mxu0 %v1791
    %1919 = vmatpush.msra.mxu0 %v1789
    %1920 = vmatpush.msra.mxu0 %v1787
    %1921 = vmatpush.msra.mxu0 %v1785
    %1922 = vmatpush.msra.mxu0 %v1783
    %1923 = vmatpush.msra.mxu0 %v1781
    %1924 = vmatpush.msra.mxu0 %v1779
    %1925 = vmatpush.msra.mxu0 %v1777
    %1926 = vmatpush.msra.mxu0 %v1775
    %1927 = vmatpush.msra.mxu0 %v1773
    %1928 = vmatpush.msra.mxu0 %v1771
    %1929 = vmatpush.msra.mxu0 %v1769
    %1930 = vmatpush.msra.mxu0 %v1767
    %1931 = vmatpush.msra.mxu0 %v1765
    %1932 = vmatmul.f32.gmra.mxu0 %v1746
    %v1933 = vpop.f32.mrf.mxu0
    %v1934 = vadd.f32 0.0, %v1933
    %1935 = vmatmul.f32.gmra.mxu0 %v1748
    %v1936 = vpop.f32.mrf.mxu0
    %v1937 = vadd.f32 0.0, %v1936
    %1938 = vmatmul.f32.gmra.mxu0 %v1750
    %v1939 = vpop.f32.mrf.mxu0
    %v1940 = vadd.f32 0.0, %v1939
    %1941 = vmatmul.f32.gmra.mxu0 %v1752
    %v1942 = vpop.f32.mrf.mxu0
    %v1943 = vadd.f32 0.0, %v1942
    %1944 = vmatmul.f32.gmra.mxu0 %v1754
    %v1945 = vpop.f32.mrf.mxu0
    %v1946 = vadd.f32 0.0, %v1945
    %1947 = vmatmul.f32.gmra.mxu0 %v1756
    %v1948 = vpop.f32.mrf.mxu0
    %v1949 = vadd.f32 0.0, %v1948
    %1950 = vmatmul.f32.gmra.mxu0 %v1758
    %v1951 = vpop.f32.mrf.mxu0
    %v1952 = vadd.f32 0.0, %v1951
    %1953 = vmatmul.f32.gmra.mxu0 %v1760
    %v1954 = vpop.f32.mrf.mxu0
    %v1955 = vadd.f32 0.0, %v1954
    %1956 = vmatmul.f32.gmra.mxu0 %v1762
    %v1957 = vpop.f32.mrf.mxu0
    %v1958 = vadd.f32 0.0, %v1957
    %1959 = vdwg.mxu0
    %1960 = vmatpush.msra.mxu0 %v1827
    %1961 = vmatpush.msra.mxu0 %v1825
    %1962 = vmatpush.msra.mxu0 %v1823
    %1963 = vmatpush.msra.mxu0 %v1821
    %1964 = vmatpush.msra.mxu0 %v1819
    %1965 = vmatpush.msra.mxu0 %v1817
    %1966 = vmatpush.msra.mxu0 %v1815
    %1967 = vmatpush.msra.mxu0 %v1813
    %1968 = vmatpush.msra.mxu0 %v1811
    %1969 = vmatpush.msra.mxu0 %v1809
    %1970 = vmatpush.msra.mxu0 %v1807
    %1971 = vmatpush.msra.mxu0 %v1805
    %1972 = vmatpush.msra.mxu0 %v1803
    %1973 = vmatpush.msra.mxu0 %v1801
    %1974 = vmatpush.msra.mxu0 %v1799
    %1975 = vmatpush.msra.mxu0 %v1797
    %1976 = vmatmul.f32.gmra.mxu0 %v1747
    %v1977 = vpop.f32.mrf.mxu0
    %v1978 = vadd.f32 %v1934, %v1977
    %1979 = vmatmul.f32.gmra.mxu0 %v1749
    %v1980 = vpop.f32.mrf.mxu0
    %v1981 = vadd.f32 %v1937, %v1980
    %1982 = vmatmul.f32.gmra.mxu0 %v1751
    %v1983 = vpop.f32.mrf.mxu0
    %v1984 = vadd.f32 %v1940, %v1983
    %1985 = vmatmul.f32.gmra.mxu0 %v1753
    %v1986 = vpop.f32.mrf.mxu0
    %v1987 = vadd.f32 %v1943, %v1986
    %1988 = vmatmul.f32.gmra.mxu0 %v1755
    %v1989 = vpop.f32.mrf.mxu0
    %v1990 = vadd.f32 %v1946, %v1989
    %1991 = vmatmul.f32.gmra.mxu0 %v1757
    %v1992 = vpop.f32.mrf.mxu0
    %v1993 = vadd.f32 %v1949, %v1992
    %1994 = vmatmul.f32.gmra.mxu0 %v1759
    %v1995 = vpop.f32.mrf.mxu0
    %v1996 = vadd.f32 %v1952, %v1995
    %1997 = vmatmul.f32.gmra.mxu0 %v1761
    %v1998 = vpop.f32.mrf.mxu0
    %v1999 = vadd.f32 %v1955, %v1998
    %2000 = vmatmul.f32.gmra.mxu0 %v1763
    %v2001 = vpop.f32.mrf.mxu0
    %v2002 = vadd.f32 %v1958, %v2001
    %2003 = vdwg.mxu0
    %v2004 = vmax.f32 %v1890, %v1978
    %v2005 = vmax.f32 %v1893, %v1981
    %v2006 = vmax.f32 %v1896, %v1984
    %v2007 = vmax.f32 %v1899, %v1987
    %v2008 = vmax.f32 %v1902, %v1990
    %v2009 = vmax.f32 %v1905, %v1993
    %v2010 = vmax.f32 %v1908, %v1996
    %v2011 = vmax.f32 %v1911, %v1999
    %v2012 = vmax.f32 %v1914, %v2002
    %v2013 = vld [vmem:[#allocation2 + $0xaa0] sm:$0xff]
    %v2014 = vld [vmem:[#allocation2 + $0xab0] sm:$0xff]
    %v2015 = vld [vmem:[#allocation2 + $0xac0] sm:$0xff]
    %v2016 = vld [vmem:[#allocation2 + $0xad0] sm:$0xff]
    %v2017 = vld [vmem:[#allocation2 + $0xae0] sm:$0xff]
    %v2018 = vld [vmem:[#allocation2 + $0xaf0] sm:$0xff]
    %v2019 = vld [vmem:[#allocation2 + $0xb00] sm:$0xff]
    %v2020 = vld [vmem:[#allocation2 + $0xb10] sm:$0xff]
    %v2022 = vsel %vm135, %v2013, 0
    %v2025 = vsel %vm135, %v2014, 0
    %v2028 = vsel %vm135, %v2015, 0
    %v2031 = vsel %vm135, %v2016, 0
    %v2034 = vsel %vm135, %v2017, 0
    %v2037 = vsel %vm135, %v2018, 0
    %v2040 = vsel %vm135, %v2019, 0
    %v2043 = vsel %vm135, %v2020, 0
    %v2046 = vsel %vm163, %v2012, 0
    %2048 = vmatpush.msra.mxu0 0.0
    %2049 = vmatpush.msra.mxu0 0.0
    %2050 = vmatpush.msra.mxu0 0.0
    %2051 = vmatpush.msra.mxu0 0.0
    %2052 = vmatpush.msra.mxu0 0.0
    %2053 = vmatpush.msra.mxu0 0.0
    %2054 = vmatpush.msra.mxu0 0.0
    %2055 = vmatpush.msra.mxu0 %v2046
    %2056 = vmatpush.msra.mxu0 %v2011
    %2057 = vmatpush.msra.mxu0 %v2010
    %2058 = vmatpush.msra.mxu0 %v2009
    %2059 = vmatpush.msra.mxu0 %v2008
    %2060 = vmatpush.msra.mxu0 %v2007
    %2061 = vmatpush.msra.mxu0 %v2006
    %2062 = vmatpush.msra.mxu0 %v2005
    %2063 = vmatpush.msra.mxu0 %v2004
    %2064 = vmatmul.f32.gmra.mxu0 %v2022
    %v2065 = vpop.f32.mrf.mxu0
    %v2066 = vadd.f32 0.0, %v2065
    %2067 = vmatmul.f32.gmra.mxu0 %v2025
    %v2068 = vpop.f32.mrf.mxu0
    %v2069 = vadd.f32 0.0, %v2068
    %2070 = vmatmul.f32.gmra.mxu0 %v2028
    %v2071 = vpop.f32.mrf.mxu0
    %v2072 = vadd.f32 0.0, %v2071
    %2073 = vmatmul.f32.gmra.mxu0 %v2031
    %v2074 = vpop.f32.mrf.mxu0
    %v2075 = vadd.f32 0.0, %v2074
    %2076 = vmatmul.f32.gmra.mxu0 %v2034
    %v2077 = vpop.f32.mrf.mxu0
    %v2078 = vadd.f32 0.0, %v2077
    %2079 = vmatmul.f32.gmra.mxu0 %v2037
    %v2080 = vpop.f32.mrf.mxu0
    %v2081 = vadd.f32 0.0, %v2080
    %2082 = vmatmul.f32.gmra.mxu0 %v2040
    %v2083 = vpop.f32.mrf.mxu0
    %v2084 = vadd.f32 0.0, %v2083
    %2085 = vmatmul.f32.gmra.mxu0 %v2043
    %v2086 = vpop.f32.mrf.mxu0
    %v2087 = vadd.f32 0.0, %v2086
    %2088 = vdwg.mxu0
    %v2089 = vmax.f32 %v2066, %v2078
    %v2090 = vmax.f32 %v2069, %v2081
    %v2091 = vmax.f32 %v2072, %v2084
    %v2092 = vmax.f32 %v2075, %v2087
    %v2093 = vld [vmem:[#allocation2 + $0x1120] sm:$0x7]
    %v2098 = vrot.slane %v2089, 7
    %v2099 = vrot.slane %v2090, 7
    %v2100 = vsel %vm287, %v2098, %v2099
    %v2101 = vrot.slane %v2091, 7
    %v2102 = vsel %vm287, %v2099, %v2101
    %v2103 = vrot.slane %v2092, 7
    %v2104 = vsel %vm287, %v2101, %v2103
    %v2110 = vsel %vm287, 0.0, %v2098
    %v2111 = vsel %vm287, %v2103, 0.0
    %vm2112 = vcmp.eq.s32.totalorder %v318, 15
    %vm2113 = vcmp.eq.s32.totalorder %v319, 15
    %vm2114 = vcmp.eq.s32.totalorder %v320, 15
    %vm2115 = vcmp.eq.s32.totalorder %v321, 15
    %vm2116 = vcmp.eq.s32.totalorder %v318, 16
    %vm2117 = vcmp.eq.s32.totalorder %v319, 16
    %vm2118 = vcmp.eq.s32.totalorder %v320, 16
    %vm2119 = vcmp.eq.s32.totalorder %v321, 16
    %vm2120 = vmor %vm327, %vm2116
    %vm2121 = vmor %vm328, %vm2117
    %vm2122 = vmor %vm329, %vm2118
    %vm2123 = vmor %vm330, %vm2119
    %vm2124 = vcmp.eq.s32.totalorder %v318, 31
    %vm2125 = vcmp.eq.s32.totalorder %v319, 31
    %vm2126 = vcmp.eq.s32.totalorder %v320, 31
    %vm2127 = vcmp.eq.s32.totalorder %v321, 31
    %vm2128 = vmor %vm2112, %vm2124
    %vm2129 = vmor %vm2113, %vm2125
    %vm2130 = vmor %vm2114, %vm2126
    %vm2131 = vmor %vm2115, %vm2127
    %v2132 = vsel %vm2120, 0.0, 1.0
    %v2133 = vsel %vm2121, 0.0, 1.0
    %v2134 = vsel %vm2122, 0.0, 1.0
    %v2135 = vsel %vm2123, 0.0, 1.0
    %v2136 = vmul.f32 %v2110, %v2132
    %v2137 = vmul.f32 %v2100, %v2133
    %v2138 = vmul.f32 %v2102, %v2134
    %v2139 = vmul.f32 %v2104, %v2135
    %v2140 = vsel %vm2128, 0.0, 1.0
    %v2141 = vsel %vm2129, 0.0, 1.0
    %v2142 = vsel %vm2130, 0.0, 1.0
    %v2143 = vsel %vm2131, 0.0, 1.0
    %v2148 = vrot.slane %v2140, 6
    %v2149 = vrot.slane %v2141, 6
    %v2150 = vsel %vm163, %v2148, %v2149
    %v2151 = vrot.slane %v2142, 6
    %v2152 = vsel %vm163, %v2149, %v2151
    %v2153 = vrot.slane %v2143, 6
    %v2154 = vsel %vm163, %v2151, %v2153
    %v2160 = vmul.f32 %v2110, %v2148
    %v2161 = vmul.f32 %v2100, %v2150
    %v2162 = vmul.f32 %v2102, %v2152
    %v2163 = vmul.f32 %v2104, %v2154
    %v2164 = vmul.f32 %v2111, %v2153
    %v2170 = vrot.slane %v2160, 2
    %v2171 = vrot.slane %v2161, 2
    %v2172 = vsel %vm488, %v2170, %v2171
    %v2173 = vrot.slane %v2162, 2
    %v2174 = vsel %vm488, %v2171, %v2173
    %v2175 = vrot.slane %v2163, 2
    %v2176 = vsel %vm488, %v2173, %v2175
    %v2177 = vrot.slane %v2164, 2
    %v2178 = vsel %vm488, %v2175, %v2177
    %v2183 = vld [vmem:[#allocation2 + $0xb20] sm:$0xff]
    %v2184 = vld [vmem:[#allocation2 + $0xb30] sm:$0xff]
    %v2185 = vld [vmem:[#allocation2 + $0xb40] sm:$0xff]
    %v2186 = vld [vmem:[#allocation2 + $0xb50] sm:$0xff]
    %v2187 = vld [vmem:[#allocation2 + $0xb60] sm:$0xff]
    %v2188 = vld [vmem:[#allocation2 + $0xb70] sm:$0xff]
    %v2189 = vld [vmem:[#allocation2 + $0xb80] sm:$0xff]
    %v2190 = vld [vmem:[#allocation2 + $0xb90] sm:$0xff]
    %v2191 = vld [vmem:[#allocation2 + $0xba0] sm:$0xff]
    %v2192 = vld [vmem:[#allocation2 + $0xbb0] sm:$0xff]
    %v2193 = vld [vmem:[#allocation2 + $0xbc0] sm:$0xff]
    %v2194 = vld [vmem:[#allocation2 + $0xbd0] sm:$0xff]
    %v2195 = vld [vmem:[#allocation2 + $0xbe0] sm:$0xff]
    %v2196 = vld [vmem:[#allocation2 + $0xbf0] sm:$0xff]
    %v2197 = vld [vmem:[#allocation2 + $0xc00] sm:$0xff]
    %v2198 = vld [vmem:[#allocation2 + $0xc10] sm:$0xff]
    %v2199 = vld [vmem:[#allocation2 + $0xc20] sm:$0xff]
    %v2200 = vld [vmem:[#allocation2 + $0xc30] sm:$0xff]
    %v2201 = vld [vmem:[#allocation2 + $0xc40] sm:$0xff]
    %v2202 = vld [vmem:[#allocation2 + $0xc50] sm:$0xff]
    %v2203 = vld [vmem:[#allocation2 + $0xc60] sm:$0xff]
    %v2204 = vld [vmem:[#allocation2 + $0xc70] sm:$0xff]
    %v2205 = vld [vmem:[#allocation2 + $0xc80] sm:$0xff]
    %v2206 = vld [vmem:[#allocation2 + $0xc90] sm:$0xff]
    %v2207 = vld [vmem:[#allocation2 + $0xca0] sm:$0xff]
    %v2208 = vld [vmem:[#allocation2 + $0xcb0] sm:$0xff]
    %v2209 = vld [vmem:[#allocation2 + $0xcc0] sm:$0xff]
    %v2210 = vld [vmem:[#allocation2 + $0xcd0] sm:$0xff]
    %v2211 = vld [vmem:[#allocation2 + $0xce0] sm:$0xff]
    %v2212 = vld [vmem:[#allocation2 + $0xcf0] sm:$0xff]
    %v2213 = vld [vmem:[#allocation2 + $0xd00] sm:$0xff]
    %v2214 = vld [vmem:[#allocation2 + $0xd10] sm:$0xff]
    %v2215 = vld [vmem:[#allocation2 + $0xd20] sm:$0xff]
    %v2216 = vld [vmem:[#allocation2 + $0xd30] sm:$0xff]
    %v2217 = vld [vmem:[#allocation2 + $0xd40] sm:$0xff]
    %v2218 = vld [vmem:[#allocation2 + $0xd50] sm:$0xff]
    %v2219 = vld [vmem:[#allocation2 + $0xd60] sm:$0xff]
    %v2220 = vld [vmem:[#allocation2 + $0xd70] sm:$0xff]
    %v2221 = vld [vmem:[#allocation2 + $0xd80] sm:$0xff]
    %v2222 = vld [vmem:[#allocation2 + $0xd90] sm:$0xff]
    %v2223 = vld [vmem:[#allocation2 + $0xda0] sm:$0xff]
    %v2224 = vld [vmem:[#allocation2 + $0xdb0] sm:$0xff]
    %v2225 = vld [vmem:[#allocation2 + $0xdc0] sm:$0xff]
    %v2226 = vld [vmem:[#allocation2 + $0xdd0] sm:$0xff]
    %v2227 = vld [vmem:[#allocation2 + $0xde0] sm:$0xff]
    %v2228 = vld [vmem:[#allocation2 + $0xdf0] sm:$0xff]
    %v2229 = vld [vmem:[#allocation2 + $0xe00] sm:$0xff]
    %v2230 = vld [vmem:[#allocation2 + $0xe10] sm:$0xff]
    %v2231 = vperm.slane %v2093, 0
    %2232 = vmatpush.msra.mxu0 %v2198
    %2233 = vmatpush.msra.mxu0 %v2197
    %2234 = vmatpush.msra.mxu0 %v2196
    %2235 = vmatpush.msra.mxu0 %v2195
    %2236 = vmatpush.msra.mxu0 %v2194
    %2237 = vmatpush.msra.mxu0 %v2193
    %2238 = vmatpush.msra.mxu0 %v2192
    %2239 = vmatpush.msra.mxu0 %v2191
    %2240 = vmatpush.msra.mxu0 %v2190
    %2241 = vmatpush.msra.mxu0 %v2189
    %2242 = vmatpush.msra.mxu0 %v2188
    %2243 = vmatpush.msra.mxu0 %v2187
    %2244 = vmatpush.msra.mxu0 %v2186
    %2245 = vmatpush.msra.mxu0 %v2185
    %2246 = vmatpush.msra.mxu0 %v2184
    %2247 = vmatpush.msra.mxu0 %v2183
    %2248 = vmatmul.f32.gmra.mxu0 %v2136
    %v2249 = vpop.f32.mrf.mxu0
    %v2250 = vadd.f32 %v2231, %v2249
    %2251 = vmatmul.f32.gmra.mxu0 %v2137
    %v2252 = vpop.f32.mrf.mxu0
    %v2253 = vadd.f32 %v2231, %v2252
    %2254 = vmatmul.f32.gmra.mxu0 %v2138
    %v2255 = vpop.f32.mrf.mxu0
    %v2256 = vadd.f32 %v2231, %v2255
    %2257 = vmatmul.f32.gmra.mxu0 %v2139
    %v2258 = vpop.f32.mrf.mxu0
    %v2259 = vadd.f32 %v2231, %v2258
    %2260 = vdwg.mxu0
    %2261 = vmatpush.msra.mxu0 %v2214
    %2262 = vmatpush.msra.mxu0 %v2213
    %2263 = vmatpush.msra.mxu0 %v2212
    %2264 = vmatpush.msra.mxu0 %v2211
    %2265 = vmatpush.msra.mxu0 %v2210
    %2266 = vmatpush.msra.mxu0 %v2209
    %2267 = vmatpush.msra.mxu0 %v2208
    %2268 = vmatpush.msra.mxu0 %v2207
    %2269 = vmatpush.msra.mxu0 %v2206
    %2270 = vmatpush.msra.mxu0 %v2205
    %2271 = vmatpush.msra.mxu0 %v2204
    %2272 = vmatpush.msra.mxu0 %v2203
    %2273 = vmatpush.msra.mxu0 %v2202
    %2274 = vmatpush.msra.mxu0 %v2201
    %2275 = vmatpush.msra.mxu0 %v2200
    %2276 = vmatpush.msra.mxu0 %v2199
    %2277 = vmatmul.f32.gmra.mxu0 %v2089
    %v2278 = vpop.f32.mrf.mxu0
    %v2279 = vadd.f32 %v2250, %v2278
    %2280 = vmatmul.f32.gmra.mxu0 %v2090
    %v2281 = vpop.f32.mrf.mxu0
    %v2282 = vadd.f32 %v2253, %v2281
    %2283 = vmatmul.f32.gmra.mxu0 %v2091
    %v2284 = vpop.f32.mrf.mxu0
    %v2285 = vadd.f32 %v2256, %v2284
    %2286 = vmatmul.f32.gmra.mxu0 %v2092
    %v2287 = vpop.f32.mrf.mxu0
    %v2288 = vadd.f32 %v2259, %v2287
    %2289 = vdwg.mxu0
    %2290 = vmatpush.msra.mxu0 %v2230
    %2291 = vmatpush.msra.mxu0 %v2229
    %2292 = vmatpush.msra.mxu0 %v2228
    %2293 = vmatpush.msra.mxu0 %v2227
    %2294 = vmatpush.msra.mxu0 %v2226
    %2295 = vmatpush.msra.mxu0 %v2225
    %2296 = vmatpush.msra.mxu0 %v2224
    %2297 = vmatpush.msra.mxu0 %v2223
    %2298 = vmatpush.msra.mxu0 %v2222
    %2299 = vmatpush.msra.mxu0 %v2221
    %2300 = vmatpush.msra.mxu0 %v2220
    %2301 = vmatpush.msra.mxu0 %v2219
    %2302 = vmatpush.msra.mxu0 %v2218
    %2303 = vmatpush.msra.mxu0 %v2217
    %2304 = vmatpush.msra.mxu0 %v2216
    %2305 = vmatpush.msra.mxu0 %v2215
    %2306 = vmatmul.f32.gmra.mxu0 %v2172
    %v2307 = vpop.f32.mrf.mxu0
    %v2308 = vadd.f32 %v2279, %v2307
    %2309 = vmatmul.f32.gmra.mxu0 %v2174
    %v2310 = vpop.f32.mrf.mxu0
    %v2311 = vadd.f32 %v2282, %v2310
    %2312 = vmatmul.f32.gmra.mxu0 %v2176
    %v2313 = vpop.f32.mrf.mxu0
    %v2314 = vadd.f32 %v2285, %v2313
    %2315 = vmatmul.f32.gmra.mxu0 %v2178
    %v2316 = vpop.f32.mrf.mxu0
    %v2317 = vadd.f32 %v2288, %v2316
    %2318 = vdwg.mxu0
    %v2319 = vmax.f32 %v2308, 0.0
    %v2320 = vmax.f32 %v2311, 0.0
    %v2321 = vmax.f32 %v2314, 0.0
    %v2322 = vmax.f32 %v2317, 0.0
    %v2327 = vrot.slane %v2319, 7
    %v2328 = vrot.slane %v2320, 7
    %v2329 = vsel %vm287, %v2327, %v2328
    %v2330 = vrot.slane %v2321, 7
    %v2331 = vsel %vm287, %v2328, %v2330
    %v2332 = vrot.slane %v2322, 7
    %v2333 = vsel %vm287, %v2330, %v2332
    %v2339 = vsel %vm287, 0.0, %v2327
    %v2340 = vsel %vm287, %v2332, 0.0
    %v2341 = vmul.f32 %v2339, %v2132
    %v2342 = vmul.f32 %v2329, %v2133
    %v2343 = vmul.f32 %v2331, %v2134
    %v2344 = vmul.f32 %v2333, %v2135
    %v2345 = vmul.f32 %v2339, %v2148
    %v2346 = vmul.f32 %v2329, %v2150
    %v2347 = vmul.f32 %v2331, %v2152
    %v2348 = vmul.f32 %v2333, %v2154
    %v2349 = vmul.f32 %v2340, %v2153
    %v2355 = vrot.slane %v2345, 2
    %v2356 = vrot.slane %v2346, 2
    %v2357 = vsel %vm488, %v2355, %v2356
    %v2358 = vrot.slane %v2347, 2
    %v2359 = vsel %vm488, %v2356, %v2358
    %v2360 = vrot.slane %v2348, 2
    %v2361 = vsel %vm488, %v2358, %v2360
    %v2362 = vrot.slane %v2349, 2
    %v2363 = vsel %vm488, %v2360, %v2362
    %v2368 = vld [vmem:[#allocation2 + $0xe20] sm:$0xff]
    %v2369 = vld [vmem:[#allocation2 + $0xe30] sm:$0xff]
    %v2370 = vld [vmem:[#allocation2 + $0xe40] sm:$0xff]
    %v2371 = vld [vmem:[#allocation2 + $0xe50] sm:$0xff]
    %v2372 = vld [vmem:[#allocation2 + $0xe60] sm:$0xff]
    %v2373 = vld [vmem:[#allocation2 + $0xe70] sm:$0xff]
    %v2374 = vld [vmem:[#allocation2 + $0xe80] sm:$0xff]
    %v2375 = vld [vmem:[#allocation2 + $0xe90] sm:$0xff]
    %v2376 = vld [vmem:[#allocation2 + $0xea0] sm:$0xff]
    %v2377 = vld [vmem:[#allocation2 + $0xeb0] sm:$0xff]
    %v2378 = vld [vmem:[#allocation2 + $0xec0] sm:$0xff]
    %v2379 = vld [vmem:[#allocation2 + $0xed0] sm:$0xff]
    %v2380 = vld [vmem:[#allocation2 + $0xee0] sm:$0xff]
    %v2381 = vld [vmem:[#allocation2 + $0xef0] sm:$0xff]
    %v2382 = vld [vmem:[#allocation2 + $0xf00] sm:$0xff]
    %v2383 = vld [vmem:[#allocation2 + $0xf10] sm:$0xff]
    %v2384 = vld [vmem:[#allocation2 + $0xf20] sm:$0xff]
    %v2385 = vld [vmem:[#allocation2 + $0xf30] sm:$0xff]
    %v2386 = vld [vmem:[#allocation2 + $0xf40] sm:$0xff]
    %v2387 = vld [vmem:[#allocation2 + $0xf50] sm:$0xff]
    %v2388 = vld [vmem:[#allocation2 + $0xf60] sm:$0xff]
    %v2389 = vld [vmem:[#allocation2 + $0xf70] sm:$0xff]
    %v2390 = vld [vmem:[#allocation2 + $0xf80] sm:$0xff]
    %v2391 = vld [vmem:[#allocation2 + $0xf90] sm:$0xff]
    %v2392 = vld [vmem:[#allocation2 + $0xfa0] sm:$0xff]
    %v2393 = vld [vmem:[#allocation2 + $0xfb0] sm:$0xff]
    %v2394 = vld [vmem:[#allocation2 + $0xfc0] sm:$0xff]
    %v2395 = vld [vmem:[#allocation2 + $0xfd0] sm:$0xff]
    %v2396 = vld [vmem:[#allocation2 + $0xfe0] sm:$0xff]
    %v2397 = vld [vmem:[#allocation2 + $0xff0] sm:$0xff]
    %v2398 = vld [vmem:[#allocation2 + $0x1000] sm:$0xff]
    %v2399 = vld [vmem:[#allocation2 + $0x1010] sm:$0xff]
    %v2400 = vld [vmem:[#allocation2 + $0x1020] sm:$0xff]
    %v2401 = vld [vmem:[#allocation2 + $0x1030] sm:$0xff]
    %v2402 = vld [vmem:[#allocation2 + $0x1040] sm:$0xff]
    %v2403 = vld [vmem:[#allocation2 + $0x1050] sm:$0xff]
    %v2404 = vld [vmem:[#allocation2 + $0x1060] sm:$0xff]
    %v2405 = vld [vmem:[#allocation2 + $0x1070] sm:$0xff]
    %v2406 = vld [vmem:[#allocation2 + $0x1080] sm:$0xff]
    %v2407 = vld [vmem:[#allocation2 + $0x1090] sm:$0xff]
    %v2408 = vld [vmem:[#allocation2 + $0x10a0] sm:$0xff]
    %v2409 = vld [vmem:[#allocation2 + $0x10b0] sm:$0xff]
    %v2410 = vld [vmem:[#allocation2 + $0x10c0] sm:$0xff]
    %v2411 = vld [vmem:[#allocation2 + $0x10d0] sm:$0xff]
    %v2412 = vld [vmem:[#allocation2 + $0x10e0] sm:$0xff]
    %v2413 = vld [vmem:[#allocation2 + $0x10f0] sm:$0xff]
    %v2414 = vld [vmem:[#allocation2 + $0x1100] sm:$0xff]
    %v2415 = vld [vmem:[#allocation2 + $0x1110] sm:$0xff]
    %v2416 = vperm.slane %v2093, 1
    %2417 = vmatpush.msra.mxu0 %v2383
    %2418 = vmatpush.msra.mxu0 %v2382
    %2419 = vmatpush.msra.mxu0 %v2381
    %2420 = vmatpush.msra.mxu0 %v2380
    %2421 = vmatpush.msra.mxu0 %v2379
    %2422 = vmatpush.msra.mxu0 %v2378
    %2423 = vmatpush.msra.mxu0 %v2377
    %2424 = vmatpush.msra.mxu0 %v2376
    %2425 = vmatpush.msra.mxu0 %v2375
    %2426 = vmatpush.msra.mxu0 %v2374
    %2427 = vmatpush.msra.mxu0 %v2373
    %2428 = vmatpush.msra.mxu0 %v2372
    %2429 = vmatpush.msra.mxu0 %v2371
    %2430 = vmatpush.msra.mxu0 %v2370
    %2431 = vmatpush.msra.mxu0 %v2369
    %2432 = vmatpush.msra.mxu0 %v2368
    %2433 = vmatmul.f32.gmra.mxu0 %v2341
    %v2434 = vpop.f32.mrf.mxu0
    %v2435 = vadd.f32 %v2416, %v2434
    %2436 = vmatmul.f32.gmra.mxu0 %v2342
    %v2437 = vpop.f32.mrf.mxu0
    %v2438 = vadd.f32 %v2416, %v2437
    %2439 = vmatmul.f32.gmra.mxu0 %v2343
    %v2440 = vpop.f32.mrf.mxu0
    %v2441 = vadd.f32 %v2416, %v2440
    %2442 = vmatmul.f32.gmra.mxu0 %v2344
    %v2443 = vpop.f32.mrf.mxu0
    %v2444 = vadd.f32 %v2416, %v2443
    %2445 = vdwg.mxu0
    %2446 = vmatpush.msra.mxu0 %v2399
    %2447 = vmatpush.msra.mxu0 %v2398
    %2448 = vmatpush.msra.mxu0 %v2397
    %2449 = vmatpush.msra.mxu0 %v2396
    %2450 = vmatpush.msra.mxu0 %v2395
    %2451 = vmatpush.msra.mxu0 %v2394
    %2452 = vmatpush.msra.mxu0 %v2393
    %2453 = vmatpush.msra.mxu0 %v2392
    %2454 = vmatpush.msra.mxu0 %v2391
    %2455 = vmatpush.msra.mxu0 %v2390
    %2456 = vmatpush.msra.mxu0 %v2389
    %2457 = vmatpush.msra.mxu0 %v2388
    %2458 = vmatpush.msra.mxu0 %v2387
    %2459 = vmatpush.msra.mxu0 %v2386
    %2460 = vmatpush.msra.mxu0 %v2385
    %2461 = vmatpush.msra.mxu0 %v2384
    %2462 = vmatmul.f32.gmra.mxu0 %v2319
    %v2463 = vpop.f32.mrf.mxu0
    %v2464 = vadd.f32 %v2435, %v2463
    %2465 = vmatmul.f32.gmra.mxu0 %v2320
    %v2466 = vpop.f32.mrf.mxu0
    %v2467 = vadd.f32 %v2438, %v2466
    %2468 = vmatmul.f32.gmra.mxu0 %v2321
    %v2469 = vpop.f32.mrf.mxu0
    %v2470 = vadd.f32 %v2441, %v2469
    %2471 = vmatmul.f32.gmra.mxu0 %v2322
    %v2472 = vpop.f32.mrf.mxu0
    %v2473 = vadd.f32 %v2444, %v2472
    %2474 = vdwg.mxu0
    %2475 = vmatpush.msra.mxu0 %v2415
    %2476 = vmatpush.msra.mxu0 %v2414
    %2477 = vmatpush.msra.mxu0 %v2413
    %2478 = vmatpush.msra.mxu0 %v2412
    %2479 = vmatpush.msra.mxu0 %v2411
    %2480 = vmatpush.msra.mxu0 %v2410
    %2481 = vmatpush.msra.mxu0 %v2409
    %2482 = vmatpush.msra.mxu0 %v2408
    %2483 = vmatpush.msra.mxu0 %v2407
    %2484 = vmatpush.msra.mxu0 %v2406
    %2485 = vmatpush.msra.mxu0 %v2405
    %2486 = vmatpush.msra.mxu0 %v2404
    %2487 = vmatpush.msra.mxu0 %v2403
    %2488 = vmatpush.msra.mxu0 %v2402
    %2489 = vmatpush.msra.mxu0 %v2401
    %2490 = vmatpush.msra.mxu0 %v2400
    %2491 = vmatmul.f32.gmra.mxu0 %v2357
    %v2492 = vpop.f32.mrf.mxu0
    %v2493 = vadd.f32 %v2464, %v2492
    %2494 = vmatmul.f32.gmra.mxu0 %v2359
    %v2495 = vpop.f32.mrf.mxu0
    %v2496 = vadd.f32 %v2467, %v2495
    %2497 = vmatmul.f32.gmra.mxu0 %v2361
    %v2498 = vpop.f32.mrf.mxu0
    %v2499 = vadd.f32 %v2470, %v2498
    %2500 = vmatmul.f32.gmra.mxu0 %v2363
    %v2501 = vpop.f32.mrf.mxu0
    %v2502 = vadd.f32 %v2473, %v2501
    %2503 = vdwg.mxu0
    %v2504 = vadd.f32 %v2493, %v2089
    %v2505 = vadd.f32 %v2496, %v2090
    %v2506 = vadd.f32 %v2499, %v2091
    %v2507 = vadd.f32 %v2502, %v2092
    %v2508 = vmax.f32 %v2504, 0.0
    %v2509 = vmax.f32 %v2505, 0.0
    %v2510 = vmax.f32 %v2506, 0.0
    %v2511 = vmax.f32 %v2507, 0.0
    %v2512 = vld [vmem:[#allocation2 + $0x1130] sm:$0xff]
    %v2513 = vld [vmem:[#allocation2 + $0x1140] sm:$0xff]
    %v2514 = vld [vmem:[#allocation2 + $0x1150] sm:$0xff]
    %v2515 = vld [vmem:[#allocation2 + $0x1160] sm:$0xff]
    %v2516 = vld [vmem:[#allocation2 + $0x1170] sm:$0xff]
    %v2517 = vld [vmem:[#allocation2 + $0x1180] sm:$0xff]
    %v2518 = vld [vmem:[#allocation2 + $0x1190] sm:$0xff]
    %v2519 = vld [vmem:[#allocation2 + $0x11a0] sm:$0xff]
    %v2520 = vld [vmem:[#allocation2 + $0x11b0] sm:$0xff]
    %v2521 = vld [vmem:[#allocation2 + $0x11c0] sm:$0xff]
    %v2522 = vld [vmem:[#allocation2 + $0x11d0] sm:$0xff]
    %v2523 = vld [vmem:[#allocation2 + $0x11e0] sm:$0xff]
    %v2524 = vld [vmem:[#allocation2 + $0x11f0] sm:$0xff]
    %v2525 = vld [vmem:[#allocation2 + $0x1200] sm:$0xff]
    %v2526 = vld [vmem:[#allocation2 + $0x1210] sm:$0xff]
    %v2527 = vld [vmem:[#allocation2 + $0x1220] sm:$0xff]
    %2528 = vmatpush.msra.mxu0 %v2527
    %2529 = vmatpush.msra.mxu0 %v2526
    %2530 = vmatpush.msra.mxu0 %v2525
    %2531 = vmatpush.msra.mxu0 %v2524
    %2532 = vmatpush.msra.mxu0 %v2523
    %2533 = vmatpush.msra.mxu0 %v2522
    %2534 = vmatpush.msra.mxu0 %v2521
    %2535 = vmatpush.msra.mxu0 %v2520
    %2536 = vmatpush.msra.mxu0 %v2519
    %2537 = vmatpush.msra.mxu0 %v2518
    %2538 = vmatpush.msra.mxu0 %v2517
    %2539 = vmatpush.msra.mxu0 %v2516
    %2540 = vmatpush.msra.mxu0 %v2515
    %2541 = vmatpush.msra.mxu0 %v2514
    %2542 = vmatpush.msra.mxu0 %v2513
    %2543 = vmatpush.msra.mxu0 %v2512
    %2544 = vmatmul.f32.gmra.mxu0 %v2508
    %v2545 = vpop.f32.mrf.mxu0
    %v2546 = vadd.f32 0.0, %v2545
    %2547 = vmatmul.f32.gmra.mxu0 %v2509
    %v2548 = vpop.f32.mrf.mxu0
    %v2549 = vadd.f32 0.0, %v2548
    %2550 = vmatmul.f32.gmra.mxu0 %v2510
    %v2551 = vpop.f32.mrf.mxu0
    %v2552 = vadd.f32 0.0, %v2551
    %2553 = vmatmul.f32.gmra.mxu0 %v2511
    %v2554 = vpop.f32.mrf.mxu0
    %v2555 = vadd.f32 0.0, %v2554
    %2556 = vdwg.mxu0
    %2561 = vrot.lane.b32.xlu0 %v2546, 64
    %v2562 = vpop.permute.xlu0 %2561
    %2563 = vrot.lane.b32.xlu0 %v2549, 64
    %v2564 = vpop.permute.xlu0 %2563
    %2565 = vrot.lane.b32.xlu0 %v2552, 64
    %v2566 = vpop.permute.xlu0 %2565
    %2567 = vrot.lane.b32.xlu0 %v2555, 64
    %v2568 = vpop.permute.xlu0 %2567
    %v2573 = vmax.f32 %v2546, %v2562
    %v2574 = vmax.f32 %v2549, %v2564
    %v2575 = vmax.f32 %v2552, %v2566
    %v2576 = vmax.f32 %v2555, %v2568
    %v2577 = vld [vmem:[#allocation2 + $0x1230] sm:$0xff]
    %v2578 = vld [vmem:[#allocation2 + $0x1240] sm:$0xff]
    %v2579 = vld [vmem:[#allocation2 + $0x1250] sm:$0xff]
    %v2580 = vld [vmem:[#allocation2 + $0x1260] sm:$0xff]
    %v2582 = vsel %vm533, %v2577, 0
    %v2585 = vsel %vm533, %v2578, 0
    %v2588 = vsel %vm533, %v2579, 0
    %v2591 = vsel %vm533, %v2580, 0
    %2593 = vmatpush.msra.mxu0 0.0
    %2594 = vmatpush.msra.mxu0 0.0
    %2595 = vmatpush.msra.mxu0 0.0
    %2596 = vmatpush.msra.mxu0 0.0
    %2597 = vmatpush.msra.mxu0 0.0
    %2598 = vmatpush.msra.mxu0 0.0
    %2599 = vmatpush.msra.mxu0 0.0
    %2600 = vmatpush.msra.mxu0 0.0
    %2601 = vmatpush.msra.mxu0 0.0
    %2602 = vmatpush.msra.mxu0 0.0
    %2603 = vmatpush.msra.mxu0 0.0
    %2604 = vmatpush.msra.mxu0 0.0
    %2605 = vmatpush.msra.mxu0 %v2576
    %2606 = vmatpush.msra.mxu0 %v2575
    %2607 = vmatpush.msra.mxu0 %v2574
    %2608 = vmatpush.msra.mxu0 %v2573
    %2609 = vmatmul.f32.gmra.mxu0 %v2582
    %v2610 = vpop.f32.mrf.mxu0
    %v2611 = vadd.f32 0.0, %v2610
    %2612 = vmatmul.f32.gmra.mxu0 %v2585
    %v2613 = vpop.f32.mrf.mxu0
    %v2614 = vadd.f32 0.0, %v2613
    %2615 = vmatmul.f32.gmra.mxu0 %v2588
    %v2616 = vpop.f32.mrf.mxu0
    %v2617 = vadd.f32 0.0, %v2616
    %2618 = vmatmul.f32.gmra.mxu0 %v2591
    %v2619 = vpop.f32.mrf.mxu0
    %v2620 = vadd.f32 0.0, %v2619
    %2621 = vdwg.mxu0
    %v2622 = vmax.f32 %v2611, %v2617
    %v2623 = vmax.f32 %v2614, %v2620
    %v2624 = vld [vmem:[#allocation2 + $0x1570] sm:$0x7]
    %v2627 = vrot.slane %v2622, 7
    %v2628 = vrot.slane %v2623, 7
    %v2629 = vsel %vm287, %v2627, %v2628
    %v2633 = vsel %vm287, 0.0, %v2627
    %v2634 = vsel %vm287, %v2628, 0.0
    %vm2635 = vcmp.eq.s32.totalorder %v318, 7
    %vm2636 = vcmp.eq.s32.totalorder %v319, 7
    %vm2637 = vcmp.eq.s32.totalorder %v318, 8
    %vm2638 = vcmp.eq.s32.totalorder %v319, 8
    %vm2639 = vmor %vm327, %vm2637
    %vm2640 = vmor %vm328, %vm2638
    %vm2641 = vmor %vm2635, %vm2112
    %vm2642 = vmor %vm2636, %vm2113
    %v2643 = vsel %vm2639, 0.0, 1.0
    %v2644 = vsel %vm2640, 0.0, 1.0
    %v2645 = vmul.f32 %v2633, %v2643
    %v2646 = vmul.f32 %v2629, %v2644
    %v2647 = vsel %vm2641, 0.0, 1.0
    %v2648 = vsel %vm2642, 0.0, 1.0
    %v2651 = vrot.slane %v2647, 6
    %v2652 = vrot.slane %v2648, 6
    %v2653 = vsel %vm163, %v2651, %v2652
    %v2657 = vmul.f32 %v2633, %v2651
    %v2658 = vmul.f32 %v2629, %v2653
    %v2659 = vmul.f32 %v2634, %v2652
    %2660 = vrot.lane.b32.xlu0 %v2622, 64
    %v2661 = vpop.permute.xlu0 %2660
    %2662 = vrot.lane.b32.xlu0 %v2623, 64
    %v2663 = vpop.permute.xlu0 %2662
    %v2669 = vrot.slane %v2657, 2
    %v2670 = vrot.slane %v2658, 2
    %v2671 = vsel %vm488, %v2669, %v2670
    %v2672 = vrot.slane %v2659, 2
    %v2673 = vsel %vm488, %v2670, %v2672
    %v2674 = vsel %vm45, %v2645, %v2661
    %v2675 = vsel %vm45, %v2646, %v2663
    %v2676 = vld [vmem:[#allocation2 + $0x1270] sm:$0xff]
    %v2677 = vld [vmem:[#allocation2 + $0x1280] sm:$0xff]
    %v2678 = vld [vmem:[#allocation2 + $0x1290] sm:$0xff]
    %v2679 = vld [vmem:[#allocation2 + $0x12a0] sm:$0xff]
    %v2680 = vld [vmem:[#allocation2 + $0x12b0] sm:$0xff]
    %v2681 = vld [vmem:[#allocation2 + $0x12c0] sm:$0xff]
    %v2682 = vld [vmem:[#allocation2 + $0x12d0] sm:$0xff]
    %v2683 = vld [vmem:[#allocation2 + $0x12e0] sm:$0xff]
    %v2684 = vld [vmem:[#allocation2 + $0x12f0] sm:$0xff]
    %v2685 = vld [vmem:[#allocation2 + $0x1300] sm:$0xff]
    %v2686 = vld [vmem:[#allocation2 + $0x1310] sm:$0xff]
    %v2687 = vld [vmem:[#allocation2 + $0x1320] sm:$0xff]
    %v2688 = vld [vmem:[#allocation2 + $0x1330] sm:$0xff]
    %v2689 = vld [vmem:[#allocation2 + $0x1340] sm:$0xff]
    %v2690 = vld [vmem:[#allocation2 + $0x1350] sm:$0xff]
    %v2691 = vld [vmem:[#allocation2 + $0x1360] sm:$0xff]
    %v2692 = vld [vmem:[#allocation2 + $0x1370] sm:$0xff]
    %v2693 = vld [vmem:[#allocation2 + $0x1380] sm:$0xff]
    %v2694 = vld [vmem:[#allocation2 + $0x1390] sm:$0xff]
    %v2695 = vld [vmem:[#allocation2 + $0x13a0] sm:$0xff]
    %v2696 = vld [vmem:[#allocation2 + $0x13b0] sm:$0xff]
    %v2697 = vld [vmem:[#allocation2 + $0x13c0] sm:$0xff]
    %v2698 = vld [vmem:[#allocation2 + $0x13d0] sm:$0xff]
    %v2699 = vld [vmem:[#allocation2 + $0x13e0] sm:$0xff]
    %v2700 = vperm.slane %v2624, 0
    %v2701 = vsel %vm45, %v2671, 0
    %v2703 = vsel %vm45, %v2673, 0
    %2705 = vmatpush.msra.mxu0 %v2691
    %2706 = vmatpush.msra.mxu0 %v2690
    %2707 = vmatpush.msra.mxu0 %v2689
    %2708 = vmatpush.msra.mxu0 %v2688
    %2709 = vmatpush.msra.mxu0 %v2687
    %2710 = vmatpush.msra.mxu0 %v2686
    %2711 = vmatpush.msra.mxu0 %v2685
    %2712 = vmatpush.msra.mxu0 %v2684
    %2713 = vmatpush.msra.mxu0 %v2683
    %2714 = vmatpush.msra.mxu0 %v2682
    %2715 = vmatpush.msra.mxu0 %v2681
    %2716 = vmatpush.msra.mxu0 %v2680
    %2717 = vmatpush.msra.mxu0 %v2679
    %2718 = vmatpush.msra.mxu0 %v2678
    %2719 = vmatpush.msra.mxu0 %v2677
    %2720 = vmatpush.msra.mxu0 %v2676
    %2721 = vmatmul.f32.gmra.mxu0 %v2674
    %v2722 = vpop.f32.mrf.mxu0
    %v2723 = vadd.f32 %v2700, %v2722
    %2724 = vmatmul.f32.gmra.mxu0 %v2675
    %v2725 = vpop.f32.mrf.mxu0
    %v2726 = vadd.f32 %v2700, %v2725
    %2727 = vdwg.mxu0
    %2728 = vmatpush.msra.mxu0 0.0
    %2729 = vmatpush.msra.mxu0 0.0
    %2730 = vmatpush.msra.mxu0 0.0
    %2731 = vmatpush.msra.mxu0 0.0
    %2732 = vmatpush.msra.mxu0 0.0
    %2733 = vmatpush.msra.mxu0 0.0
    %2734 = vmatpush.msra.mxu0 0.0
    %2735 = vmatpush.msra.mxu0 0.0
    %2736 = vmatpush.msra.mxu0 %v2699
    %2737 = vmatpush.msra.mxu0 %v2698
    %2738 = vmatpush.msra.mxu0 %v2697
    %2739 = vmatpush.msra.mxu0 %v2696
    %2740 = vmatpush.msra.mxu0 %v2695
    %2741 = vmatpush.msra.mxu0 %v2694
    %2742 = vmatpush.msra.mxu0 %v2693
    %2743 = vmatpush.msra.mxu0 %v2692
    %2744 = vmatmul.f32.gmra.mxu0 %v2701
    %v2745 = vpop.f32.mrf.mxu0
    %v2746 = vadd.f32 %v2723, %v2745
    %2747 = vmatmul.f32.gmra.mxu0 %v2703
    %v2748 = vpop.f32.mrf.mxu0
    %v2749 = vadd.f32 %v2726, %v2748
    %2750 = vdwg.mxu0
    %v2751 = vmax.f32 %v2746, 0.0
    %v2752 = vmax.f32 %v2749, 0.0
    %v2755 = vrot.slane %v2751, 7
    %v2756 = vrot.slane %v2752, 7
    %v2757 = vsel %vm287, %v2755, %v2756
    %v2761 = vsel %vm287, 0.0, %v2755
    %v2762 = vsel %vm287, %v2756, 0.0
    %v2763 = vmul.f32 %v2761, %v2643
    %v2764 = vmul.f32 %v2757, %v2644
    %v2765 = vmul.f32 %v2761, %v2651
    %v2766 = vmul.f32 %v2757, %v2653
    %v2767 = vmul.f32 %v2762, %v2652
    %2768 = vrot.lane.b32.xlu0 %v2751, 64
    %v2769 = vpop.permute.xlu0 %2768
    %2770 = vrot.lane.b32.xlu0 %v2752, 64
    %v2771 = vpop.permute.xlu0 %2770
    %v2777 = vrot.slane %v2765, 2
    %v2778 = vrot.slane %v2766, 2
    %v2779 = vsel %vm488, %v2777, %v2778
    %v2780 = vrot.slane %v2767, 2
    %v2781 = vsel %vm488, %v2778, %v2780
    %v2782 = vsel %vm45, %v2763, %v2769
    %v2783 = vsel %vm45, %v2764, %v2771
    %v2784 = vld [vmem:[#allocation2 + $0x13f0] sm:$0xff]
    %v2785 = vld [vmem:[#allocation2 + $0x1400] sm:$0xff]
    %v2786 = vld [vmem:[#allocation2 + $0x1410] sm:$0xff]
    %v2787 = vld [vmem:[#allocation2 + $0x1420] sm:$0xff]
    %v2788 = vld [vmem:[#allocation2 + $0x1430] sm:$0xff]
    %v2789 = vld [vmem:[#allocation2 + $0x1440] sm:$0xff]
    %v2790 = vld [vmem:[#allocation2 + $0x1450] sm:$0xff]
    %v2791 = vld [vmem:[#allocation2 + $0x1460] sm:$0xff]
    %v2792 = vld [vmem:[#allocation2 + $0x1470] sm:$0xff]
    %v2793 = vld [vmem:[#allocation2 + $0x1480] sm:$0xff]
    %v2794 = vld [vmem:[#allocation2 + $0x1490] sm:$0xff]
    %v2795 = vld [vmem:[#allocation2 + $0x14a0] sm:$0xff]
    %v2796 = vld [vmem:[#allocation2 + $0x14b0] sm:$0xff]
    %v2797 = vld [vmem:[#allocation2 + $0x14c0] sm:$0xff]
    %v2798 = vld [vmem:[#allocation2 + $0x14d0] sm:$0xff]
    %v2799 = vld [vmem:[#allocation2 + $0x14e0] sm:$0xff]
    %v2800 = vld [vmem:[#allocation2 + $0x14f0] sm:$0xff]
    %v2801 = vld [vmem:[#allocation2 + $0x1500] sm:$0xff]
    %v2802 = vld [vmem:[#allocation2 + $0x1510] sm:$0xff]
    %v2803 = vld [vmem:[#allocation2 + $0x1520] sm:$0xff]
    %v2804 = vld [vmem:[#allocation2 + $0x1530] sm:$0xff]
    %v2805 = vld [vmem:[#allocation2 + $0x1540] sm:$0xff]
    %v2806 = vld [vmem:[#allocation2 + $0x1550] sm:$0xff]
    %v2807 = vld [vmem:[#allocation2 + $0x1560] sm:$0xff]
    %v2808 = vperm.slane %v2624, 1
    %v2809 = vsel %vm45, %v2779, 0
    %v2811 = vsel %vm45, %v2781, 0
    %2813 = vmatpush.msra.mxu0 %v2799
    %2814 = vmatpush.msra.mxu0 %v2798
    %2815 = vmatpush.msra.mxu0 %v2797
    %2816 = vmatpush.msra.mxu0 %v2796
    %2817 = vmatpush.msra.mxu0 %v2795
    %2818 = vmatpush.msra.mxu0 %v2794
    %2819 = vmatpush.msra.mxu0 %v2793
    %2820 = vmatpush.msra.mxu0 %v2792
    %2821 = vmatpush.msra.mxu0 %v2791
    %2822 = vmatpush.msra.mxu0 %v2790
    %2823 = vmatpush.msra.mxu0 %v2789
    %2824 = vmatpush.msra.mxu0 %v2788
    %2825 = vmatpush.msra.mxu0 %v2787
    %2826 = vmatpush.msra.mxu0 %v2786
    %2827 = vmatpush.msra.mxu0 %v2785
    %2828 = vmatpush.msra.mxu0 %v2784
    %2829 = vmatmul.f32.gmra.mxu0 %v2782
    %v2830 = vpop.f32.mrf.mxu0
    %v2831 = vadd.f32 %v2808, %v2830
    %2832 = vmatmul.f32.gmra.mxu0 %v2783
    %v2833 = vpop.f32.mrf.mxu0
    %v2834 = vadd.f32 %v2808, %v2833
    %2835 = vdwg.mxu0
    %2836 = vmatpush.msra.mxu0 0.0
    %2837 = vmatpush.msra.mxu0 0.0
    %2838 = vmatpush.msra.mxu0 0.0
    %2839 = vmatpush.msra.mxu0 0.0
    %2840 = vmatpush.msra.mxu0 0.0
    %2841 = vmatpush.msra.mxu0 0.0
    %2842 = vmatpush.msra.mxu0 0.0
    %2843 = vmatpush.msra.mxu0 0.0
    %2844 = vmatpush.msra.mxu0 %v2807
    %2845 = vmatpush.msra.mxu0 %v2806
    %2846 = vmatpush.msra.mxu0 %v2805
    %2847 = vmatpush.msra.mxu0 %v2804
    %2848 = vmatpush.msra.mxu0 %v2803
    %2849 = vmatpush.msra.mxu0 %v2802
    %2850 = vmatpush.msra.mxu0 %v2801
    %2851 = vmatpush.msra.mxu0 %v2800
    %2852 = vmatmul.f32.gmra.mxu0 %v2809
    %v2853 = vpop.f32.mrf.mxu0
    %v2854 = vadd.f32 %v2831, %v2853
    %2855 = vmatmul.f32.gmra.mxu0 %v2811
    %v2856 = vpop.f32.mrf.mxu0
    %v2857 = vadd.f32 %v2834, %v2856
    %2858 = vdwg.mxu0
    %v2859 = vadd.f32 %v2854, %v2622
    %v2860 = vadd.f32 %v2857, %v2623
    %v2861 = vmax.f32 %v2859, 0.0
    %v2862 = vmax.f32 %v2860, 0.0
    %v2863 = vld [vmem:[#allocation2 + $0x1580] sm:$0xff]
    %v2864 = vld [vmem:[#allocation2 + $0x1590] sm:$0xff]
    %v2865 = vld [vmem:[#allocation2 + $0x15a0] sm:$0xff]
    %v2866 = vld [vmem:[#allocation2 + $0x15b0] sm:$0xff]
    %v2867 = vld [vmem:[#allocation2 + $0x15c0] sm:$0xff]
    %v2868 = vld [vmem:[#allocation2 + $0x15d0] sm:$0xff]
    %v2869 = vld [vmem:[#allocation2 + $0x15e0] sm:$0xff]
    %v2870 = vld [vmem:[#allocation2 + $0x15f0] sm:$0xff]
    %v2872 = vsel %vm45, %v2861, 0
    %v2875 = vsel %vm45, %v2862, 0
    %2877 = vmatpush.msra.mxu0 0.0
    %2878 = vmatpush.msra.mxu0 0.0
    %2879 = vmatpush.msra.mxu0 0.0
    %2880 = vmatpush.msra.mxu0 0.0
    %2881 = vmatpush.msra.mxu0 0.0
    %2882 = vmatpush.msra.mxu0 0.0
    %2883 = vmatpush.msra.mxu0 0.0
    %2884 = vmatpush.msra.mxu0 0.0
    %2885 = vmatpush.msra.mxu0 %v2870
    %2886 = vmatpush.msra.mxu0 %v2869
    %2887 = vmatpush.msra.mxu0 %v2868
    %2888 = vmatpush.msra.mxu0 %v2867
    %2889 = vmatpush.msra.mxu0 %v2866
    %2890 = vmatpush.msra.mxu0 %v2865
    %2891 = vmatpush.msra.mxu0 %v2864
    %2892 = vmatpush.msra.mxu0 %v2863
    %2893 = vmatmul.f32.gmra.mxu0 %v2872
    %v2894 = vpop.f32.mrf.mxu0
    %v2895 = vadd.f32 0.0, %v2894
    %2896 = vmatmul.f32.gmra.mxu0 %v2875
    %v2897 = vpop.f32.mrf.mxu0
    %v2898 = vadd.f32 0.0, %v2897
    %2899 = vdwg.mxu0
    %2902 = vrot.lane.b32.xlu0 %v2895, 96
    %v2903 = vpop.permute.xlu0 %2902
    %2904 = vrot.lane.b32.xlu0 %v2898, 96
    %v2905 = vpop.permute.xlu0 %2904
    %v2908 = vmax.f32 %v2895, %v2903
    %v2909 = vmax.f32 %v2898, %v2905
    %v2910 = vld [vmem:[#allocation2 + $0x1600] sm:$0xff]
    %v2911 = vld [vmem:[#allocation2 + $0x1610] sm:$0xff]
    %vm2912 = vcmask 130048
    %v2914 = vsel %vm2912, %v2910, 0
    %v2917 = vsel %vm2912, %v2911, 0
    %2919 = vmatpush.msra.mxu0 0.0
    %2920 = vmatpush.msra.mxu0 0.0
    %2921 = vmatpush.msra.mxu0 0.0
    %2922 = vmatpush.msra.mxu0 0.0
    %2923 = vmatpush.msra.mxu0 0.0
    %2924 = vmatpush.msra.mxu0 0.0
    %2925 = vmatpush.msra.mxu0 0.0
    %2926 = vmatpush.msra.mxu0 0.0
    %2927 = vmatpush.msra.mxu0 0.0
    %2928 = vmatpush.msra.mxu0 0.0
    %2929 = vmatpush.msra.mxu0 0.0
    %2930 = vmatpush.msra.mxu0 0.0
    %2931 = vmatpush.msra.mxu0 0.0
    %2932 = vmatpush.msra.mxu0 0.0
    %2933 = vmatpush.msra.mxu0 %v2909
    %2934 = vmatpush.msra.mxu0 %v2908
    %2935 = vmatmul.f32.gmra.mxu0 %v2914
    %v2936 = vpop.f32.mrf.mxu0
    %v2937 = vadd.f32 0.0, %v2936
    %2938 = vmatmul.f32.gmra.mxu0 %v2917
    %v2939 = vpop.f32.mrf.mxu0
    %v2940 = vadd.f32 0.0, %v2939
    %2941 = vdwg.mxu0
    %v2942 = vmax.f32 %v2937, %v2940
    %v2943 = vld [vmem:[#allocation2 + $0x1620] sm:$0xff]
    %v2944 = vld [vmem:[#allocation2 + $0x1630] sm:$0xff]
    %v2945 = vld [vmem:[#allocation2 + $0x1640] sm:$0xff]
    %v2946 = vld [vmem:[#allocation2 + $0x1650] sm:$0xff]
    %v2947 = vrot.slane %v247, 4
    %vm2949 = vcmask 1043456
    %v2950 = vsel %vm2949, %v247, %v2947
    %v2952 = vsel %vm533, %v2942, 0
    %2954 = vmatpush.msra.mxu0 0.0
    %2955 = vmatpush.msra.mxu0 0.0
    %2956 = vmatpush.msra.mxu0 0.0
    %2957 = vmatpush.msra.mxu0 0.0
    %2958 = vmatpush.msra.mxu0 0.0
    %2959 = vmatpush.msra.mxu0 0.0
    %2960 = vmatpush.msra.mxu0 0.0
    %2961 = vmatpush.msra.mxu0 0.0
    %2962 = vmatpush.msra.mxu0 0.0
    %2963 = vmatpush.msra.mxu0 0.0
    %2964 = vmatpush.msra.mxu0 0.0
    %2965 = vmatpush.msra.mxu0 0.0
    %2966 = vmatpush.msra.mxu0 %v2946
    %2967 = vmatpush.msra.mxu0 %v2945
    %2968 = vmatpush.msra.mxu0 %v2944
    %2969 = vmatpush.msra.mxu0 %v2943
    %2970 = vmatmul.f32.gmra.mxu0 %v2952
    %v2971 = vpop.f32.mrf.mxu0
    %v2972 = vadd.f32 %v2950, %v2971
    %2973 = vdwg.mxu0
    %v2974 = vld [vmem:[#allocation2 + $0x1e10] sm:$0xff]
    %v2975 = vld [vmem:[#allocation2 + $0x19e0] sm:$0x7f]
    %v2976 = vsel %vm45, %v2972, 0.0
    %2977 = vadd.xlane.f32.xlu0 %v2976
    %v2978 = vpop.xlane.xlu0 %2977
    %v2979 = vrcp.pop 64.0
    %v2980 = vmul.f32 64.0, %v2979
    %v2981 = vsub.f32 1.0, %v2980
    %v2982 = vmul.f32 %v2979, %v2981
    %v2983 = vadd.f32 %v2979, %v2982
    %vm2984 = vweird.f32 %v2979
    %v2985 = vsel %vm2984, %v2979, %v2983
    %v2986 = vmul.f32 %v2978, %v2985
    %v2987 = vsub.f32 %v2972, %v2986
    %v2988 = vmul.f32 %v2987, %v2987
    %v2989 = vsel %vm45, %v2988, 0.0
    %2990 = vadd.xlane.f32.xlu0 %v2989
    %v2991 = vpop.xlane.xlu0 %2990
    %v2992 = vmul.f32 %v2991, %v2985
    %v2993 = vadd.f32 %v2992, 1e-05
    %v2994 = vrsqrt.pop %v2993
    %v2995 = vmul.f32 %v2994, %v2993
    %v2996 = vmul.f32 %v2995, %v2994
    %v2997 = vmul.f32 0.5, %v2996
    %v2998 = vsub.f32 1.5, %v2997
    %v2999 = vmul.f32 %v2994, %v2998
    %vm3000 = vweird.f32 %v2993
    %vm3001 = vweird.f32 %v2994
    %vm3002 = vmor %vm3000, %vm3001
    %v3003 = vsel %vm3002, %v2994, %v2999
    %v3004 = vmul.f32 %v2987, %v3003
    %v3005 = vperm.slane %v2975, 0
    %v3006 = vmul.f32 %v3004, %v3005
    %v3007 = vperm.slane %v2975, 1
    %v3008 = vadd.f32 %v3006, %v3007
    %v3009 = vld [vmem:[#allocation2 + $0x1660] sm:$0xff]
    %v3010 = vld [vmem:[#allocation2 + $0x1670] sm:$0xff]
    %v3011 = vld [vmem:[#allocation2 + $0x1680] sm:$0xff]
    %v3012 = vld [vmem:[#allocation2 + $0x1690] sm:$0xff]
    %v3013 = vld [vmem:[#allocation2 + $0x16a0] sm:$0xff]
    %v3014 = vld [vmem:[#allocation2 + $0x16b0] sm:$0xff]
    %v3015 = vld [vmem:[#allocation2 + $0x16c0] sm:$0xff]
    %v3016 = vld [vmem:[#allocation2 + $0x16d0] sm:$0xff]
    %v3018 = vsel %vm45, %v3008, 0
    %3020 = vmatpush.msra.mxu0 0.0
    %3021 = vmatpush.msra.mxu0 0.0
    %3022 = vmatpush.msra.mxu0 0.0
    %3023 = vmatpush.msra.mxu0 0.0
    %3024 = vmatpush.msra.mxu0 0.0
    %3025 = vmatpush.msra.mxu0 0.0
    %3026 = vmatpush.msra.mxu0 0.0
    %3027 = vmatpush.msra.mxu0 0.0
    %3028 = vmatpush.msra.mxu0 %v3016
    %3029 = vmatpush.msra.mxu0 %v3015
    %3030 = vmatpush.msra.mxu0 %v3014
    %3031 = vmatpush.msra.mxu0 %v3013
    %3032 = vmatpush.msra.mxu0 %v3012
    %3033 = vmatpush.msra.mxu0 %v3011
    %3034 = vmatpush.msra.mxu0 %v3010
    %3035 = vmatpush.msra.mxu0 %v3009
    %3036 = vmatmul.f32.gmra.mxu0 %v3018
    %v3037 = vpop.f32.mrf.mxu0
    %v3038 = vadd.f32 0.0, %v3037
    %3039 = vdwg.mxu0
    %v3040 = vld [vmem:[#allocation2 + $0x16e0] sm:$0xff]
    %v3041 = vld [vmem:[#allocation2 + $0x16f0] sm:$0xff]
    %v3042 = vld [vmem:[#allocation2 + $0x1700] sm:$0xff]
    %v3043 = vld [vmem:[#allocation2 + $0x1710] sm:$0xff]
    %v3044 = vld [vmem:[#allocation2 + $0x1720] sm:$0xff]
    %v3045 = vld [vmem:[#allocation2 + $0x1730] sm:$0xff]
    %v3046 = vld [vmem:[#allocation2 + $0x1740] sm:$0xff]
    %v3047 = vld [vmem:[#allocation2 + $0x1750] sm:$0xff]
    %3048 = vmatpush.msra.mxu0 0.0
    %3049 = vmatpush.msra.mxu0 0.0
    %3050 = vmatpush.msra.mxu0 0.0
    %3051 = vmatpush.msra.mxu0 0.0
    %3052 = vmatpush.msra.mxu0 0.0
    %3053 = vmatpush.msra.mxu0 0.0
    %3054 = vmatpush.msra.mxu0 0.0
    %3055 = vmatpush.msra.mxu0 0.0
    %3056 = vmatpush.msra.mxu0 %v3047
    %3057 = vmatpush.msra.mxu0 %v3046
    %3058 = vmatpush.msra.mxu0 %v3045
    %3059 = vmatpush.msra.mxu0 %v3044
    %3060 = vmatpush.msra.mxu0 %v3043
    %3061 = vmatpush.msra.mxu0 %v3042
    %3062 = vmatpush.msra.mxu0 %v3041
    %3063 = vmatpush.msra.mxu0 %v3040
    %3064 = vmatmul.f32.gmra.mxu0 %v3018
    %v3065 = vpop.f32.mrf.mxu0
    %v3066 = vadd.f32 0.0, %v3065
    %3067 = vdwg.mxu0
    %v3068 = vld [vmem:[#allocation2 + $0x1760] sm:$0xff]
    %v3069 = vld [vmem:[#allocation2 + $0x1770] sm:$0xff]
    %v3070 = vld [vmem:[#allocation2 + $0x1780] sm:$0xff]
    %v3071 = vld [vmem:[#allocation2 + $0x1790] sm:$0xff]
    %v3072 = vld [vmem:[#allocation2 + $0x17a0] sm:$0xff]
    %v3073 = vld [vmem:[#allocation2 + $0x17b0] sm:$0xff]
    %v3074 = vld [vmem:[#allocation2 + $0x17c0] sm:$0xff]
    %v3075 = vld [vmem:[#allocation2 + $0x17d0] sm:$0xff]
    %3076 = vmatpush.msra.mxu0 0.0
    %3077 = vmatpush.msra.mxu0 0.0
    %3078 = vmatpush.msra.mxu0 0.0
    %3079 = vmatpush.msra.mxu0 0.0
    %3080 = vmatpush.msra.mxu0 0.0
    %3081 = vmatpush.msra.mxu0 0.0
    %3082 = vmatpush.msra.mxu0 0.0
    %3083 = vmatpush.msra.mxu0 0.0
    %3084 = vmatpush.msra.mxu0 %v3075
    %3085 = vmatpush.msra.mxu0 %v3074
    %3086 = vmatpush.msra.mxu0 %v3073
    %3087 = vmatpush.msra.mxu0 %v3072
    %3088 = vmatpush.msra.mxu0 %v3071
    %3089 = vmatpush.msra.mxu0 %v3070
    %3090 = vmatpush.msra.mxu0 %v3069
    %3091 = vmatpush.msra.mxu0 %v3068
    %3092 = vmatmul.f32.gmra.mxu0 %v3018
    %v3093 = vpop.f32.mrf.mxu0
    %v3094 = vadd.f32 0.0, %v3093
    %3095 = vdwg.mxu0
    %v3097 = vsel %vm533, %v3038, 0
    %v3100 = vsel %vm533, %v3066, 0
    %3102 = vmatpush.xpose.msra.mxu0 0.0
    %3103 = vmatpush.xpose.msra.mxu0 0.0
    %3104 = vmatpush.xpose.msra.mxu0 0.0
    %3105 = vmatpush.xpose.msra.mxu0 0.0
    %3106 = vmatpush.xpose.msra.mxu0 0.0
    %3107 = vmatpush.xpose.msra.mxu0 0.0
    %3108 = vmatpush.xpose.msra.mxu0 0.0
    %3109 = vmatpush.xpose.msra.mxu0 0.0
    %3110 = vmatpush.xpose.msra.mxu0 0.0
    %3111 = vmatpush.xpose.msra.mxu0 0.0
    %3112 = vmatpush.xpose.msra.mxu0 0.0
    %3113 = vmatpush.xpose.msra.mxu0 0.0
    %3114 = vmatpush.xpose.msra.mxu0 0.0
    %3115 = vmatpush.xpose.msra.mxu0 0.0
    %3116 = vmatpush.xpose.msra.mxu0 0.0
    %3117 = vmatpush.xpose.msra.mxu0 %v3100
    %3118 = vmatmul.f32.gmra.mxu0 %v3097
    %v3119 = vpop.f32.mrf.mxu0
    %v3120 = vadd.f32 %v2974, %v3119
    %3121 = vdwg.mxu0
    %vm3122 = vcmask 64512
    %v3123 = vsel %vm3122, %v3120, -inf
    %3124 = vmax.xlane.f32.xlu0 %v3123
    %v3125 = vpop.xlane.xlu0 %3124
    %v3126 = vsub.f32 %v3120, %v3125
    %v3127 = vmul.f32 %v3126, 1.442695
    %v3128 = vpow.pop %v3127
    %v3129 = vsel %vm3122, %v3128, 0.0
    %3130 = vadd.xlane.f32.xlu0 %v3129
    %v3131 = vpop.xlane.xlu0 %3130
    %v3132 = vrcp.pop %v3131
    %v3133 = vmul.f32 %v3131, %v3132
    %v3134 = vsub.f32 1.0, %v3133
    %v3135 = vmul.f32 %v3132, %v3134
    %v3136 = vadd.f32 %v3132, %v3135
    %vm3137 = vweird.f32 %v3131
    %vm3138 = vweird.f32 %v3132
    %vm3139 = vmor %vm3137, %vm3138
    %v3140 = vsel %vm3139, %v3132, %v3136
    %v3141 = vand.u32 2147483647, %v3131
    %vm3142 = vcmp.eq.f32.partialorder %v3141, 8.507059e+37
    %v3143 = vand.u32 %v3131, 2147483648
    %v3144 = vor.u32 1.1754944e-38, %v3143
    %v3145 = vsel %vm3142, %v3144, %v3140
    %v3146 = vmul.f32 %v3128, %v3145
    %v3148 = vsel %vm3122, %v3146, 0
    %3150 = vmatpush.msra.mxu0 0.0
    %3151 = vmatpush.msra.mxu0 0.0
    %3152 = vmatpush.msra.mxu0 0.0
    %3153 = vmatpush.msra.mxu0 0.0
    %3154 = vmatpush.msra.mxu0 0.0
    %3155 = vmatpush.msra.mxu0 0.0
    %3156 = vmatpush.msra.mxu0 0.0
    %3157 = vmatpush.msra.mxu0 0.0
    %3158 = vmatpush.msra.mxu0 0.0
    %3159 = vmatpush.msra.mxu0 0.0
    %3160 = vmatpush.msra.mxu0 0.0
    %3161 = vmatpush.msra.mxu0 0.0
    %3162 = vmatpush.msra.mxu0 0.0
    %3163 = vmatpush.msra.mxu0 0.0
    %3164 = vmatpush.msra.mxu0 0.0
    %3165 = vmatpush.msra.mxu0 %v3094
    %3166 = vmatmul.f32.gmra.mxu0 %v3148
    %v3167 = vpop.f32.mrf.mxu0
    %v3168 = vadd.f32 0.0, %v3167
    %3169 = vdwg.mxu0
    %3170 = vrot.lane.b32.xlu0 %v3038, 96
    %v3171 = vpop.permute.xlu0 %3170
    %3172 = vrot.lane.b32.xlu0 %v3066, 96
    %v3173 = vpop.permute.xlu0 %3172
    %v3174 = vsel %vm533, %v3171, 0
    %v3176 = vsel %vm533, %v3173, 0
    %3178 = vmatpush.xpose.msra.mxu0 0.0
    %3179 = vmatpush.xpose.msra.mxu0 0.0
    %3180 = vmatpush.xpose.msra.mxu0 0.0
    %3181 = vmatpush.xpose.msra.mxu0 0.0
    %3182 = vmatpush.xpose.msra.mxu0 0.0
    %3183 = vmatpush.xpose.msra.mxu0 0.0
    %3184 = vmatpush.xpose.msra.mxu0 0.0
    %3185 = vmatpush.xpose.msra.mxu0 0.0
    %3186 = vmatpush.xpose.msra.mxu0 0.0
    %3187 = vmatpush.xpose.msra.mxu0 0.0
    %3188 = vmatpush.xpose.msra.mxu0 0.0
    %3189 = vmatpush.xpose.msra.mxu0 0.0
    %3190 = vmatpush.xpose.msra.mxu0 0.0
    %3191 = vmatpush.xpose.msra.mxu0 0.0
    %3192 = vmatpush.xpose.msra.mxu0 0.0
    %3193 = vmatpush.xpose.msra.mxu0 %v3176
    %3194 = vmatmul.f32.gmra.mxu0 %v3174
    %v3195 = vpop.f32.mrf.mxu0
    %v3196 = vadd.f32 %v2974, %v3195
    %3197 = vdwg.mxu0
    %v3198 = vsel %vm3122, %v3196, -inf
    %3199 = vmax.xlane.f32.xlu0 %v3198
    %v3200 = vpop.xlane.xlu0 %3199
    %v3201 = vsub.f32 %v3196, %v3200
    %v3202 = vmul.f32 %v3201, 1.442695
    %v3203 = vpow.pop %v3202
    %v3204 = vsel %vm3122, %v3203, 0.0
    %3205 = vadd.xlane.f32.xlu0 %v3204
    %v3206 = vpop.xlane.xlu0 %3205
    %v3207 = vrcp.pop %v3206
    %v3208 = vmul.f32 %v3206, %v3207
    %v3209 = vsub.f32 1.0, %v3208
    %v3210 = vmul.f32 %v3207, %v3209
    %v3211 = vadd.f32 %v3207, %v3210
    %vm3212 = vweird.f32 %v3206
    %vm3213 = vweird.f32 %v3207
    %vm3214 = vmor %vm3212, %vm3213
    %v3215 = vsel %vm3214, %v3207, %v3211
    %v3216 = vand.u32 2147483647, %v3206
    %vm3217 = vcmp.eq.f32.partialorder %v3216, 8.507059e+37
    %v3218 = vand.u32 %v3206, 2147483648
    %v3219 = vor.u32 1.1754944e-38, %v3218
    %v3220 = vsel %vm3217, %v3219, %v3215
    %v3221 = vmul.f32 %v3203, %v3220
    %3223 = vrot.lane.b32.xlu0 %v3094, 96
    %v3224 = vpop.permute.xlu0 %3223
    %v3227 = vsel %vm3122, %v3221, 0
    %3229 = vmatpush.msra.mxu0 0.0
    %3230 = vmatpush.msra.mxu0 0.0
    %3231 = vmatpush.msra.mxu0 0.0
    %3232 = vmatpush.msra.mxu0 0.0
    %3233 = vmatpush.msra.mxu0 0.0
    %3234 = vmatpush.msra.mxu0 0.0
    %3235 = vmatpush.msra.mxu0 0.0
    %3236 = vmatpush.msra.mxu0 0.0
    %3237 = vmatpush.msra.mxu0 0.0
    %3238 = vmatpush.msra.mxu0 0.0
    %3239 = vmatpush.msra.mxu0 0.0
    %3240 = vmatpush.msra.mxu0 0.0
    %3241 = vmatpush.msra.mxu0 0.0
    %3242 = vmatpush.msra.mxu0 0.0
    %3243 = vmatpush.msra.mxu0 0.0
    %3244 = vmatpush.msra.mxu0 %v3224
    %3245 = vmatmul.f32.gmra.mxu0 %v3227
    %v3246 = vpop.f32.mrf.mxu0
    %v3247 = vadd.f32 0.0, %v3246
    %3248 = vdwg.mxu0
    %3249 = vrot.lane.b32.xlu0 %v3038, 64
    %v3250 = vpop.permute.xlu0 %3249
    %3251 = vrot.lane.b32.xlu0 %v3066, 64
    %v3252 = vpop.permute.xlu0 %3251
    %v3253 = vsel %vm533, %v3250, 0
    %v3255 = vsel %vm533, %v3252, 0
    %3257 = vmatpush.xpose.msra.mxu0 0.0
    %3258 = vmatpush.xpose.msra.mxu0 0.0
    %3259 = vmatpush.xpose.msra.mxu0 0.0
    %3260 = vmatpush.xpose.msra.mxu0 0.0
    %3261 = vmatpush.xpose.msra.mxu0 0.0
    %3262 = vmatpush.xpose.msra.mxu0 0.0
    %3263 = vmatpush.xpose.msra.mxu0 0.0
    %3264 = vmatpush.xpose.msra.mxu0 0.0
    %3265 = vmatpush.xpose.msra.mxu0 0.0
    %3266 = vmatpush.xpose.msra.mxu0 0.0
    %3267 = vmatpush.xpose.msra.mxu0 0.0
    %3268 = vmatpush.xpose.msra.mxu0 0.0
    %3269 = vmatpush.xpose.msra.mxu0 0.0
    %3270 = vmatpush.xpose.msra.mxu0 0.0
    %3271 = vmatpush.xpose.msra.mxu0 0.0
    %3272 = vmatpush.xpose.msra.mxu0 %v3255
    %3273 = vmatmul.f32.gmra.mxu0 %v3253
    %v3274 = vpop.f32.mrf.mxu0
    %v3275 = vadd.f32 %v2974, %v3274
    %3276 = vdwg.mxu0
    %v3277 = vsel %vm3122, %v3275, -inf
    %3278 = vmax.xlane.f32.xlu0 %v3277
    %v3279 = vpop.xlane.xlu0 %3278
    %v3280 = vsub.f32 %v3275, %v3279
    %v3281 = vmul.f32 %v3280, 1.442695
    %v3282 = vpow.pop %v3281
    %v3283 = vsel %vm3122, %v3282, 0.0
    %3284 = vadd.xlane.f32.xlu0 %v3283
    %v3285 = vpop.xlane.xlu0 %3284
    %v3286 = vrcp.pop %v3285
    %v3287 = vmul.f32 %v3285, %v3286
    %v3288 = vsub.f32 1.0, %v3287
    %v3289 = vmul.f32 %v3286, %v3288
    %v3290 = vadd.f32 %v3286, %v3289
    %vm3291 = vweird.f32 %v3285
    %vm3292 = vweird.f32 %v3286
    %vm3293 = vmor %vm3291, %vm3292
    %v3294 = vsel %vm3293, %v3286, %v3290
    %v3295 = vand.u32 2147483647, %v3285
    %vm3296 = vcmp.eq.f32.partialorder %v3295, 8.507059e+37
    %v3297 = vand.u32 %v3285, 2147483648
    %v3298 = vor.u32 1.1754944e-38, %v3297
    %v3299 = vsel %vm3296, %v3298, %v3294
    %v3300 = vmul.f32 %v3282, %v3299
    %3301 = vrot.lane.b32.xlu0 %v3094, 64
    %v3302 = vpop.permute.xlu0 %3301
    %v3305 = vsel %vm3122, %v3300, 0
    %3307 = vmatpush.msra.mxu0 0.0
    %3308 = vmatpush.msra.mxu0 0.0
    %3309 = vmatpush.msra.mxu0 0.0
    %3310 = vmatpush.msra.mxu0 0.0
    %3311 = vmatpush.msra.mxu0 0.0
    %3312 = vmatpush.msra.mxu0 0.0
    %3313 = vmatpush.msra.mxu0 0.0
    %3314 = vmatpush.msra.mxu0 0.0
    %3315 = vmatpush.msra.mxu0 0.0
    %3316 = vmatpush.msra.mxu0 0.0
    %3317 = vmatpush.msra.mxu0 0.0
    %3318 = vmatpush.msra.mxu0 0.0
    %3319 = vmatpush.msra.mxu0 0.0
    %3320 = vmatpush.msra.mxu0 0.0
    %3321 = vmatpush.msra.mxu0 0.0
    %3322 = vmatpush.msra.mxu0 %v3302
    %3323 = vmatmul.f32.gmra.mxu0 %v3305
    %v3324 = vpop.f32.mrf.mxu0
    %v3325 = vadd.f32 0.0, %v3324
    %3326 = vdwg.mxu0
    %3327 = vrot.lane.b32.xlu0 %v3038, 32
    %v3328 = vpop.permute.xlu0 %3327
    %3329 = vrot.lane.b32.xlu0 %v3066, 32
    %v3330 = vpop.permute.xlu0 %3329
    %v3331 = vsel %vm533, %v3328, 0
    %v3333 = vsel %vm533, %v3330, 0
    %3335 = vmatpush.xpose.msra.mxu0 0.0
    %3336 = vmatpush.xpose.msra.mxu0 0.0
    %3337 = vmatpush.xpose.msra.mxu0 0.0
    %3338 = vmatpush.xpose.msra.mxu0 0.0
    %3339 = vmatpush.xpose.msra.mxu0 0.0
    %3340 = vmatpush.xpose.msra.mxu0 0.0
    %3341 = vmatpush.xpose.msra.mxu0 0.0
    %3342 = vmatpush.xpose.msra.mxu0 0.0
    %3343 = vmatpush.xpose.msra.mxu0 0.0
    %3344 = vmatpush.xpose.msra.mxu0 0.0
    %3345 = vmatpush.xpose.msra.mxu0 0.0
    %3346 = vmatpush.xpose.msra.mxu0 0.0
    %3347 = vmatpush.xpose.msra.mxu0 0.0
    %3348 = vmatpush.xpose.msra.mxu0 0.0
    %3349 = vmatpush.xpose.msra.mxu0 0.0
    %3350 = vmatpush.xpose.msra.mxu0 %v3333
    %3351 = vmatmul.f32.gmra.mxu0 %v3331
    %v3352 = vpop.f32.mrf.mxu0
    %v3353 = vadd.f32 %v2974, %v3352
    %3354 = vdwg.mxu0
    %v3355 = vsel %vm3122, %v3353, -inf
    %3356 = vmax.xlane.f32.xlu0 %v3355
    %v3357 = vpop.xlane.xlu0 %3356
    %v3358 = vsub.f32 %v3353, %v3357
    %v3359 = vmul.f32 %v3358, 1.442695
    %v3360 = vpow.pop %v3359
    %v3361 = vsel %vm3122, %v3360, 0.0
    %3362 = vadd.xlane.f32.xlu0 %v3361
    %v3363 = vpop.xlane.xlu0 %3362
    %v3364 = vrcp.pop %v3363
    %v3365 = vmul.f32 %v3363, %v3364
    %v3366 = vsub.f32 1.0, %v3365
    %v3367 = vmul.f32 %v3364, %v3366
    %v3368 = vadd.f32 %v3364, %v3367
    %vm3369 = vweird.f32 %v3363
    %vm3370 = vweird.f32 %v3364
    %vm3371 = vmor %vm3369, %vm3370
    %v3372 = vsel %vm3371, %v3364, %v3368
    %v3373 = vand.u32 2147483647, %v3363
    %vm3374 = vcmp.eq.f32.partialorder %v3373, 8.507059e+37
    %v3375 = vand.u32 %v3363, 2147483648
    %v3376 = vor.u32 1.1754944e-38, %v3375
    %v3377 = vsel %vm3374, %v3376, %v3372
    %v3378 = vmul.f32 %v3360, %v3377
    %3379 = vrot.lane.b32.xlu0 %v3094, 32
    %v3380 = vpop.permute.xlu0 %3379
    %v3383 = vsel %vm3122, %v3378, 0
    %3385 = vmatpush.msra.mxu0 0.0
    %3386 = vmatpush.msra.mxu0 0.0
    %3387 = vmatpush.msra.mxu0 0.0
    %3388 = vmatpush.msra.mxu0 0.0
    %3389 = vmatpush.msra.mxu0 0.0
    %3390 = vmatpush.msra.mxu0 0.0
    %3391 = vmatpush.msra.mxu0 0.0
    %3392 = vmatpush.msra.mxu0 0.0
    %3393 = vmatpush.msra.mxu0 0.0
    %3394 = vmatpush.msra.mxu0 0.0
    %3395 = vmatpush.msra.mxu0 0.0
    %3396 = vmatpush.msra.mxu0 0.0
    %3397 = vmatpush.msra.mxu0 0.0
    %3398 = vmatpush.msra.mxu0 0.0
    %3399 = vmatpush.msra.mxu0 0.0
    %3400 = vmatpush.msra.mxu0 %v3380
    %3401 = vmatmul.f32.gmra.mxu0 %v3383
    %v3402 = vpop.f32.mrf.mxu0
    %v3403 = vadd.f32 0.0, %v3402
    %3404 = vdwg.mxu0
    %3406 = vrot.lane.b32.xlu0 %v3247, 32
    %v3407 = vpop.permute.xlu0 %3406
    %3410 = vrot.lane.b32.xlu0 %v3325, 64
    %v3411 = vpop.permute.xlu0 %3410
    %3414 = vrot.lane.b32.xlu0 %v3403, 96
    %v3415 = vpop.permute.xlu0 %3414
    %v3417 = vsel %vm533, %v3168, %v3407
    %v3418 = vsel %vm45, %v3417, %v3411
    %v3419 = vsel %vm578, %v3418, %v3415
    %v3420 = vld [vmem:[#allocation2 + $0x17e0] sm:$0xff]
    %v3421 = vld [vmem:[#allocation2 + $0x17f0] sm:$0xff]
    %v3422 = vld [vmem:[#allocation2 + $0x1800] sm:$0xff]
    %v3423 = vld [vmem:[#allocation2 + $0x1810] sm:$0xff]
    %v3424 = vld [vmem:[#allocation2 + $0x1820] sm:$0xff]
    %v3425 = vld [vmem:[#allocation2 + $0x1830] sm:$0xff]
    %v3426 = vld [vmem:[#allocation2 + $0x1840] sm:$0xff]
    %v3427 = vld [vmem:[#allocation2 + $0x1850] sm:$0xff]
    %v3428 = vld [vmem:[#allocation2 + $0x1860] sm:$0xff]
    %v3429 = vld [vmem:[#allocation2 + $0x1870] sm:$0xff]
    %v3430 = vld [vmem:[#allocation2 + $0x1880] sm:$0xff]
    %v3431 = vld [vmem:[#allocation2 + $0x1890] sm:$0xff]
    %v3432 = vld [vmem:[#allocation2 + $0x18a0] sm:$0xff]
    %v3433 = vld [vmem:[#allocation2 + $0x18b0] sm:$0xff]
    %v3434 = vld [vmem:[#allocation2 + $0x18c0] sm:$0xff]
    %v3435 = vld [vmem:[#allocation2 + $0x18d0] sm:$0xff]
    %3436 = vmatpush.msra.mxu0 %v3435
    %3437 = vmatpush.msra.mxu0 %v3434
    %3438 = vmatpush.msra.mxu0 %v3433
    %3439 = vmatpush.msra.mxu0 %v3432
    %3440 = vmatpush.msra.mxu0 %v3431
    %3441 = vmatpush.msra.mxu0 %v3430
    %3442 = vmatpush.msra.mxu0 %v3429
    %3443 = vmatpush.msra.mxu0 %v3428
    %3444 = vmatpush.msra.mxu0 %v3427
    %3445 = vmatpush.msra.mxu0 %v3426
    %3446 = vmatpush.msra.mxu0 %v3425
    %3447 = vmatpush.msra.mxu0 %v3424
    %3448 = vmatpush.msra.mxu0 %v3423
    %3449 = vmatpush.msra.mxu0 %v3422
    %3450 = vmatpush.msra.mxu0 %v3421
    %3451 = vmatpush.msra.mxu0 %v3420
    %3452 = vmatmul.f32.gmra.mxu0 %v3419
    %v3453 = vpop.f32.mrf.mxu0
    %v3454 = vadd.f32 0.0, %v3453
    %3455 = vdwg.mxu0
    %v3456 = vadd.f32 %v2972, %v3454
    %v3457 = vperm.slane %v2975, 4
    %v3458 = vadd.f32 %v3456, %v3457
    %v3459 = vsel %vm45, %v3458, 0.0
    %3460 = vadd.xlane.f32.xlu0 %v3459
    %v3461 = vpop.xlane.xlu0 %3460
    %v3462 = vmul.f32 %v3461, %v2985
    %v3463 = vsub.f32 %v3458, %v3462
    %v3464 = vmul.f32 %v3463, %v3463
    %v3465 = vsel %vm45, %v3464, 0.0
    %3466 = vadd.xlane.f32.xlu0 %v3465
    %v3467 = vpop.xlane.xlu0 %3466
    %v3468 = vmul.f32 %v3467, %v2985
    %v3469 = vadd.f32 %v3468, 1e-05
    %v3470 = vrsqrt.pop %v3469
    %v3471 = vmul.f32 %v3470, %v3469
    %v3472 = vmul.f32 %v3471, %v3470
    %v3473 = vmul.f32 0.5, %v3472
    %v3474 = vsub.f32 1.5, %v3473
    %v3475 = vmul.f32 %v3470, %v3474
    %vm3476 = vweird.f32 %v3469
    %vm3477 = vweird.f32 %v3470
    %vm3478 = vmor %vm3476, %vm3477
    %v3479 = vsel %vm3478, %v3470, %v3475
    %v3480 = vmul.f32 %v3463, %v3479
    %v3481 = vperm.slane %v2975, 2
    %v3482 = vmul.f32 %v3480, %v3481
    %v3483 = vperm.slane %v2975, 3
    %v3484 = vadd.f32 %v3482, %v3483
    %v3485 = vld [vmem:[#allocation2 + $0x18e0] sm:$0xff]
    %v3486 = vld [vmem:[#allocation2 + $0x18f0] sm:$0xff]
    %v3487 = vld [vmem:[#allocation2 + $0x1900] sm:$0xff]
    %v3488 = vld [vmem:[#allocation2 + $0x1910] sm:$0xff]
    %v3489 = vld [vmem:[#allocation2 + $0x1920] sm:$0xff]
    %v3490 = vld [vmem:[#allocation2 + $0x1930] sm:$0xff]
    %v3491 = vld [vmem:[#allocation2 + $0x1940] sm:$0xff]
    %v3492 = vld [vmem:[#allocation2 + $0x1950] sm:$0xff]
    %v3493 = vperm.slane %v2975, 5
    %v3495 = vsel %vm45, %v3484, 0
    %3497 = vmatpush.msra.mxu0 0.0
    %3498 = vmatpush.msra.mxu0 0.0
    %3499 = vmatpush.msra.mxu0 0.0
    %3500 = vmatpush.msra.mxu0 0.0
    %3501 = vmatpush.msra.mxu0 0.0
    %3502 = vmatpush.msra.mxu0 0.0
    %3503 = vmatpush.msra.mxu0 0.0
    %3504 = vmatpush.msra.mxu0 0.0
    %3505 = vmatpush.msra.mxu0 %v3492
    %3506 = vmatpush.msra.mxu0 %v3491
    %3507 = vmatpush.msra.mxu0 %v3490
    %3508 = vmatpush.msra.mxu0 %v3489
    %3509 = vmatpush.msra.mxu0 %v3488
    %3510 = vmatpush.msra.mxu0 %v3487
    %3511 = vmatpush.msra.mxu0 %v3486
    %3512 = vmatpush.msra.mxu0 %v3485
    %3513 = vmatmul.f32.gmra.mxu0 %v3495
    %v3514 = vpop.f32.mrf.mxu0
    %v3515 = vadd.f32 %v3493, %v3514
    %3516 = vdwg.mxu0
    %v3517 = vmul.f32 %v3515, %v3515
    %v3518 = vmul.f32 %v3515, %v3517
    %v3519 = vmul.f32 %v3518, 0.044715
    %v3520 = vadd.f32 %v3515, %v3519
    %v3521 = vmul.f32 %v3520, 0.7978846
    %v3522 = vtanh.pop %v3521
    %v3523 = vadd.f32 %v3522, 1.0
    %v3524 = vmul.f32 %v3523, 0.5
    %v3525 = vmul.f32 %v3515, %v3524
    %v3526 = vld [vmem:[#allocation2 + $0x1960] sm:$0xff]
    %v3527 = vld [vmem:[#allocation2 + $0x1970] sm:$0xff]
    %v3528 = vld [vmem:[#allocation2 + $0x1980] sm:$0xff]
    %v3529 = vld [vmem:[#allocation2 + $0x1990] sm:$0xff]
    %v3530 = vld [vmem:[#allocation2 + $0x19a0] sm:$0xff]
    %v3531 = vld [vmem:[#allocation2 + $0x19b0] sm:$0xff]
    %v3532 = vld [vmem:[#allocation2 + $0x19c0] sm:$0xff]
    %v3533 = vld [vmem:[#allocation2 + $0x19d0] sm:$0xff]
    %v3534 = vperm.slane %v2975, 6
    %v3536 = vsel %vm45, %v3525, 0
    %3538 = vmatpush.msra.mxu0 0.0
    %3539 = vmatpush.msra.mxu0 0.0
    %3540 = vmatpush.msra.mxu0 0.0
    %3541 = vmatpush.msra.mxu0 0.0
    %3542 = vmatpush.msra.mxu0 0.0
    %3543 = vmatpush.msra.mxu0 0.0
    %3544 = vmatpush.msra.mxu0 0.0
    %3545 = vmatpush.msra.mxu0 0.0
    %3546 = vmatpush.msra.mxu0 %v3533
    %3547 = vmatpush.msra.mxu0 %v3532
    %3548 = vmatpush.msra.mxu0 %v3531
    %3549 = vmatpush.msra.mxu0 %v3530
    %3550 = vmatpush.msra.mxu0 %v3529
    %3551 = vmatpush.msra.mxu0 %v3528
    %3552 = vmatpush.msra.mxu0 %v3527
    %3553 = vmatpush.msra.mxu0 %v3526
    %3554 = vmatmul.f32.gmra.mxu0 %v3536
    %v3555 = vpop.f32.mrf.mxu0
    %v3556 = vadd.f32 %v3534, %v3555
    %3557 = vdwg.mxu0
    %v3558 = vadd.f32 %v3458, %v3556
    %v3559 = vld [vmem:[#allocation2 + $0x1d70] sm:$0x7f]
    %v3560 = vsel %vm45, %v3558, 0.0
    %3561 = vadd.xlane.f32.xlu0 %v3560
    %v3562 = vpop.xlane.xlu0 %3561
    %v3563 = vmul.f32 %v3562, %v2985
    %v3564 = vsub.f32 %v3558, %v3563
    %v3565 = vmul.f32 %v3564, %v3564
    %v3566 = vsel %vm45, %v3565, 0.0
    %3567 = vadd.xlane.f32.xlu0 %v3566
    %v3568 = vpop.xlane.xlu0 %3567
    %v3569 = vmul.f32 %v3568, %v2985
    %v3570 = vadd.f32 %v3569, 1e-05
    %v3571 = vrsqrt.pop %v3570
    %v3572 = vmul.f32 %v3571, %v3570
    %v3573 = vmul.f32 %v3572, %v3571
    %v3574 = vmul.f32 0.5, %v3573
    %v3575 = vsub.f32 1.5, %v3574
    %v3576 = vmul.f32 %v3571, %v3575
    %vm3577 = vweird.f32 %v3570
    %vm3578 = vweird.f32 %v3571
    %vm3579 = vmor %vm3577, %vm3578
    %v3580 = vsel %vm3579, %v3571, %v3576
    %v3581 = vmul.f32 %v3564, %v3580
    %v3582 = vperm.slane %v3559, 0
    %v3583 = vmul.f32 %v3581, %v3582
    %v3584 = vperm.slane %v3559, 1
    %v3585 = vadd.f32 %v3583, %v3584
    %v3586 = vld [vmem:[#allocation2 + $0x19f0] sm:$0xff]
    %v3587 = vld [vmem:[#allocation2 + $0x1a00] sm:$0xff]
    %v3588 = vld [vmem:[#allocation2 + $0x1a10] sm:$0xff]
    %v3589 = vld [vmem:[#allocation2 + $0x1a20] sm:$0xff]
    %v3590 = vld [vmem:[#allocation2 + $0x1a30] sm:$0xff]
    %v3591 = vld [vmem:[#allocation2 + $0x1a40] sm:$0xff]
    %v3592 = vld [vmem:[#allocation2 + $0x1a50] sm:$0xff]
    %v3593 = vld [vmem:[#allocation2 + $0x1a60] sm:$0xff]
    %v3595 = vsel %vm45, %v3585, 0
    %3597 = vmatpush.msra.mxu0 0.0
    %3598 = vmatpush.msra.mxu0 0.0
    %3599 = vmatpush.msra.mxu0 0.0
    %3600 = vmatpush.msra.mxu0 0.0
    %3601 = vmatpush.msra.mxu0 0.0
    %3602 = vmatpush.msra.mxu0 0.0
    %3603 = vmatpush.msra.mxu0 0.0
    %3604 = vmatpush.msra.mxu0 0.0
    %3605 = vmatpush.msra.mxu0 %v3593
    %3606 = vmatpush.msra.mxu0 %v3592
    %3607 = vmatpush.msra.mxu0 %v3591
    %3608 = vmatpush.msra.mxu0 %v3590
    %3609 = vmatpush.msra.mxu0 %v3589
    %3610 = vmatpush.msra.mxu0 %v3588
    %3611 = vmatpush.msra.mxu0 %v3587
    %3612 = vmatpush.msra.mxu0 %v3586
    %3613 = vmatmul.f32.gmra.mxu0 %v3595
    %v3614 = vpop.f32.mrf.mxu0
    %v3615 = vadd.f32 0.0, %v3614
    %3616 = vdwg.mxu0
    %v3617 = vld [vmem:[#allocation2 + $0x1a70] sm:$0xff]
    %v3618 = vld [vmem:[#allocation2 + $0x1a80] sm:$0xff]
    %v3619 = vld [vmem:[#allocation2 + $0x1a90] sm:$0xff]
    %v3620 = vld [vmem:[#allocation2 + $0x1aa0] sm:$0xff]
    %v3621 = vld [vmem:[#allocation2 + $0x1ab0] sm:$0xff]
    %v3622 = vld [vmem:[#allocation2 + $0x1ac0] sm:$0xff]
    %v3623 = vld [vmem:[#allocation2 + $0x1ad0] sm:$0xff]
    %v3624 = vld [vmem:[#allocation2 + $0x1ae0] sm:$0xff]
    %3625 = vmatpush.msra.mxu0 0.0
    %3626 = vmatpush.msra.mxu0 0.0
    %3627 = vmatpush.msra.mxu0 0.0
    %3628 = vmatpush.msra.mxu0 0.0
    %3629 = vmatpush.msra.mxu0 0.0
    %3630 = vmatpush.msra.mxu0 0.0
    %3631 = vmatpush.msra.mxu0 0.0
    %3632 = vmatpush.msra.mxu0 0.0
    %3633 = vmatpush.msra.mxu0 %v3624
    %3634 = vmatpush.msra.mxu0 %v3623
    %3635 = vmatpush.msra.mxu0 %v3622
    %3636 = vmatpush.msra.mxu0 %v3621
    %3637 = vmatpush.msra.mxu0 %v3620
    %3638 = vmatpush.msra.mxu0 %v3619
    %3639 = vmatpush.msra.mxu0 %v3618
    %3640 = vmatpush.msra.mxu0 %v3617
    %3641 = vmatmul.f32.gmra.mxu0 %v3595
    %v3642 = vpop.f32.mrf.mxu0
    %v3643 = vadd.f32 0.0, %v3642
    %3644 = vdwg.mxu0
    %v3645 = vld [vmem:[#allocation2 + $0x1af0] sm:$0xff]
    %v3646 = vld [vmem:[#allocation2 + $0x1b00] sm:$0xff]
    %v3647 = vld [vmem:[#allocation2 + $0x1b10] sm:$0xff]
    %v3648 = vld [vmem:[#allocation2 + $0x1b20] sm:$0xff]
    %v3649 = vld [vmem:[#allocation2 + $0x1b30] sm:$0xff]
    %v3650 = vld [vmem:[#allocation2 + $0x1b40] sm:$0xff]
    %v3651 = vld [vmem:[#allocation2 + $0x1b50] sm:$0xff]
    %v3652 = vld [vmem:[#allocation2 + $0x1b60] sm:$0xff]
    %3653 = vmatpush.msra.mxu0 0.0
    %3654 = vmatpush.msra.mxu0 0.0
    %3655 = vmatpush.msra.mxu0 0.0
    %3656 = vmatpush.msra.mxu0 0.0
    %3657 = vmatpush.msra.mxu0 0.0
    %3658 = vmatpush.msra.mxu0 0.0
    %3659 = vmatpush.msra.mxu0 0.0
    %3660 = vmatpush.msra.mxu0 0.0
    %3661 = vmatpush.msra.mxu0 %v3652
    %3662 = vmatpush.msra.mxu0 %v3651
    %3663 = vmatpush.msra.mxu0 %v3650
    %3664 = vmatpush.msra.mxu0 %v3649
    %3665 = vmatpush.msra.mxu0 %v3648
    %3666 = vmatpush.msra.mxu0 %v3647
    %3667 = vmatpush.msra.mxu0 %v3646
    %3668 = vmatpush.msra.mxu0 %v3645
    %3669 = vmatmul.f32.gmra.mxu0 %v3595
    %v3670 = vpop.f32.mrf.mxu0
    %v3671 = vadd.f32 0.0, %v3670
    %3672 = vdwg.mxu0
    %v3674 = vsel %vm533, %v3615, 0
    %v3677 = vsel %vm533, %v3643, 0
    %3679 = vmatpush.xpose.msra.mxu0 0.0
    %3680 = vmatpush.xpose.msra.mxu0 0.0
    %3681 = vmatpush.xpose.msra.mxu0 0.0
    %3682 = vmatpush.xpose.msra.mxu0 0.0
    %3683 = vmatpush.xpose.msra.mxu0 0.0
    %3684 = vmatpush.xpose.msra.mxu0 0.0
    %3685 = vmatpush.xpose.msra.mxu0 0.0
    %3686 = vmatpush.xpose.msra.mxu0 0.0
    %3687 = vmatpush.xpose.msra.mxu0 0.0
    %3688 = vmatpush.xpose.msra.mxu0 0.0
    %3689 = vmatpush.xpose.msra.mxu0 0.0
    %3690 = vmatpush.xpose.msra.mxu0 0.0
    %3691 = vmatpush.xpose.msra.mxu0 0.0
    %3692 = vmatpush.xpose.msra.mxu0 0.0
    %3693 = vmatpush.xpose.msra.mxu0 0.0
    %3694 = vmatpush.xpose.msra.mxu0 %v3677
    %3695 = vmatmul.f32.gmra.mxu0 %v3674
    %v3696 = vpop.f32.mrf.mxu0
    %v3697 = vadd.f32 %v2974, %v3696
    %3698 = vdwg.mxu0
    %v3699 = vsel %vm3122, %v3697, -inf
    %3700 = vmax.xlane.f32.xlu0 %v3699
    %v3701 = vpop.xlane.xlu0 %3700
    %v3702 = vsub.f32 %v3697, %v3701
    %v3703 = vmul.f32 %v3702, 1.442695
    %v3704 = vpow.pop %v3703
    %v3705 = vsel %vm3122, %v3704, 0.0
    %3706 = vadd.xlane.f32.xlu0 %v3705
    %v3707 = vpop.xlane.xlu0 %3706
    %v3708 = vrcp.pop %v3707
    %v3709 = vmul.f32 %v3707, %v3708
    %v3710 = vsub.f32 1.0, %v3709
    %v3711 = vmul.f32 %v3708, %v3710
    %v3712 = vadd.f32 %v3708, %v3711
    %vm3713 = vweird.f32 %v3707
    %vm3714 = vweird.f32 %v3708
    %vm3715 = vmor %vm3713, %vm3714
    %v3716 = vsel %vm3715, %v3708, %v3712
    %v3717 = vand.u32 2147483647, %v3707
    %vm3718 = vcmp.eq.f32.partialorder %v3717, 8.507059e+37
    %v3719 = vand.u32 %v3707, 2147483648
    %v3720 = vor.u32 1.1754944e-38, %v3719
    %v3721 = vsel %vm3718, %v3720, %v3716
    %v3722 = vmul.f32 %v3704, %v3721
    %v3724 = vsel %vm3122, %v3722, 0
    %3726 = vmatpush.msra.mxu0 0.0
    %3727 = vmatpush.msra.mxu0 0.0
    %3728 = vmatpush.msra.mxu0 0.0
    %3729 = vmatpush.msra.mxu0 0.0
    %3730 = vmatpush.msra.mxu0 0.0
    %3731 = vmatpush.msra.mxu0 0.0
    %3732 = vmatpush.msra.mxu0 0.0
    %3733 = vmatpush.msra.mxu0 0.0
    %3734 = vmatpush.msra.mxu0 0.0
    %3735 = vmatpush.msra.mxu0 0.0
    %3736 = vmatpush.msra.mxu0 0.0
    %3737 = vmatpush.msra.mxu0 0.0
    %3738 = vmatpush.msra.mxu0 0.0
    %3739 = vmatpush.msra.mxu0 0.0
    %3740 = vmatpush.msra.mxu0 0.0
    %3741 = vmatpush.msra.mxu0 %v3671
    %3742 = vmatmul.f32.gmra.mxu0 %v3724
    %v3743 = vpop.f32.mrf.mxu0
    %v3744 = vadd.f32 0.0, %v3743
    %3745 = vdwg.mxu0
    %3746 = vrot.lane.b32.xlu0 %v3615, 96
    %v3747 = vpop.permute.xlu0 %3746
    %3748 = vrot.lane.b32.xlu0 %v3643, 96
    %v3749 = vpop.permute.xlu0 %3748
    %v3750 = vsel %vm533, %v3747, 0
    %v3752 = vsel %vm533, %v3749, 0
    %3754 = vmatpush.xpose.msra.mxu0 0.0
    %3755 = vmatpush.xpose.msra.mxu0 0.0
    %3756 = vmatpush.xpose.msra.mxu0 0.0
    %3757 = vmatpush.xpose.msra.mxu0 0.0
    %3758 = vmatpush.xpose.msra.mxu0 0.0
    %3759 = vmatpush.xpose.msra.mxu0 0.0
    %3760 = vmatpush.xpose.msra.mxu0 0.0
    %3761 = vmatpush.xpose.msra.mxu0 0.0
    %3762 = vmatpush.xpose.msra.mxu0 0.0
    %3763 = vmatpush.xpose.msra.mxu0 0.0
    %3764 = vmatpush.xpose.msra.mxu0 0.0
    %3765 = vmatpush.xpose.msra.mxu0 0.0
    %3766 = vmatpush.xpose.msra.mxu0 0.0
    %3767 = vmatpush.xpose.msra.mxu0 0.0
    %3768 = vmatpush.xpose.msra.mxu0 0.0
    %3769 = vmatpush.xpose.msra.mxu0 %v3752
    %3770 = vmatmul.f32.gmra.mxu0 %v3750
    %v3771 = vpop.f32.mrf.mxu0
    %v3772 = vadd.f32 %v2974, %v3771
    %3773 = vdwg.mxu0
    %v3774 = vsel %vm3122, %v3772, -inf
    %3775 = vmax.xlane.f32.xlu0 %v3774
    %v3776 = vpop.xlane.xlu0 %3775
    %v3777 = vsub.f32 %v3772, %v3776
    %v3778 = vmul.f32 %v3777, 1.442695
    %v3779 = vpow.pop %v3778
    %v3780 = vsel %vm3122, %v3779, 0.0
    %3781 = vadd.xlane.f32.xlu0 %v3780
    %v3782 = vpop.xlane.xlu0 %3781
    %v3783 = vrcp.pop %v3782
    %v3784 = vmul.f32 %v3782, %v3783
    %v3785 = vsub.f32 1.0, %v3784
    %v3786 = vmul.f32 %v3783, %v3785
    %v3787 = vadd.f32 %v3783, %v3786
    %vm3788 = vweird.f32 %v3782
    %vm3789 = vweird.f32 %v3783
    %vm3790 = vmor %vm3788, %vm3789
    %v3791 = vsel %vm3790, %v3783, %v3787
    %v3792 = vand.u32 2147483647, %v3782
    %vm3793 = vcmp.eq.f32.partialorder %v3792, 8.507059e+37
    %v3794 = vand.u32 %v3782, 2147483648
    %v3795 = vor.u32 1.1754944e-38, %v3794
    %v3796 = vsel %vm3793, %v3795, %v3791
    %v3797 = vmul.f32 %v3779, %v3796
    %3799 = vrot.lane.b32.xlu0 %v3671, 96
    %v3800 = vpop.permute.xlu0 %3799
    %v3803 = vsel %vm3122, %v3797, 0
    %3805 = vmatpush.msra.mxu0 0.0
    %3806 = vmatpush.msra.mxu0 0.0
    %3807 = vmatpush.msra.mxu0 0.0
    %3808 = vmatpush.msra.mxu0 0.0
    %3809 = vmatpush.msra.mxu0 0.0
    %3810 = vmatpush.msra.mxu0 0.0
    %3811 = vmatpush.msra.mxu0 0.0
    %3812 = vmatpush.msra.mxu0 0.0
    %3813 = vmatpush.msra.mxu0 0.0
    %3814 = vmatpush.msra.mxu0 0.0
    %3815 = vmatpush.msra.mxu0 0.0
    %3816 = vmatpush.msra.mxu0 0.0
    %3817 = vmatpush.msra.mxu0 0.0
    %3818 = vmatpush.msra.mxu0 0.0
    %3819 = vmatpush.msra.mxu0 0.0
    %3820 = vmatpush.msra.mxu0 %v3800
    %3821 = vmatmul.f32.gmra.mxu0 %v3803
    %v3822 = vpop.f32.mrf.mxu0
    %v3823 = vadd.f32 0.0, %v3822
    %3824 = vdwg.mxu0
    %3825 = vrot.lane.b32.xlu0 %v3615, 64
    %v3826 = vpop.permute.xlu0 %3825
    %3827 = vrot.lane.b32.xlu0 %v3643, 64
    %v3828 = vpop.permute.xlu0 %3827
    %v3829 = vsel %vm533, %v3826, 0
    %v3831 = vsel %vm533, %v3828, 0
    %3833 = vmatpush.xpose.msra.mxu0 0.0
    %3834 = vmatpush.xpose.msra.mxu0 0.0
    %3835 = vmatpush.xpose.msra.mxu0 0.0
    %3836 = vmatpush.xpose.msra.mxu0 0.0
    %3837 = vmatpush.xpose.msra.mxu0 0.0
    %3838 = vmatpush.xpose.msra.mxu0 0.0
    %3839 = vmatpush.xpose.msra.mxu0 0.0
    %3840 = vmatpush.xpose.msra.mxu0 0.0
    %3841 = vmatpush.xpose.msra.mxu0 0.0
    %3842 = vmatpush.xpose.msra.mxu0 0.0
    %3843 = vmatpush.xpose.msra.mxu0 0.0
    %3844 = vmatpush.xpose.msra.mxu0 0.0
    %3845 = vmatpush.xpose.msra.mxu0 0.0
    %3846 = vmatpush.xpose.msra.mxu0 0.0
    %3847 = vmatpush.xpose.msra.mxu0 0.0
    %3848 = vmatpush.xpose.msra.mxu0 %v3831
    %3849 = vmatmul.f32.gmra.mxu0 %v3829
    %v3850 = vpop.f32.mrf.mxu0
    %v3851 = vadd.f32 %v2974, %v3850
    %3852 = vdwg.mxu0
    %v3853 = vsel %vm3122, %v3851, -inf
    %3854 = vmax.xlane.f32.xlu0 %v3853
    %v3855 = vpop.xlane.xlu0 %3854
    %v3856 = vsub.f32 %v3851, %v3855
    %v3857 = vmul.f32 %v3856, 1.442695
    %v3858 = vpow.pop %v3857
    %v3859 = vsel %vm3122, %v3858, 0.0
    %3860 = vadd.xlane.f32.xlu0 %v3859
    %v3861 = vpop.xlane.xlu0 %3860
    %v3862 = vrcp.pop %v3861
    %v3863 = vmul.f32 %v3861, %v3862
    %v3864 = vsub.f32 1.0, %v3863
    %v3865 = vmul.f32 %v3862, %v3864
    %v3866 = vadd.f32 %v3862, %v3865
    %vm3867 = vweird.f32 %v3861
    %vm3868 = vweird.f32 %v3862
    %vm3869 = vmor %vm3867, %vm3868
    %v3870 = vsel %vm3869, %v3862, %v3866
    %v3871 = vand.u32 2147483647, %v3861
    %vm3872 = vcmp.eq.f32.partialorder %v3871, 8.507059e+37
    %v3873 = vand.u32 %v3861, 2147483648
    %v3874 = vor.u32 1.1754944e-38, %v3873
    %v3875 = vsel %vm3872, %v3874, %v3870
    %v3876 = vmul.f32 %v3858, %v3875
    %3877 = vrot.lane.b32.xlu0 %v3671, 64
    %v3878 = vpop.permute.xlu0 %3877
    %v3881 = vsel %vm3122, %v3876, 0
    %3883 = vmatpush.msra.mxu0 0.0
    %3884 = vmatpush.msra.mxu0 0.0
    %3885 = vmatpush.msra.mxu0 0.0
    %3886 = vmatpush.msra.mxu0 0.0
    %3887 = vmatpush.msra.mxu0 0.0
    %3888 = vmatpush.msra.mxu0 0.0
    %3889 = vmatpush.msra.mxu0 0.0
    %3890 = vmatpush.msra.mxu0 0.0
    %3891 = vmatpush.msra.mxu0 0.0
    %3892 = vmatpush.msra.mxu0 0.0
    %3893 = vmatpush.msra.mxu0 0.0
    %3894 = vmatpush.msra.mxu0 0.0
    %3895 = vmatpush.msra.mxu0 0.0
    %3896 = vmatpush.msra.mxu0 0.0
    %3897 = vmatpush.msra.mxu0 0.0
    %3898 = vmatpush.msra.mxu0 %v3878
    %3899 = vmatmul.f32.gmra.mxu0 %v3881
    %v3900 = vpop.f32.mrf.mxu0
    %v3901 = vadd.f32 0.0, %v3900
    %3902 = vdwg.mxu0
    %3903 = vrot.lane.b32.xlu0 %v3615, 32
    %v3904 = vpop.permute.xlu0 %3903
    %3905 = vrot.lane.b32.xlu0 %v3643, 32
    %v3906 = vpop.permute.xlu0 %3905
    %v3907 = vsel %vm533, %v3904, 0
    %v3909 = vsel %vm533, %v3906, 0
    %3911 = vmatpush.xpose.msra.mxu0 0.0
    %3912 = vmatpush.xpose.msra.mxu0 0.0
    %3913 = vmatpush.xpose.msra.mxu0 0.0
    %3914 = vmatpush.xpose.msra.mxu0 0.0
    %3915 = vmatpush.xpose.msra.mxu0 0.0
    %3916 = vmatpush.xpose.msra.mxu0 0.0
    %3917 = vmatpush.xpose.msra.mxu0 0.0
    %3918 = vmatpush.xpose.msra.mxu0 0.0
    %3919 = vmatpush.xpose.msra.mxu0 0.0
    %3920 = vmatpush.xpose.msra.mxu0 0.0
    %3921 = vmatpush.xpose.msra.mxu0 0.0
    %3922 = vmatpush.xpose.msra.mxu0 0.0
    %3923 = vmatpush.xpose.msra.mxu0 0.0
    %3924 = vmatpush.xpose.msra.mxu0 0.0
    %3925 = vmatpush.xpose.msra.mxu0 0.0
    %3926 = vmatpush.xpose.msra.mxu0 %v3909
    %3927 = vmatmul.f32.gmra.mxu0 %v3907
    %v3928 = vpop.f32.mrf.mxu0
    %v3929 = vadd.f32 %v2974, %v3928
    %3930 = vdwg.mxu0
    %v3931 = vsel %vm3122, %v3929, -inf
    %3932 = vmax.xlane.f32.xlu0 %v3931
    %v3933 = vpop.xlane.xlu0 %3932
    %v3934 = vsub.f32 %v3929, %v3933
    %v3935 = vmul.f32 %v3934, 1.442695
    %v3936 = vpow.pop %v3935
    %v3937 = vsel %vm3122, %v3936, 0.0
    %3938 = vadd.xlane.f32.xlu0 %v3937
    %v3939 = vpop.xlane.xlu0 %3938
    %v3940 = vrcp.pop %v3939
    %v3941 = vmul.f32 %v3939, %v3940
    %v3942 = vsub.f32 1.0, %v3941
    %v3943 = vmul.f32 %v3940, %v3942
    %v3944 = vadd.f32 %v3940, %v3943
    %vm3945 = vweird.f32 %v3939
    %vm3946 = vweird.f32 %v3940
    %vm3947 = vmor %vm3945, %vm3946
    %v3948 = vsel %vm3947, %v3940, %v3944
    %v3949 = vand.u32 2147483647, %v3939
    %vm3950 = vcmp.eq.f32.partialorder %v3949, 8.507059e+37
    %v3951 = vand.u32 %v3939, 2147483648
    %v3952 = vor.u32 1.1754944e-38, %v3951
    %v3953 = vsel %vm3950, %v3952, %v3948
    %v3954 = vmul.f32 %v3936, %v3953
    %3955 = vrot.lane.b32.xlu0 %v3671, 32
    %v3956 = vpop.permute.xlu0 %3955
    %v3959 = vsel %vm3122, %v3954, 0
    %3961 = vmatpush.msra.mxu0 0.0
    %3962 = vmatpush.msra.mxu0 0.0
    %3963 = vmatpush.msra.mxu0 0.0
    %3964 = vmatpush.msra.mxu0 0.0
    %3965 = vmatpush.msra.mxu0 0.0
    %3966 = vmatpush.msra.mxu0 0.0
    %3967 = vmatpush.msra.mxu0 0.0
    %3968 = vmatpush.msra.mxu0 0.0
    %3969 = vmatpush.msra.mxu0 0.0
    %3970 = vmatpush.msra.mxu0 0.0
    %3971 = vmatpush.msra.mxu0 0.0
    %3972 = vmatpush.msra.mxu0 0.0
    %3973 = vmatpush.msra.mxu0 0.0
    %3974 = vmatpush.msra.mxu0 0.0
    %3975 = vmatpush.msra.mxu0 0.0
    %3976 = vmatpush.msra.mxu0 %v3956
    %3977 = vmatmul.f32.gmra.mxu0 %v3959
    %v3978 = vpop.f32.mrf.mxu0
    %v3979 = vadd.f32 0.0, %v3978
    %3980 = vdwg.mxu0
    %3982 = vrot.lane.b32.xlu0 %v3823, 32
    %v3983 = vpop.permute.xlu0 %3982
    %3986 = vrot.lane.b32.xlu0 %v3901, 64
    %v3987 = vpop.permute.xlu0 %3986
    %3990 = vrot.lane.b32.xlu0 %v3979, 96
    %v3991 = vpop.permute.xlu0 %3990
    %v3993 = vsel %vm533, %v3744, %v3983
    %v3994 = vsel %vm45, %v3993, %v3987
    %v3995 = vsel %vm578, %v3994, %v3991
    %v3996 = vld [vmem:[#allocation2 + $0x1b70] sm:$0xff]
    %v3997 = vld [vmem:[#allocation2 + $0x1b80] sm:$0xff]
    %v3998 = vld [vmem:[#allocation2 + $0x1b90] sm:$0xff]
    %v3999 = vld [vmem:[#allocation2 + $0x1ba0] sm:$0xff]
    %v4000 = vld [vmem:[#allocation2 + $0x1bb0] sm:$0xff]
    %v4001 = vld [vmem:[#allocation2 + $0x1bc0] sm:$0xff]
    %v4002 = vld [vmem:[#allocation2 + $0x1bd0] sm:$0xff]
    %v4003 = vld [vmem:[#allocation2 + $0x1be0] sm:$0xff]
    %v4004 = vld [vmem:[#allocation2 + $0x1bf0] sm:$0xff]
    %v4005 = vld [vmem:[#allocation2 + $0x1c00] sm:$0xff]
    %v4006 = vld [vmem:[#allocation2 + $0x1c10] sm:$0xff]
    %v4007 = vld [vmem:[#allocation2 + $0x1c20] sm:$0xff]
    %v4008 = vld [vmem:[#allocation2 + $0x1c30] sm:$0xff]
    %v4009 = vld [vmem:[#allocation2 + $0x1c40] sm:$0xff]
    %v4010 = vld [vmem:[#allocation2 + $0x1c50] sm:$0xff]
    %v4011 = vld [vmem:[#allocation2 + $0x1c60] sm:$0xff]
    %4012 = vmatpush.msra.mxu0 %v4011
    %4013 = vmatpush.msra.mxu0 %v4010
    %4014 = vmatpush.msra.mxu0 %v4009
    %4015 = vmatpush.msra.mxu0 %v4008
    %4016 = vmatpush.msra.mxu0 %v4007
    %4017 = vmatpush.msra.mxu0 %v4006
    %4018 = vmatpush.msra.mxu0 %v4005
    %4019 = vmatpush.msra.mxu0 %v4004
    %4020 = vmatpush.msra.mxu0 %v4003
    %4021 = vmatpush.msra.mxu0 %v4002
    %4022 = vmatpush.msra.mxu0 %v4001
    %4023 = vmatpush.msra.mxu0 %v4000
    %4024 = vmatpush.msra.mxu0 %v3999
    %4025 = vmatpush.msra.mxu0 %v3998
    %4026 = vmatpush.msra.mxu0 %v3997
    %4027 = vmatpush.msra.mxu0 %v3996
    %4028 = vmatmul.f32.gmra.mxu0 %v3995
    %v4029 = vpop.f32.mrf.mxu0
    %v4030 = vadd.f32 0.0, %v4029
    %4031 = vdwg.mxu0
    %v4032 = vadd.f32 %v3558, %v4030
    %v4033 = vperm.slane %v3559, 4
    %v4034 = vadd.f32 %v4032, %v4033
    %v4035 = vsel %vm45, %v4034, 0.0
    %4036 = vadd.xlane.f32.xlu0 %v4035
    %v4037 = vpop.xlane.xlu0 %4036
    %v4038 = vmul.f32 %v4037, %v2985
    %v4039 = vsub.f32 %v4034, %v4038
    %v4040 = vmul.f32 %v4039, %v4039
    %v4041 = vsel %vm45, %v4040, 0.0
    %4042 = vadd.xlane.f32.xlu0 %v4041
    %v4043 = vpop.xlane.xlu0 %4042
    %v4044 = vmul.f32 %v4043, %v2985
    %v4045 = vadd.f32 %v4044, 1e-05
    %v4046 = vrsqrt.pop %v4045
    %v4047 = vmul.f32 %v4046, %v4045
    %v4048 = vmul.f32 %v4047, %v4046
    %v4049 = vmul.f32 0.5, %v4048
    %v4050 = vsub.f32 1.5, %v4049
    %v4051 = vmul.f32 %v4046, %v4050
    %vm4052 = vweird.f32 %v4045
    %vm4053 = vweird.f32 %v4046
    %vm4054 = vmor %vm4052, %vm4053
    %v4055 = vsel %vm4054, %v4046, %v4051
    %v4056 = vmul.f32 %v4039, %v4055
    %v4057 = vperm.slane %v3559, 2
    %v4058 = vmul.f32 %v4056, %v4057
    %v4059 = vperm.slane %v3559, 3
    %v4060 = vadd.f32 %v4058, %v4059
    %v4061 = vld [vmem:[#allocation2 + $0x1c70] sm:$0xff]
    %v4062 = vld [vmem:[#allocation2 + $0x1c80] sm:$0xff]
    %v4063 = vld [vmem:[#allocation2 + $0x1c90] sm:$0xff]
    %v4064 = vld [vmem:[#allocation2 + $0x1ca0] sm:$0xff]
    %v4065 = vld [vmem:[#allocation2 + $0x1cb0] sm:$0xff]
    %v4066 = vld [vmem:[#allocation2 + $0x1cc0] sm:$0xff]
    %v4067 = vld [vmem:[#allocation2 + $0x1cd0] sm:$0xff]
    %v4068 = vld [vmem:[#allocation2 + $0x1ce0] sm:$0xff]
    %v4069 = vperm.slane %v3559, 5
    %v4071 = vsel %vm45, %v4060, 0
    %4073 = vmatpush.msra.mxu0 0.0
    %4074 = vmatpush.msra.mxu0 0.0
    %4075 = vmatpush.msra.mxu0 0.0
    %4076 = vmatpush.msra.mxu0 0.0
    %4077 = vmatpush.msra.mxu0 0.0
    %4078 = vmatpush.msra.mxu0 0.0
    %4079 = vmatpush.msra.mxu0 0.0
    %4080 = vmatpush.msra.mxu0 0.0
    %4081 = vmatpush.msra.mxu0 %v4068
    %4082 = vmatpush.msra.mxu0 %v4067
    %4083 = vmatpush.msra.mxu0 %v4066
    %4084 = vmatpush.msra.mxu0 %v4065
    %4085 = vmatpush.msra.mxu0 %v4064
    %4086 = vmatpush.msra.mxu0 %v4063
    %4087 = vmatpush.msra.mxu0 %v4062
    %4088 = vmatpush.msra.mxu0 %v4061
    %4089 = vmatmul.f32.gmra.mxu0 %v4071
    %v4090 = vpop.f32.mrf.mxu0
    %v4091 = vadd.f32 %v4069, %v4090
    %4092 = vdwg.mxu0
    %v4093 = vmul.f32 %v4091, %v4091
    %v4094 = vmul.f32 %v4091, %v4093
    %v4095 = vmul.f32 %v4094, 0.044715
    %v4096 = vadd.f32 %v4091, %v4095
    %v4097 = vmul.f32 %v4096, 0.7978846
    %v4098 = vtanh.pop %v4097
    %v4099 = vadd.f32 %v4098, 1.0
    %v4100 = vmul.f32 %v4099, 0.5
    %v4101 = vmul.f32 %v4091, %v4100
    %v4102 = vld [vmem:[#allocation2 + $0x1cf0] sm:$0xff]
    %v4103 = vld [vmem:[#allocation2 + $0x1d00] sm:$0xff]
    %v4104 = vld [vmem:[#allocation2 + $0x1d10] sm:$0xff]
    %v4105 = vld [vmem:[#allocation2 + $0x1d20] sm:$0xff]
    %v4106 = vld [vmem:[#allocation2 + $0x1d30] sm:$0xff]
    %v4107 = vld [vmem:[#allocation2 + $0x1d40] sm:$0xff]
    %v4108 = vld [vmem:[#allocation2 + $0x1d50] sm:$0xff]
    %v4109 = vld [vmem:[#allocation2 + $0x1d60] sm:$0xff]
    %v4110 = vperm.slane %v3559, 6
    %v4112 = vsel %vm45, %v4101, 0
    %4114 = vmatpush.msra.mxu0 0.0
    %4115 = vmatpush.msra.mxu0 0.0
    %4116 = vmatpush.msra.mxu0 0.0
    %4117 = vmatpush.msra.mxu0 0.0
    %4118 = vmatpush.msra.mxu0 0.0
    %4119 = vmatpush.msra.mxu0 0.0
    %4120 = vmatpush.msra.mxu0 0.0
    %4121 = vmatpush.msra.mxu0 0.0
    %4122 = vmatpush.msra.mxu0 %v4109
    %4123 = vmatpush.msra.mxu0 %v4108
    %4124 = vmatpush.msra.mxu0 %v4107
    %4125 = vmatpush.msra.mxu0 %v4106
    %4126 = vmatpush.msra.mxu0 %v4105
    %4127 = vmatpush.msra.mxu0 %v4104
    %4128 = vmatpush.msra.mxu0 %v4103
    %4129 = vmatpush.msra.mxu0 %v4102
    %4130 = vmatmul.f32.gmra.mxu0 %v4112
    %v4131 = vpop.f32.mrf.mxu0
    %v4132 = vadd.f32 %v4110, %v4131
    %4133 = vdwg.mxu0
    %v4134 = vadd.f32 %v4034, %v4132
    %vm4135 = vcmask 519168
    %v4136 = vsel %vm4135, %v4134, 0.0
    %v4137 = vrot.slane %v4136, 4
    %v4138 = vadd.f32 %v4136, %v4137
    %v4139 = vrot.slane %v4138, 2
    %v4140 = vadd.f32 %v4138, %v4139
    %v4141 = vrot.slane %v4140, 1
    %v4142 = vadd.f32 %v4140, %v4141
    %v4143 = vrcp.pop 4.0
    %v4144 = vmul.f32 4.0, %v4143
    %v4145 = vsub.f32 1.0, %v4144
    %v4146 = vmul.f32 %v4143, %v4145
    %v4147 = vadd.f32 %v4143, %v4146
    %vm4148 = vweird.f32 %v4143
    %v4149 = vsel %vm4148, %v4143, %v4147
    %v4150 = vmul.f32 %v4142, %v4149
    %v4152 = vrot.slane %v4134, 4
    %v4154 = vsel %vm4135, %v4152, 0.0
    %v4155 = vrot.slane %v4154, 4
    %v4156 = vadd.f32 %v4154, %v4155
    %v4157 = vrot.slane %v4156, 2
    %v4158 = vadd.f32 %v4156, %v4157
    %v4159 = vrot.slane %v4158, 1
    %v4160 = vadd.f32 %v4158, %v4159
    %v4161 = vmul.f32 %v4160, %v4149
    %v4162 = vsel %vm287, %v4150, %v4161
    %v4163 = vld [vmem:[#allocation2 + $0x1d80] sm:$0xff]
    %v4164 = vld [vmem:[#allocation2 + $0x1d90] sm:$0xff]
    %v4165 = vld [vmem:[#allocation2 + $0x1da0] sm:$0xff]
    %v4166 = vld [vmem:[#allocation2 + $0x1db0] sm:$0xff]
    %v4167 = vld [vmem:[#allocation2 + $0x1dc0] sm:$0xff]
    %v4168 = vld [vmem:[#allocation2 + $0x1dd0] sm:$0xff]
    %v4169 = vld [vmem:[#allocation2 + $0x1de0] sm:$0xff]
    %v4170 = vld [vmem:[#allocation2 + $0x1df0] sm:$0xff]
    %v4171 = vperm.slane %v247, 4
    %v4173 = vsel %vm45, %v4162, 0
    %4175 = vmatpush.msra.mxu0 0.0
    %4176 = vmatpush.msra.mxu0 0.0
    %4177 = vmatpush.msra.mxu0 0.0
    %4178 = vmatpush.msra.mxu0 0.0
    %4179 = vmatpush.msra.mxu0 0.0
    %4180 = vmatpush.msra.mxu0 0.0
    %4181 = vmatpush.msra.mxu0 0.0
    %4182 = vmatpush.msra.mxu0 0.0
    %4183 = vmatpush.msra.mxu0 %v4170
    %4184 = vmatpush.msra.mxu0 %v4169
    %4185 = vmatpush.msra.mxu0 %v4168
    %4186 = vmatpush.msra.mxu0 %v4167
    %4187 = vmatpush.msra.mxu0 %v4166
    %4188 = vmatpush.msra.mxu0 %v4165
    %4189 = vmatpush.msra.mxu0 %v4164
    %4190 = vmatpush.msra.mxu0 %v4163
    %4191 = vmatmul.f32.gmra.mxu0 %v4173
    %v4192 = vpop.f32.mrf.mxu0
    %v4193 = vadd.f32 %v4171, %v4192
    %4194 = vdwg.mxu0
    %vm4195 = vcmask 517120
    %4196 = vst.msk [vmem:[#allocation5] sm:$0x3] %vm4195, %v4193
    // Predicated region
    $region14: #{_lambda_.1} parent=1 // pred_check
      _
    $region15: #{_lambda_.1} parent=1 // pred_check_branch
      %4198 = sbr.rel (0) target = $region17
    $region16: #{_lambda_.1} parent=1 // pred_region
      %4200 = vsyncadd [#allocation4], 0
      %s4202 = sshll.u32 [#allocation5], 4
      %s4203 = int_to_ptr.vmem [resolvable:$true] %s4202
      %s4204 = sshll.u32 %s2, 4
      %s4205 = int_to_ptr.hbm [resolvable:$true] %s4204
      %4207 = dma.vmem_to_hbm [thread:$0]  %s4203, 32, %s4205, [#allocation4]
    $region17: #{_lambda_.1} parent=1 // pred_fallthru
      _
    // Predicated region
    $region18: #{_lambda_.1} parent=1 // pred_check
      _
    $region19: #{_lambda_.1} parent=1 // pred_check_branch
      %4209 = sbr.rel (0) target = $region21
    $region20: #{_lambda_.1} parent=1 // pred_region
      %4211 = dma.done [#allocation4], 32
    $region21: #{_lambda_.1} parent=1 // pred_fallthru
      _
    %4212 = vsyncpa [#allocation3], 1
    %4213 = vsyncpa [#allocation4], 1

</llo_original>
